<compile_context>
chip_gen: v6e
topology: v6e:2x2x1
jax: 0.10.0
libtpu: 0.0.40
codegen_flags: <defaults>
</compile_context>

<pallas_src>
import math
import functools

import jax
import jax.numpy as jnp
from jax.experimental import pallas as pl
from jax.experimental.pallas import tpu as pltpu


LN_EPS = 1e-12


def _layernorm(x, g, b):
    mu = jnp.mean(x, axis=-1, keepdims=True)
    var = jnp.mean(jnp.square(x - mu), axis=-1, keepdims=True)
    return (x - mu) * jax.lax.rsqrt(var + LN_EPS) * g + b


def _fused_bert_lstm_kernel(
    # inputs
    ids_ref, wemb_ref, pemb_ref, temb_ref, emb_g_ref, emb_b_ref,
    wqkv_ref, bqkv_ref, wo_ref, bo_ref, ln1g_ref, ln1b_ref,
    wi_ref, bi_ref, wo2_ref, bo2_ref, ln2g_ref, ln2b_ref,
    wih_ref, whh_ref, lstm_b_ref,
    # output
    o_ref,
    *, n_layers, n_heads, S, H, Vp):
    d = H // n_heads
    scale = 1.0 / math.sqrt(d)

    # ---- Embeddings: one-hot MXU gather + pos + token_type(=0) + LayerNorm. --
    ids = ids_ref[...]                                              # [S, 1] i32
    one_hot = (ids == jax.lax.broadcasted_iota(jnp.int32, (S, Vp), 1)
               ).astype(jnp.float32)                                # [S, Vp]
    emb = jnp.dot(one_hot, wemb_ref[...], preferred_element_type=jnp.float32)
    emb = emb + pemb_ref[0:S, :] + temb_ref[0:1, :]
    x = _layernorm(emb, emb_g_ref[...], emb_b_ref[...])             # [S, H]

    # ---- BERT encoder layers (statically unrolled; weights stacked on L). ----
    for l in range(n_layers):
        # Fused QKV projection: one [S, H] @ [H, 3H] matmul + one bias add.
        qkv = jnp.dot(x, wqkv_ref[l], preferred_element_type=jnp.float32) + bqkv_ref[l]

        # Fold heads into a leading batch axis (static lane slices + stack);
        # single head-batched einsum for scores and for context.
        q = jnp.stack([qkv[:, h * d:(h + 1) * d] for h in range(n_heads)], axis=0)
        k = jnp.stack([qkv[:, H + h * d:H + (h + 1) * d] for h in range(n_heads)], axis=0)
        v = jnp.stack([qkv[:, 2 * H + h * d:2 * H + (h + 1) * d] for h in range(n_heads)], axis=0)
        att = jnp.einsum("hqd,hkd->hqk", q, k,
                         preferred_element_type=jnp.float32) * scale     # [nh, S, S]
        att = att - jnp.max(att, axis=-1, keepdims=True)
        p = jnp.exp(att)                                 # no mask (all-ones assumption)
        p = p * pl.reciprocal(jnp.sum(p, axis=-1, keepdims=True), approx=True)
        ctx = jnp.einsum("hqk,hkd->hqd", p, v,
                         preferred_element_type=jnp.float32)              # [nh, S, d]
        # Merge heads with an intra-tile lane concat (H = 32 < 128 lanes),
        # then ONE output-projection matmul.
        ctx = jnp.concatenate([ctx[h] for h in range(n_heads)], axis=-1)  # [S, H]
        attn_out = jnp.dot(ctx, wo_ref[l], preferred_element_type=jnp.float32) + bo_ref[l]

        # Residual + LayerNorm (attention block).
        x = _layernorm(attn_out + x, ln1g_ref[l], ln1b_ref[l])

        # FFN.
        inter = jnp.dot(x, wi_ref[l], preferred_element_type=jnp.float32) + bi_ref[l]
        # TODO(synk): HF BERT default is exact erf-GELU; tanh approximation used here.
        inter = jax.nn.gelu(inter, approximate=True)
        ffn = jnp.dot(inter, wo2_ref[l], preferred_element_type=jnp.float32) + bo2_ref[l]
        x = _layernorm(ffn + x, ln2g_ref[l], ln2b_ref[l])

    # ---- LSTM head (batch_first, zero init state, gate order i,f,g,o). -------
    # Hoisted input projection: one [S, H] @ [H, 4H] matmul for all steps,
    # kept as a traced value (no VMEM scratch round-trip).
    gates_x = jnp.dot(x, wih_ref[...], preferred_element_type=jnp.float32) + lstm_b_ref[...]
    whh = whh_ref[...]                               # [H, 4H], hoisted out of the loop
    # TODO(synk): could hold W_hh in the MXU across steps via matmul_push_rhs /
    # matmul_acc_lhs; kept as plain jnp.dot for portability at this size.
    h_t = jnp.zeros((1, H), jnp.float32)
    c_t = jnp.zeros((1, H), jnp.float32)
    hs = []
    for t in range(S):                               # static unroll (S small & fixed)
        gates = gates_x[t:t + 1, :] + jnp.dot(h_t, whh,
                                              preferred_element_type=jnp.float32)  # [1, 4H]
        sig = jax.nn.sigmoid(gates)                  # one EUP launch for i, f, o
        i_g = sig[:, 0:H]
        f_g = sig[:, H:2 * H]
        o_g = sig[:, 3 * H:4 * H]
        g_g = jnp.tanh(gates[:, 2 * H:3 * H])
        c_t = f_g * c_t + i_g * g_g
        h_t = o_g * jnp.tanh(c_t)
        hs.append(h_t)
    # Single contiguous store instead of S partial per-step stores.
    o_ref[...] = jnp.concatenate(hs, axis=0).astype(o_ref.dtype)   # [S, H]


def bert_lstm_forward(params, input_ids, *, hidden, n_heads):
    B, S = input_ids.shape
    H = hidden
    L = params["wqkv"].shape[0]
    V = params["word_emb"].shape[0]
    Vp = ((V + 127) // 128) * 128                    # lane-aligned one-hot width

    ids2d = input_ids.reshape(B * S, 1).astype(jnp.int32)
    wemb = jnp.pad(params["word_emb"].astype(jnp.float32), ((0, Vp - V), (0, 0)))

    weights = (wemb, params["pos_emb"], params["tok_emb"],
               params["emb_ln_g"], params["emb_ln_b"],
               params["wqkv"], params["bqkv"], params["wo"], params["bo"],
               params["ln1_g"], params["ln1_b"],
               params["wi"], params["bi"], params["wo2"], params["bo2"],
               params["ln2_g"], params["ln2_b"],
               params["lstm_w_ih"], params["lstm_w_hh"], params["lstm_bias"])

    def full(arr):
        # Whole array resident in VMEM; block index constant across the grid
        # so it is never re-DMA'd between grid steps.
        nd = arr.ndim
        return pl.BlockSpec(tuple(arr.shape), lambda b, _nd=nd: (0,) * _nd)

    kernel = functools.partial(_fused_bert_lstm_kernel,
                               n_layers=L, n_heads=n_heads, S=S, H=H, Vp=Vp)
    return pl.pallas_call(
        kernel,
        out_shape=jax.ShapeDtypeStruct((B, S, H), jnp.float32),
        grid=(B,),
        in_specs=[pl.BlockSpec((S, 1), lambda b: (b, 0))]          # token ids
                 + [full(w) for w in weights],
        out_specs=pl.BlockSpec((None, S, H), lambda b: (b, 0, 0)),
        compiler_params=pltpu.CompilerParams(
            dimension_semantics=("parallel",)),
    )(ids2d, *weights)


# -----------------------------------------------------------------------------
# Deterministic synthetic parameters (shapes follow the module's __init__,
# scaled down: hidden=32 instead of 768, 2 layers instead of 12).  Per-layer
# weights are stacked along a leading layer axis; Q/K/V are stored pre-fused
# as a single [H, 3H] weight per layer.
# -----------------------------------------------------------------------------
def init_params(key, vocab, hidden, n_layers, inter, max_pos):
    H, FF, L = hidden, inter, n_layers
    keys = iter(jax.random.split(key, 10))

    def nrm(shape):
        return 0.02 * jax.random.normal(next(keys), shape, jnp.float32)

    return dict(
        word_emb=nrm((vocab, H)),
        pos_emb=nrm((max_pos, H)),
        tok_emb=nrm((2, H)),
        emb_ln_g=jnp.ones((1, H), jnp.float32),
        emb_ln_b=jnp.zeros((1, H), jnp.float32),
        wqkv=nrm((L, H, 3 * H)),
        bqkv=jnp.zeros((L, 1, 3 * H), jnp.float32),
        wo=nrm((L, H, H)),
        bo=jnp.zeros((L, 1, H), jnp.float32),
        ln1_g=jnp.ones((L, 1, H), jnp.float32),
        ln1_b=jnp.zeros((L, 1, H), jnp.float32),
        wi=nrm((L, H, FF)),
        bi=jnp.zeros((L, 1, FF), jnp.float32),
        wo2=nrm((L, FF, H)),
        bo2=jnp.zeros((L, 1, H), jnp.float32),
        ln2_g=jnp.ones((L, 1, H), jnp.float32),
        ln2_b=jnp.zeros((L, 1, H), jnp.float32),
        # LSTM(H, H): torch weight_ih/hh are [4H, H]; stored transposed here so
        # the kernel computes x @ W.  bias = bias_ih + bias_hh combined.
        lstm_w_ih=nrm((H, 4 * H)),
        lstm_w_hh=nrm((H, 4 * H)),
        lstm_bias=jnp.zeros((1, 4 * H), jnp.float32),
    )


if __name__ == "__main__":
    VOCAB, HIDDEN, N_LAYERS, N_HEADS, INTER, MAX_POS = 100, 32, 2, 2, 64, 16
    B, S = 2, 8

    key = jax.random.PRNGKey(0)
    pkey, ikey = jax.random.split(key)
    params = init_params(pkey, VOCAB, HIDDEN, N_LAYERS, INTER, MAX_POS)
    input_ids = jax.random.randint(ikey, (B, S), 0, VOCAB, dtype=jnp.int32)

    fwd = jax.jit(functools.partial(bert_lstm_forward, hidden=HIDDEN, n_heads=N_HEADS))
    out = jax.block_until_ready(fwd(params, input_ids))

    assert out.shape == (B, S, HIDDEN), out.shape
    assert out.dtype == jnp.float32
    assert bool(jnp.all(jnp.isfinite(out)))
    print("KERNEL_OK")
</pallas_src>

<mosaic_0001>
module attributes {stable_mosaic.version = 11 : i64} {
  func.func @_fused_bert_lstm_kernel(%arg0: i32, %arg1: memref<8x1xi32, #tpu.memory_space<vmem>>, %arg2: memref<128x32xf32, #tpu.memory_space<vmem>>, %arg3: memref<16x32xf32, #tpu.memory_space<vmem>>, %arg4: memref<2x32xf32, #tpu.memory_space<vmem>>, %arg5: memref<1x32xf32, #tpu.memory_space<vmem>>, %arg6: memref<1x32xf32, #tpu.memory_space<vmem>>, %arg7: memref<2x32x96xf32, #tpu.memory_space<vmem>>, %arg8: memref<2x1x96xf32, #tpu.memory_space<vmem>>, %arg9: memref<2x32x32xf32, #tpu.memory_space<vmem>>, %arg10: memref<2x1x32xf32, #tpu.memory_space<vmem>>, %arg11: memref<2x1x32xf32, #tpu.memory_space<vmem>>, %arg12: memref<2x1x32xf32, #tpu.memory_space<vmem>>, %arg13: memref<2x32x64xf32, #tpu.memory_space<vmem>>, %arg14: memref<2x1x64xf32, #tpu.memory_space<vmem>>, %arg15: memref<2x64x32xf32, #tpu.memory_space<vmem>>, %arg16: memref<2x1x32xf32, #tpu.memory_space<vmem>>, %arg17: memref<2x1x32xf32, #tpu.memory_space<vmem>>, %arg18: memref<2x1x32xf32, #tpu.memory_space<vmem>>, %arg19: memref<32x128xf32, #tpu.memory_space<vmem>>, %arg20: memref<32x128xf32, #tpu.memory_space<vmem>>, %arg21: memref<1x128xf32, #tpu.memory_space<vmem>>, %arg22: memref<1x8x32xf32, #tpu.memory_space<vmem>>) attributes {dimension_semantics = [#tpu.dimension_semantics<parallel>], iteration_bounds = array<i64: 2>, scalar_prefetch = 0 : i64, scratch_operands = 0 : i64, tpu.core_type = #tpu.core_type<tc>, window_params = [{transform_indices = @transform_0, window_bounds = array<i64: 8, 1>}, {pipeline_mode = #tpu.pipeline_mode<synchronous>, transform_indices = @transform_1, window_bounds = array<i64: 128, 32>}, {pipeline_mode = #tpu.pipeline_mode<synchronous>, transform_indices = @transform_2, window_bounds = array<i64: 16, 32>}, {pipeline_mode = #tpu.pipeline_mode<synchronous>, transform_indices = @transform_3, window_bounds = array<i64: 2, 32>}, {pipeline_mode = #tpu.pipeline_mode<synchronous>, transform_indices = @transform_4, window_bounds = array<i64: 1, 32>}, {pipeline_mode = #tpu.pipeline_mode<synchronous>, transform_indices = @transform_5, window_bounds = array<i64: 1, 32>}, {pipeline_mode = #tpu.pipeline_mode<synchronous>, transform_indices = @transform_6, window_bounds = array<i64: 2, 32, 96>}, {pipeline_mode = #tpu.pipeline_mode<synchronous>, transform_indices = @transform_7, window_bounds = array<i64: 2, 1, 96>}, {pipeline_mode = #tpu.pipeline_mode<synchronous>, transform_indices = @transform_8, window_bounds = array<i64: 2, 32, 32>}, {pipeline_mode = #tpu.pipeline_mode<synchronous>, transform_indices = @transform_9, window_bounds = array<i64: 2, 1, 32>}, {pipeline_mode = #tpu.pipeline_mode<synchronous>, transform_indices = @transform_10, window_bounds = array<i64: 2, 1, 32>}, {pipeline_mode = #tpu.pipeline_mode<synchronous>, transform_indices = @transform_11, window_bounds = array<i64: 2, 1, 32>}, {pipeline_mode = #tpu.pipeline_mode<synchronous>, transform_indices = @transform_12, window_bounds = array<i64: 2, 32, 64>}, {pipeline_mode = #tpu.pipeline_mode<synchronous>, transform_indices = @transform_13, window_bounds = array<i64: 2, 1, 64>}, {pipeline_mode = #tpu.pipeline_mode<synchronous>, transform_indices = @transform_14, window_bounds = array<i64: 2, 64, 32>}, {pipeline_mode = #tpu.pipeline_mode<synchronous>, transform_indices = @transform_15, window_bounds = array<i64: 2, 1, 32>}, {pipeline_mode = #tpu.pipeline_mode<synchronous>, transform_indices = @transform_16, window_bounds = array<i64: 2, 1, 32>}, {pipeline_mode = #tpu.pipeline_mode<synchronous>, transform_indices = @transform_17, window_bounds = array<i64: 2, 1, 32>}, {pipeline_mode = #tpu.pipeline_mode<synchronous>, transform_indices = @transform_18, window_bounds = array<i64: 32, 128>}, {pipeline_mode = #tpu.pipeline_mode<synchronous>, transform_indices = @transform_19, window_bounds = array<i64: 32, 128>}, {pipeline_mode = #tpu.pipeline_mode<synchronous>, transform_indices = @transform_20, window_bounds = array<i64: 1, 128>}, {transform_indices = @transform_21, window_bounds = array<i64: 1, 8, 32>}]} {
    %c0 = arith.constant 0 : index
    %c0_0 = arith.constant 0 : index
    %0 = vector.load %arg1[%c0, %c0_0] : memref<8x1xi32, #tpu.memory_space<vmem>>, vector<8x1xi32>
    %1 = tpu.iota {dimensions = array<i32: 1>} : vector<8x128xi32>
    %2 = vector.broadcast %0 : vector<8x1xi32> to vector<8x128xi32>
    %3 = arith.cmpi eq, %2, %1 : vector<8x128xi32>
    %4 = arith.extui %3 : vector<8x128xi1> to vector<8x128xi32>
    %5 = arith.sitofp %4 : vector<8x128xi32> to vector<8x128xf32>
    %c0_1 = arith.constant 0 : index
    %c0_2 = arith.constant 0 : index
    %6 = vector.load %arg2[%c0_1, %c0_2] : memref<128x32xf32, #tpu.memory_space<vmem>>, vector<128x32xf32>
    %cst = arith.constant dense<0.000000e+00> : vector<8x32xf32>
    %7 = tpu.matmul %5, %6, %cst {dimension_numbers = #tpu.dot_dimension_numbers<[1], [0], [0], [1], [0, 0, 1, 1], [], []>} : vector<8x128xf32>, vector<128x32xf32>, vector<8x32xf32> -> vector<8x32xf32>
    %c0_3 = arith.constant 0 : index
    %c0_4 = arith.constant 0 : index
    %8 = vector.load %arg3[%c0_3, %c0_4] : memref<16x32xf32, #tpu.memory_space<vmem>>, vector<8x32xf32>
    %9 = arith.addf %7, %8 : vector<8x32xf32>
    %c0_5 = arith.constant 0 : index
    %c0_6 = arith.constant 0 : index
    %10 = vector.load %arg4[%c0_5, %c0_6] : memref<2x32xf32, #tpu.memory_space<vmem>>, vector<1x32xf32>
    %11 = vector.broadcast %10 : vector<1x32xf32> to vector<8x32xf32>
    %12 = arith.addf %9, %11 : vector<8x32xf32>
    %c0_7 = arith.constant 0 : index
    %c0_8 = arith.constant 0 : index
    %13 = vector.load %arg5[%c0_7, %c0_8] : memref<1x32xf32, #tpu.memory_space<vmem>>, vector<1x32xf32>
    %c0_9 = arith.constant 0 : index
    %c0_10 = arith.constant 0 : index
    %14 = vector.load %arg6[%c0_9, %c0_10] : memref<1x32xf32, #tpu.memory_space<vmem>>, vector<1x32xf32>
    %cst_11 = arith.constant dense<0.000000e+00> : vector<8xf32>
    %15 = vector.multi_reduction <add>, %12, %cst_11 [1] : vector<8x32xf32> to vector<8xf32>
    %16 = vector.shape_cast %15 : vector<8xf32> to vector<8x1xf32>
    %cst_12 = arith.constant 3.200000e+01 : f32
    %17 = vector.broadcast %cst_12 : f32 to vector<8x1xf32>
    %18 = arith.divf %16, %17 : vector<8x1xf32>
    %19 = vector.broadcast %18 : vector<8x1xf32> to vector<8x32xf32>
    %20 = arith.subf %12, %19 : vector<8x32xf32>
    %21 = arith.mulf %20, %20 : vector<8x32xf32>
    %cst_13 = arith.constant dense<0.000000e+00> : vector<8xf32>
    %22 = vector.multi_reduction <add>, %21, %cst_13 [1] : vector<8x32xf32> to vector<8xf32>
    %23 = vector.shape_cast %22 : vector<8xf32> to vector<8x1xf32>
    %cst_14 = arith.constant 3.200000e+01 : f32
    %24 = vector.broadcast %cst_14 : f32 to vector<8x1xf32>
    %25 = arith.divf %23, %24 : vector<8x1xf32>
    %26 = vector.broadcast %18 : vector<8x1xf32> to vector<8x32xf32>
    %27 = arith.subf %12, %26 : vector<8x32xf32>
    %cst_15 = arith.constant 9.99999996E-13 : f32
    %28 = vector.broadcast %cst_15 : f32 to vector<8x1xf32>
    %29 = arith.addf %25, %28 : vector<8x1xf32>
    %30 = math.rsqrt %29 : vector<8x1xf32>
    %31 = vector.broadcast %30 : vector<8x1xf32> to vector<8x32xf32>
    %32 = arith.mulf %27, %31 : vector<8x32xf32>
    %33 = vector.broadcast %13 : vector<1x32xf32> to vector<8x32xf32>
    %34 = arith.mulf %32, %33 : vector<8x32xf32>
    %35 = vector.broadcast %14 : vector<1x32xf32> to vector<8x32xf32>
    %36 = arith.addf %34, %35 : vector<8x32xf32>
    %c0_16 = arith.constant 0 : index
    %c0_17 = arith.constant 0 : index
    %c0_18 = arith.constant 0 : index
    %37 = vector.load %arg7[%c0_16, %c0_17, %c0_18] : memref<2x32x96xf32, #tpu.memory_space<vmem>>, vector<1x32x96xf32>
    %38 = vector.shape_cast %37 : vector<1x32x96xf32> to vector<32x96xf32>
    %cst_19 = arith.constant dense<0.000000e+00> : vector<8x96xf32>
    %39 = tpu.matmul %36, %38, %cst_19 {dimension_numbers = #tpu.dot_dimension_numbers<[1], [0], [0], [1], [0, 0, 1, 1], [], []>} : vector<8x32xf32>, vector<32x96xf32>, vector<8x96xf32> -> vector<8x96xf32>
    %c0_20 = arith.constant 0 : index
    %c0_21 = arith.constant 0 : index
    %c0_22 = arith.constant 0 : index
    %40 = vector.load %arg8[%c0_20, %c0_21, %c0_22] : memref<2x1x96xf32, #tpu.memory_space<vmem>>, vector<1x1x96xf32>
    %41 = vector.shape_cast %40 : vector<1x1x96xf32> to vector<1x96xf32>
    %42 = vector.broadcast %41 : vector<1x96xf32> to vector<8x96xf32>
    %43 = arith.addf %39, %42 : vector<8x96xf32>
    %44 = vector.extract_strided_slice %43 {offsets = [0, 0], sizes = [8, 16], strides = [1, 1]} : vector<8x96xf32> to vector<8x16xf32>
    %45 = vector.extract_strided_slice %43 {offsets = [0, 16], sizes = [8, 16], strides = [1, 1]} : vector<8x96xf32> to vector<8x16xf32>
    %46 = vector.shape_cast %44 : vector<8x16xf32> to vector<1x8x16xf32>
    %47 = vector.shape_cast %45 : vector<8x16xf32> to vector<1x8x16xf32>
    %48 = tpu.concatenate %46, %47 in 0 : vector<1x8x16xf32>, vector<1x8x16xf32> -> vector<2x8x16xf32>
    %49 = vector.extract_strided_slice %43 {offsets = [0, 32], sizes = [8, 16], strides = [1, 1]} : vector<8x96xf32> to vector<8x16xf32>
    %50 = vector.extract_strided_slice %43 {offsets = [0, 48], sizes = [8, 16], strides = [1, 1]} : vector<8x96xf32> to vector<8x16xf32>
    %51 = vector.shape_cast %49 : vector<8x16xf32> to vector<1x8x16xf32>
    %52 = vector.shape_cast %50 : vector<8x16xf32> to vector<1x8x16xf32>
    %53 = tpu.concatenate %51, %52 in 0 : vector<1x8x16xf32>, vector<1x8x16xf32> -> vector<2x8x16xf32>
    %54 = vector.extract_strided_slice %43 {offsets = [0, 64], sizes = [8, 16], strides = [1, 1]} : vector<8x96xf32> to vector<8x16xf32>
    %55 = vector.extract_strided_slice %43 {offsets = [0, 80], sizes = [8, 16], strides = [1, 1]} : vector<8x96xf32> to vector<8x16xf32>
    %56 = vector.shape_cast %54 : vector<8x16xf32> to vector<1x8x16xf32>
    %57 = vector.shape_cast %55 : vector<8x16xf32> to vector<1x8x16xf32>
    %58 = tpu.concatenate %56, %57 in 0 : vector<1x8x16xf32>, vector<1x8x16xf32> -> vector<2x8x16xf32>
    "tpu.trace_start"() <{level = 10 : i32, message = "hqd,hkd->hqk"}> : () -> ()
    %cst_23 = arith.constant dense<0.000000e+00> : vector<2x8x8xf32>
    %59 = tpu.matmul %48, %53, %cst_23 {dimension_numbers = #tpu.dot_dimension_numbers<[2], [2], [1], [1], [0, 0, 0, 1, 1, 1], [0], [0]>} : vector<2x8x16xf32>, vector<2x8x16xf32>, vector<2x8x8xf32> -> vector<2x8x8xf32>
    "tpu.trace_stop"() : () -> ()
    %cst_24 = arith.constant 2.500000e-01 : f32
    %60 = vector.broadcast %cst_24 : f32 to vector<2x8x8xf32>
    %61 = arith.mulf %59, %60 : vector<2x8x8xf32>
    %cst_25 = arith.constant dense<0xFF800000> : vector<2x8xf32>
    %62 = vector.multi_reduction <maximumf>, %61, %cst_25 [2] : vector<2x8x8xf32> to vector<2x8xf32>
    %63 = vector.shape_cast %62 : vector<2x8xf32> to vector<2x8x1xf32>
    %64 = vector.broadcast %63 : vector<2x8x1xf32> to vector<2x8x8xf32>
    %65 = arith.subf %61, %64 : vector<2x8x8xf32>
    %66 = math.exp %65 : vector<2x8x8xf32>
    %cst_26 = arith.constant dense<0.000000e+00> : vector<2x8xf32>
    %67 = vector.multi_reduction <add>, %66, %cst_26 [2] : vector<2x8x8xf32> to vector<2x8xf32>
    %68 = vector.shape_cast %67 : vector<2x8xf32> to vector<2x8x1xf32>
    %69 = tpu.reciprocal %68 {approx = true} : vector<2x8x1xf32> -> vector<2x8x1xf32>
    %70 = vector.broadcast %69 : vector<2x8x1xf32> to vector<2x8x8xf32>
    %71 = arith.mulf %66, %70 : vector<2x8x8xf32>
    "tpu.trace_start"() <{level = 10 : i32, message = "hqk,hkd->hqd"}> : () -> ()
    %cst_27 = arith.constant dense<0.000000e+00> : vector<2x8x16xf32>
    %72 = tpu.matmul %71, %58, %cst_27 {dimension_numbers = #tpu.dot_dimension_numbers<[2], [1], [1], [2], [0, 0, 0, 1, 1, 2], [0], [0]>} : vector<2x8x8xf32>, vector<2x8x16xf32>, vector<2x8x16xf32> -> vector<2x8x16xf32>
    "tpu.trace_stop"() : () -> ()
    %73 = vector.extract_strided_slice %72 {offsets = [0, 0, 0], sizes = [1, 8, 16], strides = [1, 1, 1]} : vector<2x8x16xf32> to vector<1x8x16xf32>
    %74 = vector.shape_cast %73 : vector<1x8x16xf32> to vector<8x16xf32>
    %75 = vector.extract_strided_slice %72 {offsets = [1, 0, 0], sizes = [1, 8, 16], strides = [1, 1, 1]} : vector<2x8x16xf32> to vector<1x8x16xf32>
    %76 = vector.shape_cast %75 : vector<1x8x16xf32> to vector<8x16xf32>
    %77 = tpu.concatenate %74, %76 in 1 : vector<8x16xf32>, vector<8x16xf32> -> vector<8x32xf32>
    %c0_28 = arith.constant 0 : index
    %c0_29 = arith.constant 0 : index
    %c0_30 = arith.constant 0 : index
    %78 = vector.load %arg9[%c0_28, %c0_29, %c0_30] : memref<2x32x32xf32, #tpu.memory_space<vmem>>, vector<1x32x32xf32>
    %79 = vector.shape_cast %78 : vector<1x32x32xf32> to vector<32x32xf32>
    %cst_31 = arith.constant dense<0.000000e+00> : vector<8x32xf32>
    %80 = tpu.matmul %77, %79, %cst_31 {dimension_numbers = #tpu.dot_dimension_numbers<[1], [0], [0], [1], [0, 0, 1, 1], [], []>} : vector<8x32xf32>, vector<32x32xf32>, vector<8x32xf32> -> vector<8x32xf32>
    %c0_32 = arith.constant 0 : index
    %c0_33 = arith.constant 0 : index
    %c0_34 = arith.constant 0 : index
    %81 = vector.load %arg10[%c0_32, %c0_33, %c0_34] : memref<2x1x32xf32, #tpu.memory_space<vmem>>, vector<1x1x32xf32>
    %82 = vector.shape_cast %81 : vector<1x1x32xf32> to vector<1x32xf32>
    %83 = vector.broadcast %82 : vector<1x32xf32> to vector<8x32xf32>
    %84 = arith.addf %80, %83 : vector<8x32xf32>
    %85 = arith.addf %84, %36 : vector<8x32xf32>
    %c0_35 = arith.constant 0 : index
    %c0_36 = arith.constant 0 : index
    %c0_37 = arith.constant 0 : index
    %86 = vector.load %arg11[%c0_35, %c0_36, %c0_37] : memref<2x1x32xf32, #tpu.memory_space<vmem>>, vector<1x1x32xf32>
    %87 = vector.shape_cast %86 : vector<1x1x32xf32> to vector<1x32xf32>
    %c0_38 = arith.constant 0 : index
    %c0_39 = arith.constant 0 : index
    %c0_40 = arith.constant 0 : index
    %88 = vector.load %arg12[%c0_38, %c0_39, %c0_40] : memref<2x1x32xf32, #tpu.memory_space<vmem>>, vector<1x1x32xf32>
    %89 = vector.shape_cast %88 : vector<1x1x32xf32> to vector<1x32xf32>
    %cst_41 = arith.constant dense<0.000000e+00> : vector<8xf32>
    %90 = vector.multi_reduction <add>, %85, %cst_41 [1] : vector<8x32xf32> to vector<8xf32>
    %91 = vector.shape_cast %90 : vector<8xf32> to vector<8x1xf32>
    %cst_42 = arith.constant 3.200000e+01 : f32
    %92 = vector.broadcast %cst_42 : f32 to vector<8x1xf32>
    %93 = arith.divf %91, %92 : vector<8x1xf32>
    %94 = vector.broadcast %93 : vector<8x1xf32> to vector<8x32xf32>
    %95 = arith.subf %85, %94 : vector<8x32xf32>
    %96 = arith.mulf %95, %95 : vector<8x32xf32>
    %cst_43 = arith.constant dense<0.000000e+00> : vector<8xf32>
    %97 = vector.multi_reduction <add>, %96, %cst_43 [1] : vector<8x32xf32> to vector<8xf32>
    %98 = vector.shape_cast %97 : vector<8xf32> to vector<8x1xf32>
    %cst_44 = arith.constant 3.200000e+01 : f32
    %99 = vector.broadcast %cst_44 : f32 to vector<8x1xf32>
    %100 = arith.divf %98, %99 : vector<8x1xf32>
    %101 = vector.broadcast %93 : vector<8x1xf32> to vector<8x32xf32>
    %102 = arith.subf %85, %101 : vector<8x32xf32>
    %cst_45 = arith.constant 9.99999996E-13 : f32
    %103 = vector.broadcast %cst_45 : f32 to vector<8x1xf32>
    %104 = arith.addf %100, %103 : vector<8x1xf32>
    %105 = math.rsqrt %104 : vector<8x1xf32>
    %106 = vector.broadcast %105 : vector<8x1xf32> to vector<8x32xf32>
    %107 = arith.mulf %102, %106 : vector<8x32xf32>
    %108 = vector.broadcast %87 : vector<1x32xf32> to vector<8x32xf32>
    %109 = arith.mulf %107, %108 : vector<8x32xf32>
    %110 = vector.broadcast %89 : vector<1x32xf32> to vector<8x32xf32>
    %111 = arith.addf %109, %110 : vector<8x32xf32>
    %c0_46 = arith.constant 0 : index
    %c0_47 = arith.constant 0 : index
    %c0_48 = arith.constant 0 : index
    %112 = vector.load %arg13[%c0_46, %c0_47, %c0_48] : memref<2x32x64xf32, #tpu.memory_space<vmem>>, vector<1x32x64xf32>
    %113 = vector.shape_cast %112 : vector<1x32x64xf32> to vector<32x64xf32>
    %cst_49 = arith.constant dense<0.000000e+00> : vector<8x64xf32>
    %114 = tpu.matmul %111, %113, %cst_49 {dimension_numbers = #tpu.dot_dimension_numbers<[1], [0], [0], [1], [0, 0, 1, 1], [], []>} : vector<8x32xf32>, vector<32x64xf32>, vector<8x64xf32> -> vector<8x64xf32>
    %c0_50 = arith.constant 0 : index
    %c0_51 = arith.constant 0 : index
    %c0_52 = arith.constant 0 : index
    %115 = vector.load %arg14[%c0_50, %c0_51, %c0_52] : memref<2x1x64xf32, #tpu.memory_space<vmem>>, vector<1x1x64xf32>
    %116 = vector.shape_cast %115 : vector<1x1x64xf32> to vector<1x64xf32>
    %117 = vector.broadcast %116 : vector<1x64xf32> to vector<8x64xf32>
    %118 = arith.addf %114, %117 : vector<8x64xf32>
    %119 = arith.mulf %118, %118 : vector<8x64xf32>
    %120 = arith.mulf %118, %119 : vector<8x64xf32>
    %cst_53 = arith.constant 4.471500e-02 : f32
    %121 = vector.broadcast %cst_53 : f32 to vector<8x64xf32>
    %122 = arith.mulf %121, %120 : vector<8x64xf32>
    %123 = arith.addf %118, %122 : vector<8x64xf32>
    %cst_54 = arith.constant 0.797884583 : f32
    %124 = vector.broadcast %cst_54 : f32 to vector<8x64xf32>
    %125 = arith.mulf %124, %123 : vector<8x64xf32>
    %126 = math.tanh %125 : vector<8x64xf32>
    %cst_55 = arith.constant 1.000000e+00 : f32
    %127 = vector.broadcast %cst_55 : f32 to vector<8x64xf32>
    %128 = arith.addf %127, %126 : vector<8x64xf32>
    %cst_56 = arith.constant 5.000000e-01 : f32
    %129 = vector.broadcast %cst_56 : f32 to vector<8x64xf32>
    %130 = arith.mulf %129, %128 : vector<8x64xf32>
    %131 = arith.mulf %118, %130 : vector<8x64xf32>
    %c0_57 = arith.constant 0 : index
    %c0_58 = arith.constant 0 : index
    %c0_59 = arith.constant 0 : index
    %132 = vector.load %arg15[%c0_57, %c0_58, %c0_59] : memref<2x64x32xf32, #tpu.memory_space<vmem>>, vector<1x64x32xf32>
    %133 = vector.shape_cast %132 : vector<1x64x32xf32> to vector<64x32xf32>
    %cst_60 = arith.constant dense<0.000000e+00> : vector<8x32xf32>
    %134 = tpu.matmul %131, %133, %cst_60 {dimension_numbers = #tpu.dot_dimension_numbers<[1], [0], [0], [1], [0, 0, 1, 1], [], []>} : vector<8x64xf32>, vector<64x32xf32>, vector<8x32xf32> -> vector<8x32xf32>
    %c0_61 = arith.constant 0 : index
    %c0_62 = arith.constant 0 : index
    %c0_63 = arith.constant 0 : index
    %135 = vector.load %arg16[%c0_61, %c0_62, %c0_63] : memref<2x1x32xf32, #tpu.memory_space<vmem>>, vector<1x1x32xf32>
    %136 = vector.shape_cast %135 : vector<1x1x32xf32> to vector<1x32xf32>
    %137 = vector.broadcast %136 : vector<1x32xf32> to vector<8x32xf32>
    %138 = arith.addf %134, %137 : vector<8x32xf32>
    %139 = arith.addf %138, %111 : vector<8x32xf32>
    %c0_64 = arith.constant 0 : index
    %c0_65 = arith.constant 0 : index
    %c0_66 = arith.constant 0 : index
    %140 = vector.load %arg17[%c0_64, %c0_65, %c0_66] : memref<2x1x32xf32, #tpu.memory_space<vmem>>, vector<1x1x32xf32>
    %141 = vector.shape_cast %140 : vector<1x1x32xf32> to vector<1x32xf32>
    %c0_67 = arith.constant 0 : index
    %c0_68 = arith.constant 0 : index
    %c0_69 = arith.constant 0 : index
    %142 = vector.load %arg18[%c0_67, %c0_68, %c0_69] : memref<2x1x32xf32, #tpu.memory_space<vmem>>, vector<1x1x32xf32>
    %143 = vector.shape_cast %142 : vector<1x1x32xf32> to vector<1x32xf32>
    %cst_70 = arith.constant dense<0.000000e+00> : vector<8xf32>
    %144 = vector.multi_reduction <add>, %139, %cst_70 [1] : vector<8x32xf32> to vector<8xf32>
    %145 = vector.shape_cast %144 : vector<8xf32> to vector<8x1xf32>
    %cst_71 = arith.constant 3.200000e+01 : f32
    %146 = vector.broadcast %cst_71 : f32 to vector<8x1xf32>
    %147 = arith.divf %145, %146 : vector<8x1xf32>
    %148 = vector.broadcast %147 : vector<8x1xf32> to vector<8x32xf32>
    %149 = arith.subf %139, %148 : vector<8x32xf32>
    %150 = arith.mulf %149, %149 : vector<8x32xf32>
    %cst_72 = arith.constant dense<0.000000e+00> : vector<8xf32>
    %151 = vector.multi_reduction <add>, %150, %cst_72 [1] : vector<8x32xf32> to vector<8xf32>
    %152 = vector.shape_cast %151 : vector<8xf32> to vector<8x1xf32>
    %cst_73 = arith.constant 3.200000e+01 : f32
    %153 = vector.broadcast %cst_73 : f32 to vector<8x1xf32>
    %154 = arith.divf %152, %153 : vector<8x1xf32>
    %155 = vector.broadcast %147 : vector<8x1xf32> to vector<8x32xf32>
    %156 = arith.subf %139, %155 : vector<8x32xf32>
    %cst_74 = arith.constant 9.99999996E-13 : f32
    %157 = vector.broadcast %cst_74 : f32 to vector<8x1xf32>
    %158 = arith.addf %154, %157 : vector<8x1xf32>
    %159 = math.rsqrt %158 : vector<8x1xf32>
    %160 = vector.broadcast %159 : vector<8x1xf32> to vector<8x32xf32>
    %161 = arith.mulf %156, %160 : vector<8x32xf32>
    %162 = vector.broadcast %141 : vector<1x32xf32> to vector<8x32xf32>
    %163 = arith.mulf %161, %162 : vector<8x32xf32>
    %164 = vector.broadcast %143 : vector<1x32xf32> to vector<8x32xf32>
    %165 = arith.addf %163, %164 : vector<8x32xf32>
    %c1 = arith.constant 1 : index
    %c0_75 = arith.constant 0 : index
    %c0_76 = arith.constant 0 : index
    %166 = vector.load %arg7[%c1, %c0_75, %c0_76] : memref<2x32x96xf32, #tpu.memory_space<vmem>>, vector<1x32x96xf32>
    %167 = vector.shape_cast %166 : vector<1x32x96xf32> to vector<32x96xf32>
    %cst_77 = arith.constant dense<0.000000e+00> : vector<8x96xf32>
    %168 = tpu.matmul %165, %167, %cst_77 {dimension_numbers = #tpu.dot_dimension_numbers<[1], [0], [0], [1], [0, 0, 1, 1], [], []>} : vector<8x32xf32>, vector<32x96xf32>, vector<8x96xf32> -> vector<8x96xf32>
    %c1_78 = arith.constant 1 : index
    %c0_79 = arith.constant 0 : index
    %c0_80 = arith.constant 0 : index
    %169 = vector.load %arg8[%c1_78, %c0_79, %c0_80] : memref<2x1x96xf32, #tpu.memory_space<vmem>>, vector<1x1x96xf32>
    %170 = vector.shape_cast %169 : vector<1x1x96xf32> to vector<1x96xf32>
    %171 = vector.broadcast %170 : vector<1x96xf32> to vector<8x96xf32>
    %172 = arith.addf %168, %171 : vector<8x96xf32>
    %173 = vector.extract_strided_slice %172 {offsets = [0, 0], sizes = [8, 16], strides = [1, 1]} : vector<8x96xf32> to vector<8x16xf32>
    %174 = vector.extract_strided_slice %172 {offsets = [0, 16], sizes = [8, 16], strides = [1, 1]} : vector<8x96xf32> to vector<8x16xf32>
    %175 = vector.shape_cast %173 : vector<8x16xf32> to vector<1x8x16xf32>
    %176 = vector.shape_cast %174 : vector<8x16xf32> to vector<1x8x16xf32>
    %177 = tpu.concatenate %175, %176 in 0 : vector<1x8x16xf32>, vector<1x8x16xf32> -> vector<2x8x16xf32>
    %178 = vector.extract_strided_slice %172 {offsets = [0, 32], sizes = [8, 16], strides = [1, 1]} : vector<8x96xf32> to vector<8x16xf32>
    %179 = vector.extract_strided_slice %172 {offsets = [0, 48], sizes = [8, 16], strides = [1, 1]} : vector<8x96xf32> to vector<8x16xf32>
    %180 = vector.shape_cast %178 : vector<8x16xf32> to vector<1x8x16xf32>
    %181 = vector.shape_cast %179 : vector<8x16xf32> to vector<1x8x16xf32>
    %182 = tpu.concatenate %180, %181 in 0 : vector<1x8x16xf32>, vector<1x8x16xf32> -> vector<2x8x16xf32>
    %183 = vector.extract_strided_slice %172 {offsets = [0, 64], sizes = [8, 16], strides = [1, 1]} : vector<8x96xf32> to vector<8x16xf32>
    %184 = vector.extract_strided_slice %172 {offsets = [0, 80], sizes = [8, 16], strides = [1, 1]} : vector<8x96xf32> to vector<8x16xf32>
    %185 = vector.shape_cast %183 : vector<8x16xf32> to vector<1x8x16xf32>
    %186 = vector.shape_cast %184 : vector<8x16xf32> to vector<1x8x16xf32>
    %187 = tpu.concatenate %185, %186 in 0 : vector<1x8x16xf32>, vector<1x8x16xf32> -> vector<2x8x16xf32>
    "tpu.trace_start"() <{level = 10 : i32, message = "hqd,hkd->hqk"}> : () -> ()
    %cst_81 = arith.constant dense<0.000000e+00> : vector<2x8x8xf32>
    %188 = tpu.matmul %177, %182, %cst_81 {dimension_numbers = #tpu.dot_dimension_numbers<[2], [2], [1], [1], [0, 0, 0, 1, 1, 1], [0], [0]>} : vector<2x8x16xf32>, vector<2x8x16xf32>, vector<2x8x8xf32> -> vector<2x8x8xf32>
    "tpu.trace_stop"() : () -> ()
    %cst_82 = arith.constant 2.500000e-01 : f32
    %189 = vector.broadcast %cst_82 : f32 to vector<2x8x8xf32>
    %190 = arith.mulf %188, %189 : vector<2x8x8xf32>
    %cst_83 = arith.constant dense<0xFF800000> : vector<2x8xf32>
    %191 = vector.multi_reduction <maximumf>, %190, %cst_83 [2] : vector<2x8x8xf32> to vector<2x8xf32>
    %192 = vector.shape_cast %191 : vector<2x8xf32> to vector<2x8x1xf32>
    %193 = vector.broadcast %192 : vector<2x8x1xf32> to vector<2x8x8xf32>
    %194 = arith.subf %190, %193 : vector<2x8x8xf32>
    %195 = math.exp %194 : vector<2x8x8xf32>
    %cst_84 = arith.constant dense<0.000000e+00> : vector<2x8xf32>
    %196 = vector.multi_reduction <add>, %195, %cst_84 [2] : vector<2x8x8xf32> to vector<2x8xf32>
    %197 = vector.shape_cast %196 : vector<2x8xf32> to vector<2x8x1xf32>
    %198 = tpu.reciprocal %197 {approx = true} : vector<2x8x1xf32> -> vector<2x8x1xf32>
    %199 = vector.broadcast %198 : vector<2x8x1xf32> to vector<2x8x8xf32>
    %200 = arith.mulf %195, %199 : vector<2x8x8xf32>
    "tpu.trace_start"() <{level = 10 : i32, message = "hqk,hkd->hqd"}> : () -> ()
    %cst_85 = arith.constant dense<0.000000e+00> : vector<2x8x16xf32>
    %201 = tpu.matmul %200, %187, %cst_85 {dimension_numbers = #tpu.dot_dimension_numbers<[2], [1], [1], [2], [0, 0, 0, 1, 1, 2], [0], [0]>} : vector<2x8x8xf32>, vector<2x8x16xf32>, vector<2x8x16xf32> -> vector<2x8x16xf32>
    "tpu.trace_stop"() : () -> ()
    %202 = vector.extract_strided_slice %201 {offsets = [0, 0, 0], sizes = [1, 8, 16], strides = [1, 1, 1]} : vector<2x8x16xf32> to vector<1x8x16xf32>
    %203 = vector.shape_cast %202 : vector<1x8x16xf32> to vector<8x16xf32>
    %204 = vector.extract_strided_slice %201 {offsets = [1, 0, 0], sizes = [1, 8, 16], strides = [1, 1, 1]} : vector<2x8x16xf32> to vector<1x8x16xf32>
    %205 = vector.shape_cast %204 : vector<1x8x16xf32> to vector<8x16xf32>
    %206 = tpu.concatenate %203, %205 in 1 : vector<8x16xf32>, vector<8x16xf32> -> vector<8x32xf32>
    %c1_86 = arith.constant 1 : index
    %c0_87 = arith.constant 0 : index
    %c0_88 = arith.constant 0 : index
    %207 = vector.load %arg9[%c1_86, %c0_87, %c0_88] : memref<2x32x32xf32, #tpu.memory_space<vmem>>, vector<1x32x32xf32>
    %208 = vector.shape_cast %207 : vector<1x32x32xf32> to vector<32x32xf32>
    %cst_89 = arith.constant dense<0.000000e+00> : vector<8x32xf32>
    %209 = tpu.matmul %206, %208, %cst_89 {dimension_numbers = #tpu.dot_dimension_numbers<[1], [0], [0], [1], [0, 0, 1, 1], [], []>} : vector<8x32xf32>, vector<32x32xf32>, vector<8x32xf32> -> vector<8x32xf32>
    %c1_90 = arith.constant 1 : index
    %c0_91 = arith.constant 0 : index
    %c0_92 = arith.constant 0 : index
    %210 = vector.load %arg10[%c1_90, %c0_91, %c0_92] : memref<2x1x32xf32, #tpu.memory_space<vmem>>, vector<1x1x32xf32>
    %211 = vector.shape_cast %210 : vector<1x1x32xf32> to vector<1x32xf32>
    %212 = vector.broadcast %211 : vector<1x32xf32> to vector<8x32xf32>
    %213 = arith.addf %209, %212 : vector<8x32xf32>
    %214 = arith.addf %213, %165 : vector<8x32xf32>
    %c1_93 = arith.constant 1 : index
    %c0_94 = arith.constant 0 : index
    %c0_95 = arith.constant 0 : index
    %215 = vector.load %arg11[%c1_93, %c0_94, %c0_95] : memref<2x1x32xf32, #tpu.memory_space<vmem>>, vector<1x1x32xf32>
    %216 = vector.shape_cast %215 : vector<1x1x32xf32> to vector<1x32xf32>
    %c1_96 = arith.constant 1 : index
    %c0_97 = arith.constant 0 : index
    %c0_98 = arith.constant 0 : index
    %217 = vector.load %arg12[%c1_96, %c0_97, %c0_98] : memref<2x1x32xf32, #tpu.memory_space<vmem>>, vector<1x1x32xf32>
    %218 = vector.shape_cast %217 : vector<1x1x32xf32> to vector<1x32xf32>
    %cst_99 = arith.constant dense<0.000000e+00> : vector<8xf32>
    %219 = vector.multi_reduction <add>, %214, %cst_99 [1] : vector<8x32xf32> to vector<8xf32>
    %220 = vector.shape_cast %219 : vector<8xf32> to vector<8x1xf32>
    %cst_100 = arith.constant 3.200000e+01 : f32
    %221 = vector.broadcast %cst_100 : f32 to vector<8x1xf32>
    %222 = arith.divf %220, %221 : vector<8x1xf32>
    %223 = vector.broadcast %222 : vector<8x1xf32> to vector<8x32xf32>
    %224 = arith.subf %214, %223 : vector<8x32xf32>
    %225 = arith.mulf %224, %224 : vector<8x32xf32>
    %cst_101 = arith.constant dense<0.000000e+00> : vector<8xf32>
    %226 = vector.multi_reduction <add>, %225, %cst_101 [1] : vector<8x32xf32> to vector<8xf32>
    %227 = vector.shape_cast %226 : vector<8xf32> to vector<8x1xf32>
    %cst_102 = arith.constant 3.200000e+01 : f32
    %228 = vector.broadcast %cst_102 : f32 to vector<8x1xf32>
    %229 = arith.divf %227, %228 : vector<8x1xf32>
    %230 = vector.broadcast %222 : vector<8x1xf32> to vector<8x32xf32>
    %231 = arith.subf %214, %230 : vector<8x32xf32>
    %cst_103 = arith.constant 9.99999996E-13 : f32
    %232 = vector.broadcast %cst_103 : f32 to vector<8x1xf32>
    %233 = arith.addf %229, %232 : vector<8x1xf32>
    %234 = math.rsqrt %233 : vector<8x1xf32>
    %235 = vector.broadcast %234 : vector<8x1xf32> to vector<8x32xf32>
    %236 = arith.mulf %231, %235 : vector<8x32xf32>
    %237 = vector.broadcast %216 : vector<1x32xf32> to vector<8x32xf32>
    %238 = arith.mulf %236, %237 : vector<8x32xf32>
    %239 = vector.broadcast %218 : vector<1x32xf32> to vector<8x32xf32>
    %240 = arith.addf %238, %239 : vector<8x32xf32>
    %c1_104 = arith.constant 1 : index
    %c0_105 = arith.constant 0 : index
    %c0_106 = arith.constant 0 : index
    %241 = vector.load %arg13[%c1_104, %c0_105, %c0_106] : memref<2x32x64xf32, #tpu.memory_space<vmem>>, vector<1x32x64xf32>
    %242 = vector.shape_cast %241 : vector<1x32x64xf32> to vector<32x64xf32>
    %cst_107 = arith.constant dense<0.000000e+00> : vector<8x64xf32>
    %243 = tpu.matmul %240, %242, %cst_107 {dimension_numbers = #tpu.dot_dimension_numbers<[1], [0], [0], [1], [0, 0, 1, 1], [], []>} : vector<8x32xf32>, vector<32x64xf32>, vector<8x64xf32> -> vector<8x64xf32>
    %c1_108 = arith.constant 1 : index
    %c0_109 = arith.constant 0 : index
    %c0_110 = arith.constant 0 : index
    %244 = vector.load %arg14[%c1_108, %c0_109, %c0_110] : memref<2x1x64xf32, #tpu.memory_space<vmem>>, vector<1x1x64xf32>
    %245 = vector.shape_cast %244 : vector<1x1x64xf32> to vector<1x64xf32>
    %246 = vector.broadcast %245 : vector<1x64xf32> to vector<8x64xf32>
    %247 = arith.addf %243, %246 : vector<8x64xf32>
    %248 = arith.mulf %247, %247 : vector<8x64xf32>
    %249 = arith.mulf %247, %248 : vector<8x64xf32>
    %cst_111 = arith.constant 4.471500e-02 : f32
    %250 = vector.broadcast %cst_111 : f32 to vector<8x64xf32>
    %251 = arith.mulf %250, %249 : vector<8x64xf32>
    %252 = arith.addf %247, %251 : vector<8x64xf32>
    %cst_112 = arith.constant 0.797884583 : f32
    %253 = vector.broadcast %cst_112 : f32 to vector<8x64xf32>
    %254 = arith.mulf %253, %252 : vector<8x64xf32>
    %255 = math.tanh %254 : vector<8x64xf32>
    %cst_113 = arith.constant 1.000000e+00 : f32
    %256 = vector.broadcast %cst_113 : f32 to vector<8x64xf32>
    %257 = arith.addf %256, %255 : vector<8x64xf32>
    %cst_114 = arith.constant 5.000000e-01 : f32
    %258 = vector.broadcast %cst_114 : f32 to vector<8x64xf32>
    %259 = arith.mulf %258, %257 : vector<8x64xf32>
    %260 = arith.mulf %247, %259 : vector<8x64xf32>
    %c1_115 = arith.constant 1 : index
    %c0_116 = arith.constant 0 : index
    %c0_117 = arith.constant 0 : index
    %261 = vector.load %arg15[%c1_115, %c0_116, %c0_117] : memref<2x64x32xf32, #tpu.memory_space<vmem>>, vector<1x64x32xf32>
    %262 = vector.shape_cast %261 : vector<1x64x32xf32> to vector<64x32xf32>
    %cst_118 = arith.constant dense<0.000000e+00> : vector<8x32xf32>
    %263 = tpu.matmul %260, %262, %cst_118 {dimension_numbers = #tpu.dot_dimension_numbers<[1], [0], [0], [1], [0, 0, 1, 1], [], []>} : vector<8x64xf32>, vector<64x32xf32>, vector<8x32xf32> -> vector<8x32xf32>
    %c1_119 = arith.constant 1 : index
    %c0_120 = arith.constant 0 : index
    %c0_121 = arith.constant 0 : index
    %264 = vector.load %arg16[%c1_119, %c0_120, %c0_121] : memref<2x1x32xf32, #tpu.memory_space<vmem>>, vector<1x1x32xf32>
    %265 = vector.shape_cast %264 : vector<1x1x32xf32> to vector<1x32xf32>
    %266 = vector.broadcast %265 : vector<1x32xf32> to vector<8x32xf32>
    %267 = arith.addf %263, %266 : vector<8x32xf32>
    %268 = arith.addf %267, %240 : vector<8x32xf32>
    %c1_122 = arith.constant 1 : index
    %c0_123 = arith.constant 0 : index
    %c0_124 = arith.constant 0 : index
    %269 = vector.load %arg17[%c1_122, %c0_123, %c0_124] : memref<2x1x32xf32, #tpu.memory_space<vmem>>, vector<1x1x32xf32>
    %270 = vector.shape_cast %269 : vector<1x1x32xf32> to vector<1x32xf32>
    %c1_125 = arith.constant 1 : index
    %c0_126 = arith.constant 0 : index
    %c0_127 = arith.constant 0 : index
    %271 = vector.load %arg18[%c1_125, %c0_126, %c0_127] : memref<2x1x32xf32, #tpu.memory_space<vmem>>, vector<1x1x32xf32>
    %272 = vector.shape_cast %271 : vector<1x1x32xf32> to vector<1x32xf32>
    %cst_128 = arith.constant dense<0.000000e+00> : vector<8xf32>
    %273 = vector.multi_reduction <add>, %268, %cst_128 [1] : vector<8x32xf32> to vector<8xf32>
    %274 = vector.shape_cast %273 : vector<8xf32> to vector<8x1xf32>
    %cst_129 = arith.constant 3.200000e+01 : f32
    %275 = vector.broadcast %cst_129 : f32 to vector<8x1xf32>
    %276 = arith.divf %274, %275 : vector<8x1xf32>
    %277 = vector.broadcast %276 : vector<8x1xf32> to vector<8x32xf32>
    %278 = arith.subf %268, %277 : vector<8x32xf32>
    %279 = arith.mulf %278, %278 : vector<8x32xf32>
    %cst_130 = arith.constant dense<0.000000e+00> : vector<8xf32>
    %280 = vector.multi_reduction <add>, %279, %cst_130 [1] : vector<8x32xf32> to vector<8xf32>
    %281 = vector.shape_cast %280 : vector<8xf32> to vector<8x1xf32>
    %cst_131 = arith.constant 3.200000e+01 : f32
    %282 = vector.broadcast %cst_131 : f32 to vector<8x1xf32>
    %283 = arith.divf %281, %282 : vector<8x1xf32>
    %284 = vector.broadcast %276 : vector<8x1xf32> to vector<8x32xf32>
    %285 = arith.subf %268, %284 : vector<8x32xf32>
    %cst_132 = arith.constant 9.99999996E-13 : f32
    %286 = vector.broadcast %cst_132 : f32 to vector<8x1xf32>
    %287 = arith.addf %283, %286 : vector<8x1xf32>
    %288 = math.rsqrt %287 : vector<8x1xf32>
    %289 = vector.broadcast %288 : vector<8x1xf32> to vector<8x32xf32>
    %290 = arith.mulf %285, %289 : vector<8x32xf32>
    %291 = vector.broadcast %270 : vector<1x32xf32> to vector<8x32xf32>
    %292 = arith.mulf %290, %291 : vector<8x32xf32>
    %293 = vector.broadcast %272 : vector<1x32xf32> to vector<8x32xf32>
    %294 = arith.addf %292, %293 : vector<8x32xf32>
    %c0_133 = arith.constant 0 : index
    %c0_134 = arith.constant 0 : index
    %295 = vector.load %arg19[%c0_133, %c0_134] : memref<32x128xf32, #tpu.memory_space<vmem>>, vector<32x128xf32>
    %cst_135 = arith.constant dense<0.000000e+00> : vector<8x128xf32>
    %296 = tpu.matmul %294, %295, %cst_135 {dimension_numbers = #tpu.dot_dimension_numbers<[1], [0], [0], [1], [0, 0, 1, 1], [], []>} : vector<8x32xf32>, vector<32x128xf32>, vector<8x128xf32> -> vector<8x128xf32>
    %c0_136 = arith.constant 0 : index
    %c0_137 = arith.constant 0 : index
    %297 = vector.load %arg21[%c0_136, %c0_137] : memref<1x128xf32, #tpu.memory_space<vmem>>, vector<1x128xf32>
    %298 = vector.broadcast %297 : vector<1x128xf32> to vector<8x128xf32>
    %299 = arith.addf %296, %298 : vector<8x128xf32>
    %c0_138 = arith.constant 0 : index
    %c0_139 = arith.constant 0 : index
    %300 = vector.load %arg20[%c0_138, %c0_139] : memref<32x128xf32, #tpu.memory_space<vmem>>, vector<32x128xf32>
    %cst_140 = arith.constant 0.000000e+00 : f32
    %301 = vector.broadcast %cst_140 : f32 to vector<1x32xf32>
    %cst_141 = arith.constant 0.000000e+00 : f32
    %302 = vector.broadcast %cst_141 : f32 to vector<1x32xf32>
    %303 = vector.extract_strided_slice %299 {offsets = [0, 0], sizes = [1, 128], strides = [1, 1]} : vector<8x128xf32> to vector<1x128xf32>
    %cst_142 = arith.constant dense<0.000000e+00> : vector<1x128xf32>
    %304 = tpu.matmul %301, %300, %cst_142 {dimension_numbers = #tpu.dot_dimension_numbers<[1], [0], [0], [1], [0, 0, 1, 1], [], []>} : vector<1x32xf32>, vector<32x128xf32>, vector<1x128xf32> -> vector<1x128xf32>
    %305 = arith.addf %303, %304 : vector<1x128xf32>
    %306 = arith.negf %305 : vector<1x128xf32>
    %307 = math.exp %306 : vector<1x128xf32>
    %cst_143 = arith.constant 1.000000e+00 : f32
    %308 = vector.broadcast %cst_143 : f32 to vector<1x128xf32>
    %309 = arith.addf %308, %307 : vector<1x128xf32>
    %310 = arith.divf %308, %309 : vector<1x128xf32>
    %311 = vector.extract_strided_slice %310 {offsets = [0, 0], sizes = [1, 32], strides = [1, 1]} : vector<1x128xf32> to vector<1x32xf32>
    %312 = vector.extract_strided_slice %310 {offsets = [0, 32], sizes = [1, 32], strides = [1, 1]} : vector<1x128xf32> to vector<1x32xf32>
    %313 = vector.extract_strided_slice %310 {offsets = [0, 96], sizes = [1, 32], strides = [1, 1]} : vector<1x128xf32> to vector<1x32xf32>
    %314 = vector.extract_strided_slice %305 {offsets = [0, 64], sizes = [1, 32], strides = [1, 1]} : vector<1x128xf32> to vector<1x32xf32>
    %315 = math.tanh %314 : vector<1x32xf32>
    %316 = arith.mulf %312, %302 : vector<1x32xf32>
    %317 = arith.mulf %311, %315 : vector<1x32xf32>
    %318 = arith.addf %316, %317 : vector<1x32xf32>
    %319 = math.tanh %318 : vector<1x32xf32>
    %320 = arith.mulf %313, %319 : vector<1x32xf32>
    %321 = vector.extract_strided_slice %299 {offsets = [1, 0], sizes = [1, 128], strides = [1, 1]} : vector<8x128xf32> to vector<1x128xf32>
    %cst_144 = arith.constant dense<0.000000e+00> : vector<1x128xf32>
    %322 = tpu.matmul %320, %300, %cst_144 {dimension_numbers = #tpu.dot_dimension_numbers<[1], [0], [0], [1], [0, 0, 1, 1], [], []>} : vector<1x32xf32>, vector<32x128xf32>, vector<1x128xf32> -> vector<1x128xf32>
    %323 = arith.addf %321, %322 : vector<1x128xf32>
    %324 = arith.negf %323 : vector<1x128xf32>
    %325 = math.exp %324 : vector<1x128xf32>
    %cst_145 = arith.constant 1.000000e+00 : f32
    %326 = vector.broadcast %cst_145 : f32 to vector<1x128xf32>
    %327 = arith.addf %326, %325 : vector<1x128xf32>
    %328 = arith.divf %326, %327 : vector<1x128xf32>
    %329 = vector.extract_strided_slice %328 {offsets = [0, 0], sizes = [1, 32], strides = [1, 1]} : vector<1x128xf32> to vector<1x32xf32>
    %330 = vector.extract_strided_slice %328 {offsets = [0, 32], sizes = [1, 32], strides = [1, 1]} : vector<1x128xf32> to vector<1x32xf32>
    %331 = vector.extract_strided_slice %328 {offsets = [0, 96], sizes = [1, 32], strides = [1, 1]} : vector<1x128xf32> to vector<1x32xf32>
    %332 = vector.extract_strided_slice %323 {offsets = [0, 64], sizes = [1, 32], strides = [1, 1]} : vector<1x128xf32> to vector<1x32xf32>
    %333 = math.tanh %332 : vector<1x32xf32>
    %334 = arith.mulf %330, %318 : vector<1x32xf32>
    %335 = arith.mulf %329, %333 : vector<1x32xf32>
    %336 = arith.addf %334, %335 : vector<1x32xf32>
    %337 = math.tanh %336 : vector<1x32xf32>
    %338 = arith.mulf %331, %337 : vector<1x32xf32>
    %339 = vector.extract_strided_slice %299 {offsets = [2, 0], sizes = [1, 128], strides = [1, 1]} : vector<8x128xf32> to vector<1x128xf32>
    %cst_146 = arith.constant dense<0.000000e+00> : vector<1x128xf32>
    %340 = tpu.matmul %338, %300, %cst_146 {dimension_numbers = #tpu.dot_dimension_numbers<[1], [0], [0], [1], [0, 0, 1, 1], [], []>} : vector<1x32xf32>, vector<32x128xf32>, vector<1x128xf32> -> vector<1x128xf32>
    %341 = arith.addf %339, %340 : vector<1x128xf32>
    %342 = arith.negf %341 : vector<1x128xf32>
    %343 = math.exp %342 : vector<1x128xf32>
    %cst_147 = arith.constant 1.000000e+00 : f32
    %344 = vector.broadcast %cst_147 : f32 to vector<1x128xf32>
    %345 = arith.addf %344, %343 : vector<1x128xf32>
    %346 = arith.divf %344, %345 : vector<1x128xf32>
    %347 = vector.extract_strided_slice %346 {offsets = [0, 0], sizes = [1, 32], strides = [1, 1]} : vector<1x128xf32> to vector<1x32xf32>
    %348 = vector.extract_strided_slice %346 {offsets = [0, 32], sizes = [1, 32], strides = [1, 1]} : vector<1x128xf32> to vector<1x32xf32>
    %349 = vector.extract_strided_slice %346 {offsets = [0, 96], sizes = [1, 32], strides = [1, 1]} : vector<1x128xf32> to vector<1x32xf32>
    %350 = vector.extract_strided_slice %341 {offsets = [0, 64], sizes = [1, 32], strides = [1, 1]} : vector<1x128xf32> to vector<1x32xf32>
    %351 = math.tanh %350 : vector<1x32xf32>
    %352 = arith.mulf %348, %336 : vector<1x32xf32>
    %353 = arith.mulf %347, %351 : vector<1x32xf32>
    %354 = arith.addf %352, %353 : vector<1x32xf32>
    %355 = math.tanh %354 : vector<1x32xf32>
    %356 = arith.mulf %349, %355 : vector<1x32xf32>
    %357 = vector.extract_strided_slice %299 {offsets = [3, 0], sizes = [1, 128], strides = [1, 1]} : vector<8x128xf32> to vector<1x128xf32>
    %cst_148 = arith.constant dense<0.000000e+00> : vector<1x128xf32>
    %358 = tpu.matmul %356, %300, %cst_148 {dimension_numbers = #tpu.dot_dimension_numbers<[1], [0], [0], [1], [0, 0, 1, 1], [], []>} : vector<1x32xf32>, vector<32x128xf32>, vector<1x128xf32> -> vector<1x128xf32>
    %359 = arith.addf %357, %358 : vector<1x128xf32>
    %360 = arith.negf %359 : vector<1x128xf32>
    %361 = math.exp %360 : vector<1x128xf32>
    %cst_149 = arith.constant 1.000000e+00 : f32
    %362 = vector.broadcast %cst_149 : f32 to vector<1x128xf32>
    %363 = arith.addf %362, %361 : vector<1x128xf32>
    %364 = arith.divf %362, %363 : vector<1x128xf32>
    %365 = vector.extract_strided_slice %364 {offsets = [0, 0], sizes = [1, 32], strides = [1, 1]} : vector<1x128xf32> to vector<1x32xf32>
    %366 = vector.extract_strided_slice %364 {offsets = [0, 32], sizes = [1, 32], strides = [1, 1]} : vector<1x128xf32> to vector<1x32xf32>
    %367 = vector.extract_strided_slice %364 {offsets = [0, 96], sizes = [1, 32], strides = [1, 1]} : vector<1x128xf32> to vector<1x32xf32>
    %368 = vector.extract_strided_slice %359 {offsets = [0, 64], sizes = [1, 32], strides = [1, 1]} : vector<1x128xf32> to vector<1x32xf32>
    %369 = math.tanh %368 : vector<1x32xf32>
    %370 = arith.mulf %366, %354 : vector<1x32xf32>
    %371 = arith.mulf %365, %369 : vector<1x32xf32>
    %372 = arith.addf %370, %371 : vector<1x32xf32>
    %373 = math.tanh %372 : vector<1x32xf32>
    %374 = arith.mulf %367, %373 : vector<1x32xf32>
    %375 = vector.extract_strided_slice %299 {offsets = [4, 0], sizes = [1, 128], strides = [1, 1]} : vector<8x128xf32> to vector<1x128xf32>
    %cst_150 = arith.constant dense<0.000000e+00> : vector<1x128xf32>
    %376 = tpu.matmul %374, %300, %cst_150 {dimension_numbers = #tpu.dot_dimension_numbers<[1], [0], [0], [1], [0, 0, 1, 1], [], []>} : vector<1x32xf32>, vector<32x128xf32>, vector<1x128xf32> -> vector<1x128xf32>
    %377 = arith.addf %375, %376 : vector<1x128xf32>
    %378 = arith.negf %377 : vector<1x128xf32>
    %379 = math.exp %378 : vector<1x128xf32>
    %cst_151 = arith.constant 1.000000e+00 : f32
    %380 = vector.broadcast %cst_151 : f32 to vector<1x128xf32>
    %381 = arith.addf %380, %379 : vector<1x128xf32>
    %382 = arith.divf %380, %381 : vector<1x128xf32>
    %383 = vector.extract_strided_slice %382 {offsets = [0, 0], sizes = [1, 32], strides = [1, 1]} : vector<1x128xf32> to vector<1x32xf32>
    %384 = vector.extract_strided_slice %382 {offsets = [0, 32], sizes = [1, 32], strides = [1, 1]} : vector<1x128xf32> to vector<1x32xf32>
    %385 = vector.extract_strided_slice %382 {offsets = [0, 96], sizes = [1, 32], strides = [1, 1]} : vector<1x128xf32> to vector<1x32xf32>
    %386 = vector.extract_strided_slice %377 {offsets = [0, 64], sizes = [1, 32], strides = [1, 1]} : vector<1x128xf32> to vector<1x32xf32>
    %387 = math.tanh %386 : vector<1x32xf32>
    %388 = arith.mulf %384, %372 : vector<1x32xf32>
    %389 = arith.mulf %383, %387 : vector<1x32xf32>
    %390 = arith.addf %388, %389 : vector<1x32xf32>
    %391 = math.tanh %390 : vector<1x32xf32>
    %392 = arith.mulf %385, %391 : vector<1x32xf32>
    %393 = vector.extract_strided_slice %299 {offsets = [5, 0], sizes = [1, 128], strides = [1, 1]} : vector<8x128xf32> to vector<1x128xf32>
    %cst_152 = arith.constant dense<0.000000e+00> : vector<1x128xf32>
    %394 = tpu.matmul %392, %300, %cst_152 {dimension_numbers = #tpu.dot_dimension_numbers<[1], [0], [0], [1], [0, 0, 1, 1], [], []>} : vector<1x32xf32>, vector<32x128xf32>, vector<1x128xf32> -> vector<1x128xf32>
    %395 = arith.addf %393, %394 : vector<1x128xf32>
    %396 = arith.negf %395 : vector<1x128xf32>
    %397 = math.exp %396 : vector<1x128xf32>
    %cst_153 = arith.constant 1.000000e+00 : f32
    %398 = vector.broadcast %cst_153 : f32 to vector<1x128xf32>
    %399 = arith.addf %398, %397 : vector<1x128xf32>
    %400 = arith.divf %398, %399 : vector<1x128xf32>
    %401 = vector.extract_strided_slice %400 {offsets = [0, 0], sizes = [1, 32], strides = [1, 1]} : vector<1x128xf32> to vector<1x32xf32>
    %402 = vector.extract_strided_slice %400 {offsets = [0, 32], sizes = [1, 32], strides = [1, 1]} : vector<1x128xf32> to vector<1x32xf32>
    %403 = vector.extract_strided_slice %400 {offsets = [0, 96], sizes = [1, 32], strides = [1, 1]} : vector<1x128xf32> to vector<1x32xf32>
    %404 = vector.extract_strided_slice %395 {offsets = [0, 64], sizes = [1, 32], strides = [1, 1]} : vector<1x128xf32> to vector<1x32xf32>
    %405 = math.tanh %404 : vector<1x32xf32>
    %406 = arith.mulf %402, %390 : vector<1x32xf32>
    %407 = arith.mulf %401, %405 : vector<1x32xf32>
    %408 = arith.addf %406, %407 : vector<1x32xf32>
    %409 = math.tanh %408 : vector<1x32xf32>
    %410 = arith.mulf %403, %409 : vector<1x32xf32>
    %411 = vector.extract_strided_slice %299 {offsets = [6, 0], sizes = [1, 128], strides = [1, 1]} : vector<8x128xf32> to vector<1x128xf32>
    %cst_154 = arith.constant dense<0.000000e+00> : vector<1x128xf32>
    %412 = tpu.matmul %410, %300, %cst_154 {dimension_numbers = #tpu.dot_dimension_numbers<[1], [0], [0], [1], [0, 0, 1, 1], [], []>} : vector<1x32xf32>, vector<32x128xf32>, vector<1x128xf32> -> vector<1x128xf32>
    %413 = arith.addf %411, %412 : vector<1x128xf32>
    %414 = arith.negf %413 : vector<1x128xf32>
    %415 = math.exp %414 : vector<1x128xf32>
    %cst_155 = arith.constant 1.000000e+00 : f32
    %416 = vector.broadcast %cst_155 : f32 to vector<1x128xf32>
    %417 = arith.addf %416, %415 : vector<1x128xf32>
    %418 = arith.divf %416, %417 : vector<1x128xf32>
    %419 = vector.extract_strided_slice %418 {offsets = [0, 0], sizes = [1, 32], strides = [1, 1]} : vector<1x128xf32> to vector<1x32xf32>
    %420 = vector.extract_strided_slice %418 {offsets = [0, 32], sizes = [1, 32], strides = [1, 1]} : vector<1x128xf32> to vector<1x32xf32>
    %421 = vector.extract_strided_slice %418 {offsets = [0, 96], sizes = [1, 32], strides = [1, 1]} : vector<1x128xf32> to vector<1x32xf32>
    %422 = vector.extract_strided_slice %413 {offsets = [0, 64], sizes = [1, 32], strides = [1, 1]} : vector<1x128xf32> to vector<1x32xf32>
    %423 = math.tanh %422 : vector<1x32xf32>
    %424 = arith.mulf %420, %408 : vector<1x32xf32>
    %425 = arith.mulf %419, %423 : vector<1x32xf32>
    %426 = arith.addf %424, %425 : vector<1x32xf32>
    %427 = math.tanh %426 : vector<1x32xf32>
    %428 = arith.mulf %421, %427 : vector<1x32xf32>
    %429 = vector.extract_strided_slice %299 {offsets = [7, 0], sizes = [1, 128], strides = [1, 1]} : vector<8x128xf32> to vector<1x128xf32>
    %cst_156 = arith.constant dense<0.000000e+00> : vector<1x128xf32>
    %430 = tpu.matmul %428, %300, %cst_156 {dimension_numbers = #tpu.dot_dimension_numbers<[1], [0], [0], [1], [0, 0, 1, 1], [], []>} : vector<1x32xf32>, vector<32x128xf32>, vector<1x128xf32> -> vector<1x128xf32>
    %431 = arith.addf %429, %430 : vector<1x128xf32>
    %432 = arith.negf %431 : vector<1x128xf32>
    %433 = math.exp %432 : vector<1x128xf32>
    %cst_157 = arith.constant 1.000000e+00 : f32
    %434 = vector.broadcast %cst_157 : f32 to vector<1x128xf32>
    %435 = arith.addf %434, %433 : vector<1x128xf32>
    %436 = arith.divf %434, %435 : vector<1x128xf32>
    %437 = vector.extract_strided_slice %436 {offsets = [0, 0], sizes = [1, 32], strides = [1, 1]} : vector<1x128xf32> to vector<1x32xf32>
    %438 = vector.extract_strided_slice %436 {offsets = [0, 32], sizes = [1, 32], strides = [1, 1]} : vector<1x128xf32> to vector<1x32xf32>
    %439 = vector.extract_strided_slice %436 {offsets = [0, 96], sizes = [1, 32], strides = [1, 1]} : vector<1x128xf32> to vector<1x32xf32>
    %440 = vector.extract_strided_slice %431 {offsets = [0, 64], sizes = [1, 32], strides = [1, 1]} : vector<1x128xf32> to vector<1x32xf32>
    %441 = math.tanh %440 : vector<1x32xf32>
    %442 = arith.mulf %438, %426 : vector<1x32xf32>
    %443 = arith.mulf %437, %441 : vector<1x32xf32>
    %444 = arith.addf %442, %443 : vector<1x32xf32>
    %445 = math.tanh %444 : vector<1x32xf32>
    %446 = arith.mulf %439, %445 : vector<1x32xf32>
    %447 = tpu.concatenate %320, %338, %356, %374, %392, %410, %428, %446 in 0 : vector<1x32xf32>, vector<1x32xf32>, vector<1x32xf32>, vector<1x32xf32>, vector<1x32xf32>, vector<1x32xf32>, vector<1x32xf32>, vector<1x32xf32> -> vector<8x32xf32>
    %c0_158 = arith.constant 0 : index
    %c0_159 = arith.constant 0 : index
    %c0_160 = arith.constant 0 : index
    %448 = vector.load %arg22[%c0_158, %c0_159, %c0_160] : memref<1x8x32xf32, #tpu.memory_space<vmem>>, vector<1x8x32xf32>
    %449 = vector.shape_cast %448 : vector<1x8x32xf32> to vector<8x32xf32>
    %450 = vector.shape_cast %447 : vector<8x32xf32> to vector<1x8x32xf32>
    tpu.vector_store %arg22[%c0_158, %c0_159, %c0_160], %450 {strides = array<i32>} : memref<1x8x32xf32, #tpu.memory_space<vmem>>, vector<1x8x32xf32>,
    return
  }
  func.func @transform_0(%arg0: i32) -> (i32, i32) {
    %c0_i32 = arith.constant 0 : i32
    %c0_i32_0 = arith.constant 0 : i32
    return %arg0, %c0_i32 : i32, i32
  }
  func.func @transform_1(%arg0: i32) -> (i32, i32) {
    %c0_i32 = arith.constant 0 : i32
    %c0_i32_0 = arith.constant 0 : i32
    %c0_i32_1 = arith.constant 0 : i32
    return %c0_i32, %c0_i32_0 : i32, i32
  }
  func.func @transform_2(%arg0: i32) -> (i32, i32) {
    %c0_i32 = arith.constant 0 : i32
    %c0_i32_0 = arith.constant 0 : i32
    %c0_i32_1 = arith.constant 0 : i32
    return %c0_i32, %c0_i32_0 : i32, i32
  }
  func.func @transform_3(%arg0: i32) -> (i32, i32) {
    %c0_i32 = arith.constant 0 : i32
    %c0_i32_0 = arith.constant 0 : i32
    %c0_i32_1 = arith.constant 0 : i32
    return %c0_i32, %c0_i32_0 : i32, i32
  }
  func.func @transform_4(%arg0: i32) -> (i32, i32) {
    %c0_i32 = arith.constant 0 : i32
    %c0_i32_0 = arith.constant 0 : i32
    %c0_i32_1 = arith.constant 0 : i32
    return %c0_i32, %c0_i32_0 : i32, i32
  }
  func.func @transform_5(%arg0: i32) -> (i32, i32) {
    %c0_i32 = arith.constant 0 : i32
    %c0_i32_0 = arith.constant 0 : i32
    %c0_i32_1 = arith.constant 0 : i32
    return %c0_i32, %c0_i32_0 : i32, i32
  }
  func.func @transform_6(%arg0: i32) -> (i32, i32, i32) {
    %c0_i32 = arith.constant 0 : i32
    %c0_i32_0 = arith.constant 0 : i32
    %c0_i32_1 = arith.constant 0 : i32
    %c0_i32_2 = arith.constant 0 : i32
    return %c0_i32, %c0_i32_0, %c0_i32_1 : i32, i32, i32
  }
  func.func @transform_7(%arg0: i32) -> (i32, i32, i32) {
    %c0_i32 = arith.constant 0 : i32
    %c0_i32_0 = arith.constant 0 : i32
    %c0_i32_1 = arith.constant 0 : i32
    %c0_i32_2 = arith.constant 0 : i32
    return %c0_i32, %c0_i32_0, %c0_i32_1 : i32, i32, i32
  }
  func.func @transform_8(%arg0: i32) -> (i32, i32, i32) {
    %c0_i32 = arith.constant 0 : i32
    %c0_i32_0 = arith.constant 0 : i32
    %c0_i32_1 = arith.constant 0 : i32
    %c0_i32_2 = arith.constant 0 : i32
    return %c0_i32, %c0_i32_0, %c0_i32_1 : i32, i32, i32
  }
  func.func @transform_9(%arg0: i32) -> (i32, i32, i32) {
    %c0_i32 = arith.constant 0 : i32
    %c0_i32_0 = arith.constant 0 : i32
    %c0_i32_1 = arith.constant 0 : i32
    %c0_i32_2 = arith.constant 0 : i32
    return %c0_i32, %c0_i32_0, %c0_i32_1 : i32, i32, i32
  }
  func.func @transform_10(%arg0: i32) -> (i32, i32, i32) {
    %c0_i32 = arith.constant 0 : i32
    %c0_i32_0 = arith.constant 0 : i32
    %c0_i32_1 = arith.constant 0 : i32
    %c0_i32_2 = arith.constant 0 : i32
    return %c0_i32, %c0_i32_0, %c0_i32_1 : i32, i32, i32
  }
  func.func @transform_11(%arg0: i32) -> (i32, i32, i32) {
    %c0_i32 = arith.constant 0 : i32
    %c0_i32_0 = arith.constant 0 : i32
    %c0_i32_1 = arith.constant 0 : i32
    %c0_i32_2 = arith.constant 0 : i32
    return %c0_i32, %c0_i32_0, %c0_i32_1 : i32, i32, i32
  }
  func.func @transform_12(%arg0: i32) -> (i32, i32, i32) {
    %c0_i32 = arith.constant 0 : i32
    %c0_i32_0 = arith.constant 0 : i32
    %c0_i32_1 = arith.constant 0 : i32
    %c0_i32_2 = arith.constant 0 : i32
    return %c0_i32, %c0_i32_0, %c0_i32_1 : i32, i32, i32
  }
  func.func @transform_13(%arg0: i32) -> (i32, i32, i32) {
    %c0_i32 = arith.constant 0 : i32
    %c0_i32_0 = arith.constant 0 : i32
    %c0_i32_1 = arith.constant 0 : i32
    %c0_i32_2 = arith.constant 0 : i32
    return %c0_i32, %c0_i32_0, %c0_i32_1 : i32, i32, i32
  }
  func.func @transform_14(%arg0: i32) -> (i32, i32, i32) {
    %c0_i32 = arith.constant 0 : i32
    %c0_i32_0 = arith.constant 0 : i32
    %c0_i32_1 = arith.constant 0 : i32
    %c0_i32_2 = arith.constant 0 : i32
    return %c0_i32, %c0_i32_0, %c0_i32_1 : i32, i32, i32
  }
  func.func @transform_15(%arg0: i32) -> (i32, i32, i32) {
    %c0_i32 = arith.constant 0 : i32
    %c0_i32_0 = arith.constant 0 : i32
    %c0_i32_1 = arith.constant 0 : i32
    %c0_i32_2 = arith.constant 0 : i32
    return %c0_i32, %c0_i32_0, %c0_i32_1 : i32, i32, i32
  }
  func.func @transform_16(%arg0: i32) -> (i32, i32, i32) {
    %c0_i32 = arith.constant 0 : i32
    %c0_i32_0 = arith.constant 0 : i32
    %c0_i32_1 = arith.constant 0 : i32
    %c0_i32_2 = arith.constant 0 : i32
    return %c0_i32, %c0_i32_0, %c0_i32_1 : i32, i32, i32
  }
  func.func @transform_17(%arg0: i32) -> (i32, i32, i32) {
    %c0_i32 = arith.constant 0 : i32
    %c0_i32_0 = arith.constant 0 : i32
    %c0_i32_1 = arith.constant 0 : i32
    %c0_i32_2 = arith.constant 0 : i32
    return %c0_i32, %c0_i32_0, %c0_i32_1 : i32, i32, i32
  }
  func.func @transform_18(%arg0: i32) -> (i32, i32) {
    %c0_i32 = arith.constant 0 : i32
    %c0_i32_0 = arith.constant 0 : i32
    %c0_i32_1 = arith.constant 0 : i32
    return %c0_i32, %c0_i32_0 : i32, i32
  }
  func.func @transform_19(%arg0: i32) -> (i32, i32) {
    %c0_i32 = arith.constant 0 : i32
    %c0_i32_0 = arith.constant 0 : i32
    %c0_i32_1 = arith.constant 0 : i32
    return %c0_i32, %c0_i32_0 : i32, i32
  }
  func.func @transform_20(%arg0: i32) -> (i32, i32) {
    %c0_i32 = arith.constant 0 : i32
    %c0_i32_0 = arith.constant 0 : i32
    %c0_i32_1 = arith.constant 0 : i32
    return %c0_i32, %c0_i32_0 : i32, i32
  }
  func.func @transform_21(%arg0: i32) -> (i32, i32, i32) {
    %c0_i32 = arith.constant 0 : i32
    %c0_i32_0 = arith.constant 0 : i32
    %c0_i32_1 = arith.constant 0 : i32
    return %arg0, %c0_i32, %c0_i32_0 : i32, i32, i32
  }
}

</mosaic_0001>

<llo_original>
// kernel: bert_lstm_forward.1
$region0: #{bert_lstm_forward.1}
  #allocation0 [shape = 'u32[]', space=smem, size = 0x4, offset = 0x4, fixed_abs, tag = 'smem constant byte address 0x4 - core index']
  #allocation1 [shape = 'u32[144,128]{1,0:T(1,128)}', space=vmem, size = 0x12000, scoped, tag = 'internal scratch']
  %s0 = inlined_call_operand.vmem [shape: s32[16,1], index: 0, kind: input, shape index: {}]
  %s1 = inlined_call_operand.vmem [shape: f32[128,32], index: 1, kind: input, shape index: {}]
  %s2 = inlined_call_operand.vmem [shape: f32[16,32], index: 2, kind: input, shape index: {}]
  %s3 = inlined_call_operand.vmem [shape: f32[2,32], index: 3, kind: input, shape index: {}]
  %s4 = inlined_call_operand.vmem [shape: f32[1,32], index: 4, kind: input, shape index: {}]
  %s5 = inlined_call_operand.vmem [shape: f32[1,32], index: 5, kind: input, shape index: {}]
  %s6 = inlined_call_operand.vmem [shape: f32[2,32,96], index: 6, kind: input, shape index: {}]
  %s7 = inlined_call_operand.vmem [shape: f32[2,1,96], index: 7, kind: input, shape index: {}]
  %s8 = inlined_call_operand.vmem [shape: f32[2,32,32], index: 8, kind: input, shape index: {}]
  %s9 = inlined_call_operand.vmem [shape: f32[2,1,32], index: 9, kind: input, shape index: {}]
  %s10 = inlined_call_operand.vmem [shape: f32[2,1,32], index: 10, kind: input, shape index: {}]
  %s11 = inlined_call_operand.vmem [shape: f32[2,1,32], index: 11, kind: input, shape index: {}]
  %s12 = inlined_call_operand.vmem [shape: f32[2,32,64], index: 12, kind: input, shape index: {}]
  %s13 = inlined_call_operand.vmem [shape: f32[2,1,64], index: 13, kind: input, shape index: {}]
  %s14 = inlined_call_operand.vmem [shape: f32[2,64,32], index: 14, kind: input, shape index: {}]
  %s15 = inlined_call_operand.vmem [shape: f32[2,1,32], index: 15, kind: input, shape index: {}]
  %s16 = inlined_call_operand.vmem [shape: f32[2,1,32], index: 16, kind: input, shape index: {}]
  %s17 = inlined_call_operand.vmem [shape: f32[2,1,32], index: 17, kind: input, shape index: {}]
  %s18 = inlined_call_operand.vmem [shape: f32[32,128], index: 18, kind: input, shape index: {}]
  %s19 = inlined_call_operand.vmem [shape: f32[32,128], index: 19, kind: input, shape index: {}]
  %s20 = inlined_call_operand.vmem [shape: f32[1,128], index: 20, kind: input, shape index: {}]
  %s21 = inlined_call_operand.hbm [shape: f32[2,8,32], index: 21, kind: output, shape index: {}]
  %s22 = sld [smem:[#allocation0]]
  $region117: #{bert_lstm_forward.1} parent=0
    _
  %s24 = ssub.s32 1, %s22
  %s25 = scalar_select 0, %s24, %s22
  $region1: #{bert_lstm_forward.1} parent=0
    #allocation2 [shape = 'u8[8192]{0}', space=vmem, size = 0x2000, scoped, tag = 'output window, operand 0']
    #allocation3 [shape = 's32[2]{0}', space=sflag, size = 0x8, scoped, tag = 'scoped memory for bert_lstm_forward.1']
    %26 = vsyncpa [#allocation3], 0
    %s27 = scalar_lea.sflag [#allocation3], 1
    %28 = vsyncpa %s27, 0
    loop: start=0, step=1, limit=4
    $region2: #{bert_lstm_forward.1} parent=1 // loop_pre_header
      _
    $region3: #{bert_lstm_forward.1} parent=1 // loop_header
      %s30 = sphi 0, %s34
      %p31 = scmp.ge.s32.totalorder %s30, 4
      %s40 = sphi 0, %s42
      %s43 = sphi 0, %s40
      %s44 = sphi 0, %s43
      %s60 = sphi 0, %s44
      %s64 = sphi 0, %s64
      %s66 = sphi 0, %s64
      %s67 = sphi 0, %s66
      %s81 = sphi 0, %s67
      %s85 = sphi 0, %s85
      %s87 = sphi 0, %s85
      %s88 = sphi 0, %s87
      %s102 = sphi 0, %s88
      %s106 = sphi 0, %s106
      %s108 = sphi 0, %s106
      %s109 = sphi 0, %s108
      %s123 = sphi 0, %s109
      %s127 = sphi 0, %s127
      %s129 = sphi 0, %s127
      %s130 = sphi 0, %s129
      %s144 = sphi 0, %s130
      %s148 = sphi 0, %s148
      %s150 = sphi 0, %s148
      %s151 = sphi 0, %s150
      %s165 = sphi 0, %s151
      %s169 = sphi 0, %s169
      %s171 = sphi 0, %s169
      %s172 = sphi 0, %s171
      %s186 = sphi 0, %s172
      %s190 = sphi 0, %s190
      %s192 = sphi 0, %s190
      %s193 = sphi 0, %s192
      %s207 = sphi 0, %s193
      %s211 = sphi 0, %s211
      %s213 = sphi 0, %s211
      %s214 = sphi 0, %s213
      %s228 = sphi 0, %s214
      %s232 = sphi 0, %s232
      %s234 = sphi 0, %s232
      %s235 = sphi 0, %s234
      %s249 = sphi 0, %s235
      %s253 = sphi 0, %s253
      %s255 = sphi 0, %s253
      %s256 = sphi 0, %s255
      %s270 = sphi 0, %s256
      %s274 = sphi 0, %s274
      %s276 = sphi 0, %s274
      %s277 = sphi 0, %s276
      %s291 = sphi 0, %s277
      %s295 = sphi 0, %s295
      %s297 = sphi 0, %s295
      %s298 = sphi 0, %s297
      %s312 = sphi 0, %s298
      %s316 = sphi 0, %s316
      %s318 = sphi 0, %s316
      %s319 = sphi 0, %s318
      %s333 = sphi 0, %s319
      %s337 = sphi 0, %s337
      %s339 = sphi 0, %s337
      %s340 = sphi 0, %s339
      %s354 = sphi 0, %s340
      %s358 = sphi 0, %s358
      %s360 = sphi 0, %s358
      %s361 = sphi 0, %s360
      %s375 = sphi 0, %s361
      %s379 = sphi 0, %s379
      %s381 = sphi 0, %s379
      %s382 = sphi 0, %s381
      %s396 = sphi 0, %s382
      %s400 = sphi 0, %s400
      %s402 = sphi 0, %s400
      %s403 = sphi 0, %s402
      %s417 = sphi 0, %s403
      %s421 = sphi 0, %s421
      %s423 = sphi 0, %s421
      %s424 = sphi 0, %s423
      %s438 = sphi 0, %s424
      %s442 = sphi 0, %s442
      %s444 = sphi 0, %s442
      %s445 = sphi 0, %s444
      %s459 = sphi 0, %s445
      %s463 = sphi 0, %s463
      %s465 = sphi 0, %s463
      %s466 = sphi 0, %s465
      %s480 = sphi 0, %s466
      %s486 = sphi 0, %s488
      %s489 = sphi 0, %s486
      %s490 = sphi 0, %s489
      %s506 = sphi 0, %s490
    $region4: #{bert_lstm_forward.1} parent=1 // loop_header_branch
      %33 = sbr.rel (%p31) target = $region8
    $region5: #{bert_lstm_forward.1} parent=1 // loop_body
      %s35 = ssub.s32 %s30, 1
      %s36 = ssub.s32 %s30, 2
      %s37 = sadd.s32 %s30, 1
      %s38 = ssub.s32 %s30, %s37
      %p39 = scmp.eq.s32.totalorder %s38, 0
      %s41 = sadd.s32 %s40, 1
      %s42 = scalar_select %p39, %s40, %s41
      %p45 = pneg %p39
      %p46 = scmp.eq.s32.totalorder %s30, 1
      %p47 = por %p45, %p46
      %p48 = scmp.ne.s32.totalorder %s40, %s43
      %p49 = scmp.eq.s32.totalorder %s30, 0
      %p50 = por %p48, %p49
      %p51 = scmp.ne.s32.totalorder %s40, %s43
      %p52 = scmp.eq.s32.totalorder %s35, 1
      %p53 = por %p51, %p52
      %p54 = scmp.ne.s32.totalorder %s43, %s44
      %p55 = scmp.eq.s32.totalorder %s35, 0
      %p56 = por %p54, %p55
      %p57 = scmp.ne.s32.totalorder %s43, %s44
      %p58 = scmp.eq.s32.totalorder %s36, 1
      %p59 = por %p57, %p58
      %p61 = scmp.ne.s32.totalorder %s44, %s60
      %p62 = scmp.eq.s32.totalorder %s36, 0
      %p63 = por %p61, %p62
      %s65 = sadd.s32 %s64, 1
      %p68 = scmp.eq.s32.totalorder %s30, 1
      %p69 = scmp.ne.s32.totalorder %s64, %s66
      %p70 = scmp.eq.s32.totalorder %s30, 0
      %p71 = por %p69, %p70
      %p72 = scmp.ne.s32.totalorder %s64, %s66
      %p73 = scmp.eq.s32.totalorder %s35, 1
      %p74 = por %p72, %p73
      %p75 = scmp.ne.s32.totalorder %s66, %s67
      %p76 = scmp.eq.s32.totalorder %s35, 0
      %p77 = por %p75, %p76
      %p78 = scmp.ne.s32.totalorder %s66, %s67
      %p79 = scmp.eq.s32.totalorder %s36, 1
      %p80 = por %p78, %p79
      %p82 = scmp.ne.s32.totalorder %s67, %s81
      %p83 = scmp.eq.s32.totalorder %s36, 0
      %p84 = por %p82, %p83
      %s86 = sadd.s32 %s85, 1
      %p89 = scmp.eq.s32.totalorder %s30, 1
      %p90 = scmp.ne.s32.totalorder %s85, %s87
      %p91 = scmp.eq.s32.totalorder %s30, 0
      %p92 = por %p90, %p91
      %p93 = scmp.ne.s32.totalorder %s85, %s87
      %p94 = scmp.eq.s32.totalorder %s35, 1
      %p95 = por %p93, %p94
      %p96 = scmp.ne.s32.totalorder %s87, %s88
      %p97 = scmp.eq.s32.totalorder %s35, 0
      %p98 = por %p96, %p97
      %p99 = scmp.ne.s32.totalorder %s87, %s88
      %p100 = scmp.eq.s32.totalorder %s36, 1
      %p101 = por %p99, %p100
      %p103 = scmp.ne.s32.totalorder %s88, %s102
      %p104 = scmp.eq.s32.totalorder %s36, 0
      %p105 = por %p103, %p104
      %s107 = sadd.s32 %s106, 1
      %p110 = scmp.eq.s32.totalorder %s30, 1
      %p111 = scmp.ne.s32.totalorder %s106, %s108
      %p112 = scmp.eq.s32.totalorder %s30, 0
      %p113 = por %p111, %p112
      %p114 = scmp.ne.s32.totalorder %s106, %s108
      %p115 = scmp.eq.s32.totalorder %s35, 1
      %p116 = por %p114, %p115
      %p117 = scmp.ne.s32.totalorder %s108, %s109
      %p118 = scmp.eq.s32.totalorder %s35, 0
      %p119 = por %p117, %p118
      %p120 = scmp.ne.s32.totalorder %s108, %s109
      %p121 = scmp.eq.s32.totalorder %s36, 1
      %p122 = por %p120, %p121
      %p124 = scmp.ne.s32.totalorder %s109, %s123
      %p125 = scmp.eq.s32.totalorder %s36, 0
      %p126 = por %p124, %p125
      %s128 = sadd.s32 %s127, 1
      %p131 = scmp.eq.s32.totalorder %s30, 1
      %p132 = scmp.ne.s32.totalorder %s127, %s129
      %p133 = scmp.eq.s32.totalorder %s30, 0
      %p134 = por %p132, %p133
      %p135 = scmp.ne.s32.totalorder %s127, %s129
      %p136 = scmp.eq.s32.totalorder %s35, 1
      %p137 = por %p135, %p136
      %p138 = scmp.ne.s32.totalorder %s129, %s130
      %p139 = scmp.eq.s32.totalorder %s35, 0
      %p140 = por %p138, %p139
      %p141 = scmp.ne.s32.totalorder %s129, %s130
      %p142 = scmp.eq.s32.totalorder %s36, 1
      %p143 = por %p141, %p142
      %p145 = scmp.ne.s32.totalorder %s130, %s144
      %p146 = scmp.eq.s32.totalorder %s36, 0
      %p147 = por %p145, %p146
      %s149 = sadd.s32 %s148, 1
      %p152 = scmp.eq.s32.totalorder %s30, 1
      %p153 = scmp.ne.s32.totalorder %s148, %s150
      %p154 = scmp.eq.s32.totalorder %s30, 0
      %p155 = por %p153, %p154
      %p156 = scmp.ne.s32.totalorder %s148, %s150
      %p157 = scmp.eq.s32.totalorder %s35, 1
      %p158 = por %p156, %p157
      %p159 = scmp.ne.s32.totalorder %s150, %s151
      %p160 = scmp.eq.s32.totalorder %s35, 0
      %p161 = por %p159, %p160
      %p162 = scmp.ne.s32.totalorder %s150, %s151
      %p163 = scmp.eq.s32.totalorder %s36, 1
      %p164 = por %p162, %p163
      %p166 = scmp.ne.s32.totalorder %s151, %s165
      %p167 = scmp.eq.s32.totalorder %s36, 0
      %p168 = por %p166, %p167
      %s170 = sadd.s32 %s169, 1
      %p173 = scmp.eq.s32.totalorder %s30, 1
      %p174 = scmp.ne.s32.totalorder %s169, %s171
      %p175 = scmp.eq.s32.totalorder %s30, 0
      %p176 = por %p174, %p175
      %p177 = scmp.ne.s32.totalorder %s169, %s171
      %p178 = scmp.eq.s32.totalorder %s35, 1
      %p179 = por %p177, %p178
      %p180 = scmp.ne.s32.totalorder %s171, %s172
      %p181 = scmp.eq.s32.totalorder %s35, 0
      %p182 = por %p180, %p181
      %p183 = scmp.ne.s32.totalorder %s171, %s172
      %p184 = scmp.eq.s32.totalorder %s36, 1
      %p185 = por %p183, %p184
      %p187 = scmp.ne.s32.totalorder %s172, %s186
      %p188 = scmp.eq.s32.totalorder %s36, 0
      %p189 = por %p187, %p188
      %s191 = sadd.s32 %s190, 1
      %p194 = scmp.eq.s32.totalorder %s30, 1
      %p195 = scmp.ne.s32.totalorder %s190, %s192
      %p196 = scmp.eq.s32.totalorder %s30, 0
      %p197 = por %p195, %p196
      %p198 = scmp.ne.s32.totalorder %s190, %s192
      %p199 = scmp.eq.s32.totalorder %s35, 1
      %p200 = por %p198, %p199
      %p201 = scmp.ne.s32.totalorder %s192, %s193
      %p202 = scmp.eq.s32.totalorder %s35, 0
      %p203 = por %p201, %p202
      %p204 = scmp.ne.s32.totalorder %s192, %s193
      %p205 = scmp.eq.s32.totalorder %s36, 1
      %p206 = por %p204, %p205
      %p208 = scmp.ne.s32.totalorder %s193, %s207
      %p209 = scmp.eq.s32.totalorder %s36, 0
      %p210 = por %p208, %p209
      %s212 = sadd.s32 %s211, 1
      %p215 = scmp.eq.s32.totalorder %s30, 1
      %p216 = scmp.ne.s32.totalorder %s211, %s213
      %p217 = scmp.eq.s32.totalorder %s30, 0
      %p218 = por %p216, %p217
      %p219 = scmp.ne.s32.totalorder %s211, %s213
      %p220 = scmp.eq.s32.totalorder %s35, 1
      %p221 = por %p219, %p220
      %p222 = scmp.ne.s32.totalorder %s213, %s214
      %p223 = scmp.eq.s32.totalorder %s35, 0
      %p224 = por %p222, %p223
      %p225 = scmp.ne.s32.totalorder %s213, %s214
      %p226 = scmp.eq.s32.totalorder %s36, 1
      %p227 = por %p225, %p226
      %p229 = scmp.ne.s32.totalorder %s214, %s228
      %p230 = scmp.eq.s32.totalorder %s36, 0
      %p231 = por %p229, %p230
      %s233 = sadd.s32 %s232, 1
      %p236 = scmp.eq.s32.totalorder %s30, 1
      %p237 = scmp.ne.s32.totalorder %s232, %s234
      %p238 = scmp.eq.s32.totalorder %s30, 0
      %p239 = por %p237, %p238
      %p240 = scmp.ne.s32.totalorder %s232, %s234
      %p241 = scmp.eq.s32.totalorder %s35, 1
      %p242 = por %p240, %p241
      %p243 = scmp.ne.s32.totalorder %s234, %s235
      %p244 = scmp.eq.s32.totalorder %s35, 0
      %p245 = por %p243, %p244
      %p246 = scmp.ne.s32.totalorder %s234, %s235
      %p247 = scmp.eq.s32.totalorder %s36, 1
      %p248 = por %p246, %p247
      %p250 = scmp.ne.s32.totalorder %s235, %s249
      %p251 = scmp.eq.s32.totalorder %s36, 0
      %p252 = por %p250, %p251
      %s254 = sadd.s32 %s253, 1
      %p257 = scmp.eq.s32.totalorder %s30, 1
      %p258 = scmp.ne.s32.totalorder %s253, %s255
      %p259 = scmp.eq.s32.totalorder %s30, 0
      %p260 = por %p258, %p259
      %p261 = scmp.ne.s32.totalorder %s253, %s255
      %p262 = scmp.eq.s32.totalorder %s35, 1
      %p263 = por %p261, %p262
      %p264 = scmp.ne.s32.totalorder %s255, %s256
      %p265 = scmp.eq.s32.totalorder %s35, 0
      %p266 = por %p264, %p265
      %p267 = scmp.ne.s32.totalorder %s255, %s256
      %p268 = scmp.eq.s32.totalorder %s36, 1
      %p269 = por %p267, %p268
      %p271 = scmp.ne.s32.totalorder %s256, %s270
      %p272 = scmp.eq.s32.totalorder %s36, 0
      %p273 = por %p271, %p272
      %s275 = sadd.s32 %s274, 1
      %p278 = scmp.eq.s32.totalorder %s30, 1
      %p279 = scmp.ne.s32.totalorder %s274, %s276
      %p280 = scmp.eq.s32.totalorder %s30, 0
      %p281 = por %p279, %p280
      %p282 = scmp.ne.s32.totalorder %s274, %s276
      %p283 = scmp.eq.s32.totalorder %s35, 1
      %p284 = por %p282, %p283
      %p285 = scmp.ne.s32.totalorder %s276, %s277
      %p286 = scmp.eq.s32.totalorder %s35, 0
      %p287 = por %p285, %p286
      %p288 = scmp.ne.s32.totalorder %s276, %s277
      %p289 = scmp.eq.s32.totalorder %s36, 1
      %p290 = por %p288, %p289
      %p292 = scmp.ne.s32.totalorder %s277, %s291
      %p293 = scmp.eq.s32.totalorder %s36, 0
      %p294 = por %p292, %p293
      %s296 = sadd.s32 %s295, 1
      %p299 = scmp.eq.s32.totalorder %s30, 1
      %p300 = scmp.ne.s32.totalorder %s295, %s297
      %p301 = scmp.eq.s32.totalorder %s30, 0
      %p302 = por %p300, %p301
      %p303 = scmp.ne.s32.totalorder %s295, %s297
      %p304 = scmp.eq.s32.totalorder %s35, 1
      %p305 = por %p303, %p304
      %p306 = scmp.ne.s32.totalorder %s297, %s298
      %p307 = scmp.eq.s32.totalorder %s35, 0
      %p308 = por %p306, %p307
      %p309 = scmp.ne.s32.totalorder %s297, %s298
      %p310 = scmp.eq.s32.totalorder %s36, 1
      %p311 = por %p309, %p310
      %p313 = scmp.ne.s32.totalorder %s298, %s312
      %p314 = scmp.eq.s32.totalorder %s36, 0
      %p315 = por %p313, %p314
      %s317 = sadd.s32 %s316, 1
      %p320 = scmp.eq.s32.totalorder %s30, 1
      %p321 = scmp.ne.s32.totalorder %s316, %s318
      %p322 = scmp.eq.s32.totalorder %s30, 0
      %p323 = por %p321, %p322
      %p324 = scmp.ne.s32.totalorder %s316, %s318
      %p325 = scmp.eq.s32.totalorder %s35, 1
      %p326 = por %p324, %p325
      %p327 = scmp.ne.s32.totalorder %s318, %s319
      %p328 = scmp.eq.s32.totalorder %s35, 0
      %p329 = por %p327, %p328
      %p330 = scmp.ne.s32.totalorder %s318, %s319
      %p331 = scmp.eq.s32.totalorder %s36, 1
      %p332 = por %p330, %p331
      %p334 = scmp.ne.s32.totalorder %s319, %s333
      %p335 = scmp.eq.s32.totalorder %s36, 0
      %p336 = por %p334, %p335
      %s338 = sadd.s32 %s337, 1
      %p341 = scmp.eq.s32.totalorder %s30, 1
      %p342 = scmp.ne.s32.totalorder %s337, %s339
      %p343 = scmp.eq.s32.totalorder %s30, 0
      %p344 = por %p342, %p343
      %p345 = scmp.ne.s32.totalorder %s337, %s339
      %p346 = scmp.eq.s32.totalorder %s35, 1
      %p347 = por %p345, %p346
      %p348 = scmp.ne.s32.totalorder %s339, %s340
      %p349 = scmp.eq.s32.totalorder %s35, 0
      %p350 = por %p348, %p349
      %p351 = scmp.ne.s32.totalorder %s339, %s340
      %p352 = scmp.eq.s32.totalorder %s36, 1
      %p353 = por %p351, %p352
      %p355 = scmp.ne.s32.totalorder %s340, %s354
      %p356 = scmp.eq.s32.totalorder %s36, 0
      %p357 = por %p355, %p356
      %s359 = sadd.s32 %s358, 1
      %p362 = scmp.eq.s32.totalorder %s30, 1
      %p363 = scmp.ne.s32.totalorder %s358, %s360
      %p364 = scmp.eq.s32.totalorder %s30, 0
      %p365 = por %p363, %p364
      %p366 = scmp.ne.s32.totalorder %s358, %s360
      %p367 = scmp.eq.s32.totalorder %s35, 1
      %p368 = por %p366, %p367
      %p369 = scmp.ne.s32.totalorder %s360, %s361
      %p370 = scmp.eq.s32.totalorder %s35, 0
      %p371 = por %p369, %p370
      %p372 = scmp.ne.s32.totalorder %s360, %s361
      %p373 = scmp.eq.s32.totalorder %s36, 1
      %p374 = por %p372, %p373
      %p376 = scmp.ne.s32.totalorder %s361, %s375
      %p377 = scmp.eq.s32.totalorder %s36, 0
      %p378 = por %p376, %p377
      %s380 = sadd.s32 %s379, 1
      %p383 = scmp.eq.s32.totalorder %s30, 1
      %p384 = scmp.ne.s32.totalorder %s379, %s381
      %p385 = scmp.eq.s32.totalorder %s30, 0
      %p386 = por %p384, %p385
      %p387 = scmp.ne.s32.totalorder %s379, %s381
      %p388 = scmp.eq.s32.totalorder %s35, 1
      %p389 = por %p387, %p388
      %p390 = scmp.ne.s32.totalorder %s381, %s382
      %p391 = scmp.eq.s32.totalorder %s35, 0
      %p392 = por %p390, %p391
      %p393 = scmp.ne.s32.totalorder %s381, %s382
      %p394 = scmp.eq.s32.totalorder %s36, 1
      %p395 = por %p393, %p394
      %p397 = scmp.ne.s32.totalorder %s382, %s396
      %p398 = scmp.eq.s32.totalorder %s36, 0
      %p399 = por %p397, %p398
      %s401 = sadd.s32 %s400, 1
      %p404 = scmp.eq.s32.totalorder %s30, 1
      %p405 = scmp.ne.s32.totalorder %s400, %s402
      %p406 = scmp.eq.s32.totalorder %s30, 0
      %p407 = por %p405, %p406
      %p408 = scmp.ne.s32.totalorder %s400, %s402
      %p409 = scmp.eq.s32.totalorder %s35, 1
      %p410 = por %p408, %p409
      %p411 = scmp.ne.s32.totalorder %s402, %s403
      %p412 = scmp.eq.s32.totalorder %s35, 0
      %p413 = por %p411, %p412
      %p414 = scmp.ne.s32.totalorder %s402, %s403
      %p415 = scmp.eq.s32.totalorder %s36, 1
      %p416 = por %p414, %p415
      %p418 = scmp.ne.s32.totalorder %s403, %s417
      %p419 = scmp.eq.s32.totalorder %s36, 0
      %p420 = por %p418, %p419
      %s422 = sadd.s32 %s421, 1
      %p425 = scmp.eq.s32.totalorder %s30, 1
      %p426 = scmp.ne.s32.totalorder %s421, %s423
      %p427 = scmp.eq.s32.totalorder %s30, 0
      %p428 = por %p426, %p427
      %p429 = scmp.ne.s32.totalorder %s421, %s423
      %p430 = scmp.eq.s32.totalorder %s35, 1
      %p431 = por %p429, %p430
      %p432 = scmp.ne.s32.totalorder %s423, %s424
      %p433 = scmp.eq.s32.totalorder %s35, 0
      %p434 = por %p432, %p433
      %p435 = scmp.ne.s32.totalorder %s423, %s424
      %p436 = scmp.eq.s32.totalorder %s36, 1
      %p437 = por %p435, %p436
      %p439 = scmp.ne.s32.totalorder %s424, %s438
      %p440 = scmp.eq.s32.totalorder %s36, 0
      %p441 = por %p439, %p440
      %s443 = sadd.s32 %s442, 1
      %p446 = scmp.eq.s32.totalorder %s30, 1
      %p447 = scmp.ne.s32.totalorder %s442, %s444
      %p448 = scmp.eq.s32.totalorder %s30, 0
      %p449 = por %p447, %p448
      %p450 = scmp.ne.s32.totalorder %s442, %s444
      %p451 = scmp.eq.s32.totalorder %s35, 1
      %p452 = por %p450, %p451
      %p453 = scmp.ne.s32.totalorder %s444, %s445
      %p454 = scmp.eq.s32.totalorder %s35, 0
      %p455 = por %p453, %p454
      %p456 = scmp.ne.s32.totalorder %s444, %s445
      %p457 = scmp.eq.s32.totalorder %s36, 1
      %p458 = por %p456, %p457
      %p460 = scmp.ne.s32.totalorder %s445, %s459
      %p461 = scmp.eq.s32.totalorder %s36, 0
      %p462 = por %p460, %p461
      %s464 = sadd.s32 %s463, 1
      %p467 = scmp.eq.s32.totalorder %s30, 1
      %p468 = scmp.ne.s32.totalorder %s463, %s465
      %p469 = scmp.eq.s32.totalorder %s30, 0
      %p470 = por %p468, %p469
      %p471 = scmp.ne.s32.totalorder %s463, %s465
      %p472 = scmp.eq.s32.totalorder %s35, 1
      %p473 = por %p471, %p472
      %p474 = scmp.ne.s32.totalorder %s465, %s466
      %p475 = scmp.eq.s32.totalorder %s35, 0
      %p476 = por %p474, %p475
      %p477 = scmp.ne.s32.totalorder %s465, %s466
      %p478 = scmp.eq.s32.totalorder %s36, 1
      %p479 = por %p477, %p478
      %p481 = scmp.ne.s32.totalorder %s466, %s480
      %p482 = scmp.eq.s32.totalorder %s36, 0
      %p483 = por %p481, %p482
      %s484 = ssub.s32 %s30, %s37
      %p485 = scmp.eq.s32.totalorder %s484, 0
      %s487 = sadd.s32 %s486, 1
      %s488 = scalar_select %p485, %s486, %s487
      %p491 = pneg %p485
      %p492 = scmp.eq.s32.totalorder %s30, 1
      %p493 = por %p491, %p492
      %p494 = scmp.ne.s32.totalorder %s486, %s489
      %p495 = scmp.eq.s32.totalorder %s30, 0
      %p496 = por %p494, %p495
      %p497 = scmp.ne.s32.totalorder %s486, %s489
      %p498 = scmp.eq.s32.totalorder %s35, 1
      %p499 = por %p497, %p498
      %p500 = scmp.ne.s32.totalorder %s489, %s490
      %p501 = scmp.eq.s32.totalorder %s35, 0
      %p502 = por %p500, %p501
      %p503 = scmp.ne.s32.totalorder %s489, %s490
      %p504 = scmp.eq.s32.totalorder %s36, 1
      %p505 = por %p503, %p504
      %p507 = scmp.ne.s32.totalorder %s490, %s506
      %p508 = scmp.eq.s32.totalorder %s36, 0
      %p509 = por %p507, %p508
      %p510 = scmp.le.s32.totalorder 1, %s30
      %p511 = scmp.lt.s32.totalorder %s30, 3
      %p512 = pnand %p510, %p511
      %p513 = pneg %p512
      // Predicated region
      $region9: #{bert_lstm_forward.1} parent=5 // pred_check
        _
      $region10: #{bert_lstm_forward.1} parent=5 // pred_check_branch
        %515 = sbr.rel (%p512) target = $region12
      $region11: #{bert_lstm_forward.1} parent=5 // pred_region
        %s516 = ssub.s32 %s30, 1
        // Predicated region
        $region13: #{bert_lstm_forward.1} parent=11 // pred_check
          %p517 = pneg %p77
        $region14: #{bert_lstm_forward.1} parent=11 // pred_check_branch
          %519 = sbr.rel (%p517) target = $region16
        $region15: #{bert_lstm_forward.1} parent=11 // pred_region
          _
        $region16: #{bert_lstm_forward.1} parent=11 // pred_fallthru
          _
        // Predicated region
        $region17: #{bert_lstm_forward.1} parent=11 // pred_check
          %p520 = pneg %p98
        $region18: #{bert_lstm_forward.1} parent=11 // pred_check_branch
          %522 = sbr.rel (%p520) target = $region20
        $region19: #{bert_lstm_forward.1} parent=11 // pred_region
          _
        $region20: #{bert_lstm_forward.1} parent=11 // pred_fallthru
          _
        // Predicated region
        $region21: #{bert_lstm_forward.1} parent=11 // pred_check
          %p523 = pneg %p119
        $region22: #{bert_lstm_forward.1} parent=11 // pred_check_branch
          %525 = sbr.rel (%p523) target = $region24
        $region23: #{bert_lstm_forward.1} parent=11 // pred_region
          _
        $region24: #{bert_lstm_forward.1} parent=11 // pred_fallthru
          _
        // Predicated region
        $region25: #{bert_lstm_forward.1} parent=11 // pred_check
          %p526 = pneg %p140
        $region26: #{bert_lstm_forward.1} parent=11 // pred_check_branch
          %528 = sbr.rel (%p526) target = $region28
        $region27: #{bert_lstm_forward.1} parent=11 // pred_region
          _
        $region28: #{bert_lstm_forward.1} parent=11 // pred_fallthru
          _
        // Predicated region
        $region29: #{bert_lstm_forward.1} parent=11 // pred_check
          %p529 = pneg %p161
        $region30: #{bert_lstm_forward.1} parent=11 // pred_check_branch
          %531 = sbr.rel (%p529) target = $region32
        $region31: #{bert_lstm_forward.1} parent=11 // pred_region
          _
        $region32: #{bert_lstm_forward.1} parent=11 // pred_fallthru
          _
        // Predicated region
        $region33: #{bert_lstm_forward.1} parent=11 // pred_check
          %p532 = pneg %p182
        $region34: #{bert_lstm_forward.1} parent=11 // pred_check_branch
          %534 = sbr.rel (%p532) target = $region36
        $region35: #{bert_lstm_forward.1} parent=11 // pred_region
          _
        $region36: #{bert_lstm_forward.1} parent=11 // pred_fallthru
          _
        // Predicated region
        $region37: #{bert_lstm_forward.1} parent=11 // pred_check
          %p535 = pneg %p203
        $region38: #{bert_lstm_forward.1} parent=11 // pred_check_branch
          %537 = sbr.rel (%p535) target = $region40
        $region39: #{bert_lstm_forward.1} parent=11 // pred_region
          _
        $region40: #{bert_lstm_forward.1} parent=11 // pred_fallthru
          _
        // Predicated region
        $region41: #{bert_lstm_forward.1} parent=11 // pred_check
          %p538 = pneg %p224
        $region42: #{bert_lstm_forward.1} parent=11 // pred_check_branch
          %540 = sbr.rel (%p538) target = $region44
        $region43: #{bert_lstm_forward.1} parent=11 // pred_region
          _
        $region44: #{bert_lstm_forward.1} parent=11 // pred_fallthru
          _
        // Predicated region
        $region45: #{bert_lstm_forward.1} parent=11 // pred_check
          %p541 = pneg %p245
        $region46: #{bert_lstm_forward.1} parent=11 // pred_check_branch
          %543 = sbr.rel (%p541) target = $region48
        $region47: #{bert_lstm_forward.1} parent=11 // pred_region
          _
        $region48: #{bert_lstm_forward.1} parent=11 // pred_fallthru
          _
        // Predicated region
        $region49: #{bert_lstm_forward.1} parent=11 // pred_check
          %p544 = pneg %p266
        $region50: #{bert_lstm_forward.1} parent=11 // pred_check_branch
          %546 = sbr.rel (%p544) target = $region52
        $region51: #{bert_lstm_forward.1} parent=11 // pred_region
          _
        $region52: #{bert_lstm_forward.1} parent=11 // pred_fallthru
          _
        // Predicated region
        $region53: #{bert_lstm_forward.1} parent=11 // pred_check
          %p547 = pneg %p287
        $region54: #{bert_lstm_forward.1} parent=11 // pred_check_branch
          %549 = sbr.rel (%p547) target = $region56
        $region55: #{bert_lstm_forward.1} parent=11 // pred_region
          _
        $region56: #{bert_lstm_forward.1} parent=11 // pred_fallthru
          _
        // Predicated region
        $region57: #{bert_lstm_forward.1} parent=11 // pred_check
          %p550 = pneg %p308
        $region58: #{bert_lstm_forward.1} parent=11 // pred_check_branch
          %552 = sbr.rel (%p550) target = $region60
        $region59: #{bert_lstm_forward.1} parent=11 // pred_region
          _
        $region60: #{bert_lstm_forward.1} parent=11 // pred_fallthru
          _
        // Predicated region
        $region61: #{bert_lstm_forward.1} parent=11 // pred_check
          %p553 = pneg %p329
        $region62: #{bert_lstm_forward.1} parent=11 // pred_check_branch
          %555 = sbr.rel (%p553) target = $region64
        $region63: #{bert_lstm_forward.1} parent=11 // pred_region
          _
        $region64: #{bert_lstm_forward.1} parent=11 // pred_fallthru
          _
        // Predicated region
        $region65: #{bert_lstm_forward.1} parent=11 // pred_check
          %p556 = pneg %p350
        $region66: #{bert_lstm_forward.1} parent=11 // pred_check_branch
          %558 = sbr.rel (%p556) target = $region68
        $region67: #{bert_lstm_forward.1} parent=11 // pred_region
          _
        $region68: #{bert_lstm_forward.1} parent=11 // pred_fallthru
          _
        // Predicated region
        $region69: #{bert_lstm_forward.1} parent=11 // pred_check
          %p559 = pneg %p371
        $region70: #{bert_lstm_forward.1} parent=11 // pred_check_branch
          %561 = sbr.rel (%p559) target = $region72
        $region71: #{bert_lstm_forward.1} parent=11 // pred_region
          _
        $region72: #{bert_lstm_forward.1} parent=11 // pred_fallthru
          _
        // Predicated region
        $region73: #{bert_lstm_forward.1} parent=11 // pred_check
          %p562 = pneg %p392
        $region74: #{bert_lstm_forward.1} parent=11 // pred_check_branch
          %564 = sbr.rel (%p562) target = $region76
        $region75: #{bert_lstm_forward.1} parent=11 // pred_region
          _
        $region76: #{bert_lstm_forward.1} parent=11 // pred_fallthru
          _
        // Predicated region
        $region77: #{bert_lstm_forward.1} parent=11 // pred_check
          %p565 = pneg %p413
        $region78: #{bert_lstm_forward.1} parent=11 // pred_check_branch
          %567 = sbr.rel (%p565) target = $region80
        $region79: #{bert_lstm_forward.1} parent=11 // pred_region
          _
        $region80: #{bert_lstm_forward.1} parent=11 // pred_fallthru
          _
        // Predicated region
        $region81: #{bert_lstm_forward.1} parent=11 // pred_check
          %p568 = pneg %p434
        $region82: #{bert_lstm_forward.1} parent=11 // pred_check_branch
          %570 = sbr.rel (%p568) target = $region84
        $region83: #{bert_lstm_forward.1} parent=11 // pred_region
          _
        $region84: #{bert_lstm_forward.1} parent=11 // pred_fallthru
          _
        // Predicated region
        $region85: #{bert_lstm_forward.1} parent=11 // pred_check
          %p571 = pneg %p455
        $region86: #{bert_lstm_forward.1} parent=11 // pred_check_branch
          %573 = sbr.rel (%p571) target = $region88
        $region87: #{bert_lstm_forward.1} parent=11 // pred_region
          _
        $region88: #{bert_lstm_forward.1} parent=11 // pred_fallthru
          _
        // Predicated region
        $region89: #{bert_lstm_forward.1} parent=11 // pred_check
          %p574 = pneg %p476
        $region90: #{bert_lstm_forward.1} parent=11 // pred_check_branch
          %576 = sbr.rel (%p574) target = $region92
        $region91: #{bert_lstm_forward.1} parent=11 // pred_region
          _
        $region92: #{bert_lstm_forward.1} parent=11 // pred_fallthru
          _
      $region12: #{bert_lstm_forward.1} parent=5 // pred_fallthru
        _
      %p577 = scmp.lt.s32.totalorder %s30, 2
      // Predicated region
      $region93: #{bert_lstm_forward.1} parent=5 // pred_check
        %p578 = pneg %p577
      $region94: #{bert_lstm_forward.1} parent=5 // pred_check_branch
        %580 = sbr.rel (%p578) target = $region96
      $region95: #{bert_lstm_forward.1} parent=5 // pred_region
        // Predicated region
        $region97: #{bert_lstm_forward.1} parent=95 // pred_check
          %p581 = pneg %p50
        $region98: #{bert_lstm_forward.1} parent=95 // pred_check_branch
          %583 = sbr.rel (%p581) target = $region100
        $region99: #{bert_lstm_forward.1} parent=95 // pred_region
          %p584 = scmp.lt.s32.totalorder %s30, 1
          %s585 = scalar_select %p584, %s30, 1
          %s586 = smul.addr %s585, 8
          %s587 = scalar_lea.vmem %s0, %s586
        $region100: #{bert_lstm_forward.1} parent=95 // pred_fallthru
          _
      $region96: #{bert_lstm_forward.1} parent=5 // pred_fallthru
        _
      %p588 = scmp.le.s32.totalorder 1, %s30
      %p589 = scmp.lt.s32.totalorder %s30, 3
      %p590 = pnand %p588, %p589
      %p591 = pneg %p590
      // Predicated region
      $region101: #{bert_lstm_forward.1} parent=5 // pred_check
        _
      $region102: #{bert_lstm_forward.1} parent=5 // pred_check_branch
        %593 = sbr.rel (%p590) target = $region104
      $region103: #{bert_lstm_forward.1} parent=5 // pred_region
        %s594 = ssub.s32 %s30, 1
        %p595 = scmp.lt.s32.totalorder %s35, 1
        %s596 = scalar_select %p595, %s35, 1
        %s597 = smul.addr %s596, 8
        %s598 = scalar_lea.vmem %s0, %s597
        %p599 = pneg %p56
        %p600 = pneg %p53
        %p601 = pneg %p77
        %p602 = pneg %p74
        %p603 = pneg %p98
        %p604 = pneg %p95
        %p605 = pneg %p119
        %p606 = pneg %p116
        %p607 = pneg %p140
        %p608 = pneg %p137
        %p609 = pneg %p161
        %p610 = pneg %p158
        %p611 = pneg %p182
        %p612 = pneg %p179
        %p613 = pneg %p203
        %p614 = pneg %p200
        %p615 = pneg %p224
        %p616 = pneg %p221
        %p617 = pneg %p245
        %p618 = pneg %p242
        %p619 = pneg %p266
        %p620 = pneg %p263
        %p621 = pneg %p287
        %p622 = pneg %p284
        %p623 = pneg %p308
        %p624 = pneg %p305
        %p625 = pneg %p329
        %p626 = pneg %p326
        %p627 = pneg %p350
        %p628 = pneg %p347
        %p629 = pneg %p371
        %p630 = pneg %p368
        %p631 = pneg %p392
        %p632 = pneg %p389
        %p633 = pneg %p413
        %p634 = pneg %p410
        %p635 = pneg %p434
        %p636 = pneg %p431
        %p637 = pneg %p455
        %p638 = pneg %p452
        %p639 = pneg %p476
        %p640 = pneg %p473
        %p641 = pneg %p502
        %p642 = pneg %p499
        %s643 = sand.u32 %s489, 1
        %s644 = scalar_lea.sflag [#allocation3], %s643
        %s645 = sand.u32 %s489, 1
        %s646 = smul.addr %s645, 8
        %s647 = scalar_lea.vmem [#allocation2], %s646
        %p648 = scmp.lt.s32.totalorder %s35, 1
        %s649 = scalar_select %p648, %s35, 1
        %s650 = smul.addr %s649, 8
        %s651 = scalar_lea.vmem %s0, %s650
        %v652 = vld [vmem:[%s651] sm:$0xff]
        %v653 = vlaneseq
        %v654 = vand.u32 %v653, 127
        %655 = vset.pattern.permute.xlu0 0
        %656 = vperm.xlu0 %655, %v652
        %v657 = vpop.permute.xlu0 %656
        %vm658 = vcmp.eq.s32.totalorder %v657, %v654
        %v659 = vsel %vm658, 1, 0
        %v660 = vcvt.s32.f32 %v659
        %v661 = vld [vmem:[%s1] sm:$0xff]
        %v662 = vld [vmem:[%s1 + $0x8] sm:$0xff]
        %v663 = vld [vmem:[%s1 + $0x10] sm:$0xff]
        %v664 = vld [vmem:[%s1 + $0x18] sm:$0xff]
        %v665 = vld [vmem:[%s1 + $0x20] sm:$0xff]
        %v666 = vld [vmem:[%s1 + $0x28] sm:$0xff]
        %v667 = vld [vmem:[%s1 + $0x30] sm:$0xff]
        %v668 = vld [vmem:[%s1 + $0x38] sm:$0xff]
        %v669 = vld [vmem:[%s1 + $0x40] sm:$0xff]
        %v670 = vld [vmem:[%s1 + $0x48] sm:$0xff]
        %v671 = vld [vmem:[%s1 + $0x50] sm:$0xff]
        %v672 = vld [vmem:[%s1 + $0x58] sm:$0xff]
        %v673 = vld [vmem:[%s1 + $0x60] sm:$0xff]
        %v674 = vld [vmem:[%s1 + $0x68] sm:$0xff]
        %v675 = vld [vmem:[%s1 + $0x70] sm:$0xff]
        %v676 = vld [vmem:[%s1 + $0x78] sm:$0xff]
        %v677 = vld [vmem:[%s2] sm:$0xff]
        %678 = vmatprep.subr.mxu0 0.0
        %679 = vmatpush1.msra.mxu0 %v676
        %680 = vmatprep.subr.mxu0 0.0
        %681 = vmatpush1.msra.mxu0 %v675
        %682 = vmatprep.subr.mxu0 0.0
        %683 = vmatpush1.msra.mxu0 %v674
        %684 = vmatprep.subr.mxu0 0.0
        %685 = vmatpush1.msra.mxu0 %v673
        %686 = vmatprep.subr.mxu0 0.0
        %687 = vmatpush1.msra.mxu0 %v672
        %688 = vmatprep.subr.mxu0 0.0
        %689 = vmatpush1.msra.mxu0 %v671
        %690 = vmatprep.subr.mxu0 0.0
        %691 = vmatpush1.msra.mxu0 %v670
        %692 = vmatprep.subr.mxu0 0.0
        %693 = vmatpush1.msra.mxu0 %v669
        %694 = vmatprep.subr.mxu0 0.0
        %695 = vmatpush1.msra.mxu0 %v668
        %696 = vmatprep.subr.mxu0 0.0
        %697 = vmatpush1.msra.mxu0 %v667
        %698 = vmatprep.subr.mxu0 0.0
        %699 = vmatpush1.msra.mxu0 %v666
        %700 = vmatprep.subr.mxu0 0.0
        %701 = vmatpush1.msra.mxu0 %v665
        %702 = vmatprep.subr.mxu0 0.0
        %703 = vmatpush1.msra.mxu0 %v664
        %704 = vmatprep.subr.mxu0 0.0
        %705 = vmatpush1.msra.mxu0 %v663
        %706 = vmatprep.subr.mxu0 0.0
        %707 = vmatpush1.msra.mxu0 %v662
        %708 = vmatprep.subr.mxu0 0.0
        %709 = vmatpush1.msra.mxu0 %v661
        %710 = vmatprep.subr.mxu0 0.0
        %711 = vmatpush2.msra.mxu0 0.0
        %712 = vmatprep.subr.mxu0 0.0
        %713 = vmatpush2.msra.mxu0 0.0
        %714 = vmatprep.subr.mxu0 0.0
        %715 = vmatpush2.msra.mxu0 0.0
        %716 = vmatprep.subr.mxu0 0.0
        %717 = vmatpush2.msra.mxu0 0.0
        %718 = vmatprep.subr.mxu0 0.0
        %719 = vmatpush2.msra.mxu0 0.0
        %720 = vmatprep.subr.mxu0 0.0
        %721 = vmatpush2.msra.mxu0 0.0
        %722 = vmatprep.subr.mxu0 0.0
        %723 = vmatpush2.msra.mxu0 0.0
        %724 = vmatprep.subr.mxu0 0.0
        %725 = vmatpush2.msra.mxu0 0.0
        %726 = vmatprep.subr.mxu0 0.0
        %727 = vmatpush2.msra.mxu0 0.0
        %728 = vmatprep.subr.mxu0 0.0
        %729 = vmatpush2.msra.mxu0 0.0
        %730 = vmatprep.subr.mxu0 0.0
        %731 = vmatpush2.msra.mxu0 0.0
        %732 = vmatprep.subr.mxu0 0.0
        %733 = vmatpush2.msra.mxu0 0.0
        %734 = vmatprep.subr.mxu0 0.0
        %735 = vmatpush2.msra.mxu0 0.0
        %736 = vmatprep.subr.mxu0 0.0
        %737 = vmatpush2.msra.mxu0 0.0
        %738 = vmatprep.subr.mxu0 0.0
        %739 = vmatpush2.msra.mxu0 0.0
        %740 = vmatprep.subr.mxu0 0.0
        %741 = vmatpush2.msra.mxu0 0.0
        %742 = vmatprep.mubr.f32.mxu0 0.0
        %743 = vmatmul.mubr.f32.gmra.mxu0 %v660
        %v744 = vpop.f32.mrf.mxu0
        %v745 = vadd.f32 %v677, %v744
        %v746 = vpop.f32.mrf.mxu0
        %747 = vdwg.mxu0
        %v748 = vld [vmem:[%s3] sm:$0x1]
        %v749 = vlaneseq
        %v750 = vshrl.u32 %v749, 7
        %v751 = vsub.s32 0, %v750
        %v752 = vrot.slane %v748, %v751
        %v753 = vadd.f32 %v745, %v752
        %v754 = vld [vmem:[%s4] sm:$0x1]
        %v755 = vld [vmem:[%s5] sm:$0x1]
        %vm756 = vcmask 261120
        %v757 = vsel %vm756, %v753, 0.0
        %758 = vadd.xlane.f32.xlu0 %v757
        %v759 = vpop.xlane.xlu0 %758
        %v760 = vrcp.pop 32.0
        %v761 = vmul.f32 %v759, %v760
        %v762 = vsub.f32 %v753, %v761
        %v763 = vmul.f32 %v762, %v762
        %v764 = vsel %vm756, %v763, 0.0
        %765 = vadd.xlane.f32.xlu0 %v764
        %v766 = vpop.xlane.xlu0 %765
        %v767 = vmul.f32 %v766, %v760
        %v768 = vadd.f32 %v767, 1e-12
        %v769 = vrsqrt.pop %v768
        %v770 = vmul.f32 %v762, %v769
        %v772 = vlaneseq
        %v773 = vshrl.u32 %v772, 7
        %v774 = vsub.s32 0, %v773
        %v775 = vrot.slane %v754, %v774
        %v777 = vmul.f32 %v770, %v775
        %v779 = vlaneseq
        %v780 = vshrl.u32 %v779, 7
        %v781 = vsub.s32 0, %v780
        %v782 = vrot.slane %v755, %v781
        %v784 = vadd.f32 %v777, %v782
        %v785 = vld [vmem:[%s6] sm:$0xff]
        %v786 = vld [vmem:[%s6 + $0x8] sm:$0xff]
        %v787 = vld [vmem:[%s6 + $0x10] sm:$0xff]
        %v788 = vld [vmem:[%s6 + $0x18] sm:$0xff]
        %v789 = vld [vmem:[%s7] sm:$0x1]
        %v791 = vlaneseq
        %v792 = vshrl.u32 %v791, 7
        %v793 = vsub.s32 0, %v792
        %v794 = vrot.slane %v789, %v793
        %v797 = vsel %vm756, %v784, 0
        %799 = vmatprep.subr.mxu0 0.0
        %800 = vmatpush1.msra.mxu0 0.0
        %801 = vmatprep.subr.mxu0 0.0
        %802 = vmatpush1.msra.mxu0 0.0
        %803 = vmatprep.subr.mxu0 0.0
        %804 = vmatpush1.msra.mxu0 0.0
        %805 = vmatprep.subr.mxu0 0.0
        %806 = vmatpush1.msra.mxu0 0.0
        %807 = vmatprep.subr.mxu0 0.0
        %808 = vmatpush1.msra.mxu0 0.0
        %809 = vmatprep.subr.mxu0 0.0
        %810 = vmatpush1.msra.mxu0 0.0
        %811 = vmatprep.subr.mxu0 0.0
        %812 = vmatpush1.msra.mxu0 0.0
        %813 = vmatprep.subr.mxu0 0.0
        %814 = vmatpush1.msra.mxu0 0.0
        %815 = vmatprep.subr.mxu0 0.0
        %816 = vmatpush1.msra.mxu0 0.0
        %817 = vmatprep.subr.mxu0 0.0
        %818 = vmatpush1.msra.mxu0 0.0
        %819 = vmatprep.subr.mxu0 0.0
        %820 = vmatpush1.msra.mxu0 0.0
        %821 = vmatprep.subr.mxu0 0.0
        %822 = vmatpush1.msra.mxu0 0.0
        %823 = vmatprep.subr.mxu0 0.0
        %824 = vmatpush1.msra.mxu0 %v788
        %825 = vmatprep.subr.mxu0 0.0
        %826 = vmatpush1.msra.mxu0 %v787
        %827 = vmatprep.subr.mxu0 0.0
        %828 = vmatpush1.msra.mxu0 %v786
        %829 = vmatprep.subr.mxu0 0.0
        %830 = vmatpush1.msra.mxu0 %v785
        %831 = vmatprep.subr.mxu0 0.0
        %832 = vmatpush2.msra.mxu0 0.0
        %833 = vmatprep.subr.mxu0 0.0
        %834 = vmatpush2.msra.mxu0 0.0
        %835 = vmatprep.subr.mxu0 0.0
        %836 = vmatpush2.msra.mxu0 0.0
        %837 = vmatprep.subr.mxu0 0.0
        %838 = vmatpush2.msra.mxu0 0.0
        %839 = vmatprep.subr.mxu0 0.0
        %840 = vmatpush2.msra.mxu0 0.0
        %841 = vmatprep.subr.mxu0 0.0
        %842 = vmatpush2.msra.mxu0 0.0
        %843 = vmatprep.subr.mxu0 0.0
        %844 = vmatpush2.msra.mxu0 0.0
        %845 = vmatprep.subr.mxu0 0.0
        %846 = vmatpush2.msra.mxu0 0.0
        %847 = vmatprep.subr.mxu0 0.0
        %848 = vmatpush2.msra.mxu0 0.0
        %849 = vmatprep.subr.mxu0 0.0
        %850 = vmatpush2.msra.mxu0 0.0
        %851 = vmatprep.subr.mxu0 0.0
        %852 = vmatpush2.msra.mxu0 0.0
        %853 = vmatprep.subr.mxu0 0.0
        %854 = vmatpush2.msra.mxu0 0.0
        %855 = vmatprep.subr.mxu0 0.0
        %856 = vmatpush2.msra.mxu0 0.0
        %857 = vmatprep.subr.mxu0 0.0
        %858 = vmatpush2.msra.mxu0 0.0
        %859 = vmatprep.subr.mxu0 0.0
        %860 = vmatpush2.msra.mxu0 0.0
        %861 = vmatprep.subr.mxu0 0.0
        %862 = vmatpush2.msra.mxu0 0.0
        %863 = vmatprep.mubr.f32.mxu0 0.0
        %864 = vmatmul.mubr.f32.gmra.mxu0 %v797
        %v865 = vpop.f32.mrf.mxu0
        %v866 = vadd.f32 %v794, %v865
        %v867 = vpop.f32.mrf.mxu0
        %868 = vdwg.mxu0
        %870 = vrot.lane.b32.xlu0 %v866, 112
        %v871 = vpop.permute.xlu0 %870
        %872 = vrot.lane.b32.xlu0 %v866, 96
        %v873 = vpop.permute.xlu0 %872
        %vm874 = vcmask 130048
        %v875 = vsel %vm874, %v866, 0
        %v877 = vsel %vm874, %v873, 0
        %879 = vmatprep.subr.mxu0 0.0
        %880 = vmatpush1.xpose.msra.mxu0 0.0
        %881 = vmatprep.subr.mxu0 0.0
        %882 = vmatpush1.xpose.msra.mxu0 0.0
        %883 = vmatprep.subr.mxu0 0.0
        %884 = vmatpush1.xpose.msra.mxu0 0.0
        %885 = vmatprep.subr.mxu0 0.0
        %886 = vmatpush1.xpose.msra.mxu0 0.0
        %887 = vmatprep.subr.mxu0 0.0
        %888 = vmatpush1.xpose.msra.mxu0 0.0
        %889 = vmatprep.subr.mxu0 0.0
        %890 = vmatpush1.xpose.msra.mxu0 0.0
        %891 = vmatprep.subr.mxu0 0.0
        %892 = vmatpush1.xpose.msra.mxu0 0.0
        %893 = vmatprep.subr.mxu0 0.0
        %894 = vmatpush1.xpose.msra.mxu0 0.0
        %895 = vmatprep.subr.mxu0 0.0
        %896 = vmatpush1.xpose.msra.mxu0 0.0
        %897 = vmatprep.subr.mxu0 0.0
        %898 = vmatpush1.xpose.msra.mxu0 0.0
        %899 = vmatprep.subr.mxu0 0.0
        %900 = vmatpush1.xpose.msra.mxu0 0.0
        %901 = vmatprep.subr.mxu0 0.0
        %902 = vmatpush1.xpose.msra.mxu0 0.0
        %903 = vmatprep.subr.mxu0 0.0
        %904 = vmatpush1.xpose.msra.mxu0 0.0
        %905 = vmatprep.subr.mxu0 0.0
        %906 = vmatpush1.xpose.msra.mxu0 0.0
        %907 = vmatprep.subr.mxu0 0.0
        %908 = vmatpush1.xpose.msra.mxu0 0.0
        %909 = vmatprep.subr.mxu0 0.0
        %910 = vmatpush1.xpose.msra.mxu0 %v877
        %911 = vmatprep.subr.mxu0 0.0
        %912 = vmatpush2.xpose.msra.mxu0 0.0
        %913 = vmatprep.subr.mxu0 0.0
        %914 = vmatpush2.xpose.msra.mxu0 0.0
        %915 = vmatprep.subr.mxu0 0.0
        %916 = vmatpush2.xpose.msra.mxu0 0.0
        %917 = vmatprep.subr.mxu0 0.0
        %918 = vmatpush2.xpose.msra.mxu0 0.0
        %919 = vmatprep.subr.mxu0 0.0
        %920 = vmatpush2.xpose.msra.mxu0 0.0
        %921 = vmatprep.subr.mxu0 0.0
        %922 = vmatpush2.xpose.msra.mxu0 0.0
        %923 = vmatprep.subr.mxu0 0.0
        %924 = vmatpush2.xpose.msra.mxu0 0.0
        %925 = vmatprep.subr.mxu0 0.0
        %926 = vmatpush2.xpose.msra.mxu0 0.0
        %927 = vmatprep.subr.mxu0 0.0
        %928 = vmatpush2.xpose.msra.mxu0 0.0
        %929 = vmatprep.subr.mxu0 0.0
        %930 = vmatpush2.xpose.msra.mxu0 0.0
        %931 = vmatprep.subr.mxu0 0.0
        %932 = vmatpush2.xpose.msra.mxu0 0.0
        %933 = vmatprep.subr.mxu0 0.0
        %934 = vmatpush2.xpose.msra.mxu0 0.0
        %935 = vmatprep.subr.mxu0 0.0
        %936 = vmatpush2.xpose.msra.mxu0 0.0
        %937 = vmatprep.subr.mxu0 0.0
        %938 = vmatpush2.xpose.msra.mxu0 0.0
        %939 = vmatprep.subr.mxu0 0.0
        %940 = vmatpush2.xpose.msra.mxu0 0.0
        %941 = vmatprep.subr.mxu0 0.0
        %942 = vmatpush2.xpose.msra.mxu0 0.0
        %943 = vmatprep.mubr.f32.mxu0 0.0
        %944 = vmatmul.mubr.f32.gmra.mxu0 %v875
        %v945 = vpop.f32.mrf.mxu0
        %v946 = vadd.f32 0.0, %v945
        %v947 = vpop.f32.mrf.mxu0
        %948 = vdwg.mxu0
        %949 = vrot.lane.b32.xlu0 %v871, 96
        %v950 = vpop.permute.xlu0 %949
        %v951 = vsel %vm874, %v871, 0
        %v953 = vsel %vm874, %v950, 0
        %955 = vmatprep.subr.mxu0 0.0
        %956 = vmatpush1.xpose.msra.mxu0 0.0
        %957 = vmatprep.subr.mxu0 0.0
        %958 = vmatpush1.xpose.msra.mxu0 0.0
        %959 = vmatprep.subr.mxu0 0.0
        %960 = vmatpush1.xpose.msra.mxu0 0.0
        %961 = vmatprep.subr.mxu0 0.0
        %962 = vmatpush1.xpose.msra.mxu0 0.0
        %963 = vmatprep.subr.mxu0 0.0
        %964 = vmatpush1.xpose.msra.mxu0 0.0
        %965 = vmatprep.subr.mxu0 0.0
        %966 = vmatpush1.xpose.msra.mxu0 0.0
        %967 = vmatprep.subr.mxu0 0.0
        %968 = vmatpush1.xpose.msra.mxu0 0.0
        %969 = vmatprep.subr.mxu0 0.0
        %970 = vmatpush1.xpose.msra.mxu0 0.0
        %971 = vmatprep.subr.mxu0 0.0
        %972 = vmatpush1.xpose.msra.mxu0 0.0
        %973 = vmatprep.subr.mxu0 0.0
        %974 = vmatpush1.xpose.msra.mxu0 0.0
        %975 = vmatprep.subr.mxu0 0.0
        %976 = vmatpush1.xpose.msra.mxu0 0.0
        %977 = vmatprep.subr.mxu0 0.0
        %978 = vmatpush1.xpose.msra.mxu0 0.0
        %979 = vmatprep.subr.mxu0 0.0
        %980 = vmatpush1.xpose.msra.mxu0 0.0
        %981 = vmatprep.subr.mxu0 0.0
        %982 = vmatpush1.xpose.msra.mxu0 0.0
        %983 = vmatprep.subr.mxu0 0.0
        %984 = vmatpush1.xpose.msra.mxu0 0.0
        %985 = vmatprep.subr.mxu0 0.0
        %986 = vmatpush1.xpose.msra.mxu0 %v953
        %987 = vmatprep.subr.mxu0 0.0
        %988 = vmatpush2.xpose.msra.mxu0 0.0
        %989 = vmatprep.subr.mxu0 0.0
        %990 = vmatpush2.xpose.msra.mxu0 0.0
        %991 = vmatprep.subr.mxu0 0.0
        %992 = vmatpush2.xpose.msra.mxu0 0.0
        %993 = vmatprep.subr.mxu0 0.0
        %994 = vmatpush2.xpose.msra.mxu0 0.0
        %995 = vmatprep.subr.mxu0 0.0
        %996 = vmatpush2.xpose.msra.mxu0 0.0
        %997 = vmatprep.subr.mxu0 0.0
        %998 = vmatpush2.xpose.msra.mxu0 0.0
        %999 = vmatprep.subr.mxu0 0.0
        %1000 = vmatpush2.xpose.msra.mxu0 0.0
        %1001 = vmatprep.subr.mxu0 0.0
        %1002 = vmatpush2.xpose.msra.mxu0 0.0
        %1003 = vmatprep.subr.mxu0 0.0
        %1004 = vmatpush2.xpose.msra.mxu0 0.0
        %1005 = vmatprep.subr.mxu0 0.0
        %1006 = vmatpush2.xpose.msra.mxu0 0.0
        %1007 = vmatprep.subr.mxu0 0.0
        %1008 = vmatpush2.xpose.msra.mxu0 0.0
        %1009 = vmatprep.subr.mxu0 0.0
        %1010 = vmatpush2.xpose.msra.mxu0 0.0
        %1011 = vmatprep.subr.mxu0 0.0
        %1012 = vmatpush2.xpose.msra.mxu0 0.0
        %1013 = vmatprep.subr.mxu0 0.0
        %1014 = vmatpush2.xpose.msra.mxu0 0.0
        %1015 = vmatprep.subr.mxu0 0.0
        %1016 = vmatpush2.xpose.msra.mxu0 0.0
        %1017 = vmatprep.subr.mxu0 0.0
        %1018 = vmatpush2.xpose.msra.mxu0 0.0
        %1019 = vmatprep.mubr.f32.mxu0 0.0
        %1020 = vmatmul.mubr.f32.gmra.mxu0 %v951
        %v1021 = vpop.f32.mrf.mxu0
        %v1022 = vadd.f32 0.0, %v1021
        %v1023 = vpop.f32.mrf.mxu0
        %1024 = vdwg.mxu0
        %v1025 = vmul.f32 %v946, 0.25
        %v1026 = vmul.f32 %v1022, 0.25
        %vm1027 = vcmask 64512
        %v1028 = vsel %vm1027, %v1025, -inf
        %1029 = vmax.xlane.f32.xlu0 %v1028
        %v1030 = vpop.xlane.xlu0 %1029
        %v1031 = vsel %vm1027, %v1026, -inf
        %1032 = vmax.xlane.f32.xlu0 %v1031
        %v1033 = vpop.xlane.xlu0 %1032
        %v1034 = vsub.f32 %v1025, %v1030
        %v1035 = vsub.f32 %v1026, %v1033
        %v1036 = vmul.f32 %v1034, 1.442695
        %v1037 = vpow.pop %v1036
        %v1038 = vmul.f32 %v1035, 1.442695
        %v1039 = vpow.pop %v1038
        %v1040 = vsel %vm1027, %v1037, 0.0
        %1041 = vadd.xlane.f32.xlu0 %v1040
        %v1042 = vpop.xlane.xlu0 %1041
        %v1043 = vsel %vm1027, %v1039, 0.0
        %1044 = vadd.xlane.f32.xlu0 %v1043
        %v1045 = vpop.xlane.xlu0 %1044
        %v1046 = vrcp.pop %v1042
        %v1047 = vrcp.pop %v1045
        %v1048 = vmul.f32 %v1037, %v1046
        %v1049 = vmul.f32 %v1039, %v1047
        %1050 = vrot.lane.b32.xlu0 %v866, 64
        %v1051 = vpop.permute.xlu0 %1050
        %v1054 = vsel %vm1027, %v1048, 0
        %1056 = vmatprep.subr.mxu0 0.0
        %1057 = vmatpush1.msra.mxu0 0.0
        %1058 = vmatprep.subr.mxu0 0.0
        %1059 = vmatpush1.msra.mxu0 0.0
        %1060 = vmatprep.subr.mxu0 0.0
        %1061 = vmatpush1.msra.mxu0 0.0
        %1062 = vmatprep.subr.mxu0 0.0
        %1063 = vmatpush1.msra.mxu0 0.0
        %1064 = vmatprep.subr.mxu0 0.0
        %1065 = vmatpush1.msra.mxu0 0.0
        %1066 = vmatprep.subr.mxu0 0.0
        %1067 = vmatpush1.msra.mxu0 0.0
        %1068 = vmatprep.subr.mxu0 0.0
        %1069 = vmatpush1.msra.mxu0 0.0
        %1070 = vmatprep.subr.mxu0 0.0
        %1071 = vmatpush1.msra.mxu0 0.0
        %1072 = vmatprep.subr.mxu0 0.0
        %1073 = vmatpush1.msra.mxu0 0.0
        %1074 = vmatprep.subr.mxu0 0.0
        %1075 = vmatpush1.msra.mxu0 0.0
        %1076 = vmatprep.subr.mxu0 0.0
        %1077 = vmatpush1.msra.mxu0 0.0
        %1078 = vmatprep.subr.mxu0 0.0
        %1079 = vmatpush1.msra.mxu0 0.0
        %1080 = vmatprep.subr.mxu0 0.0
        %1081 = vmatpush1.msra.mxu0 0.0
        %1082 = vmatprep.subr.mxu0 0.0
        %1083 = vmatpush1.msra.mxu0 0.0
        %1084 = vmatprep.subr.mxu0 0.0
        %1085 = vmatpush1.msra.mxu0 0.0
        %1086 = vmatprep.subr.mxu0 0.0
        %1087 = vmatpush1.msra.mxu0 %v1051
        %1088 = vmatprep.subr.mxu0 0.0
        %1089 = vmatpush2.msra.mxu0 0.0
        %1090 = vmatprep.subr.mxu0 0.0
        %1091 = vmatpush2.msra.mxu0 0.0
        %1092 = vmatprep.subr.mxu0 0.0
        %1093 = vmatpush2.msra.mxu0 0.0
        %1094 = vmatprep.subr.mxu0 0.0
        %1095 = vmatpush2.msra.mxu0 0.0
        %1096 = vmatprep.subr.mxu0 0.0
        %1097 = vmatpush2.msra.mxu0 0.0
        %1098 = vmatprep.subr.mxu0 0.0
        %1099 = vmatpush2.msra.mxu0 0.0
        %1100 = vmatprep.subr.mxu0 0.0
        %1101 = vmatpush2.msra.mxu0 0.0
        %1102 = vmatprep.subr.mxu0 0.0
        %1103 = vmatpush2.msra.mxu0 0.0
        %1104 = vmatprep.subr.mxu0 0.0
        %1105 = vmatpush2.msra.mxu0 0.0
        %1106 = vmatprep.subr.mxu0 0.0
        %1107 = vmatpush2.msra.mxu0 0.0
        %1108 = vmatprep.subr.mxu0 0.0
        %1109 = vmatpush2.msra.mxu0 0.0
        %1110 = vmatprep.subr.mxu0 0.0
        %1111 = vmatpush2.msra.mxu0 0.0
        %1112 = vmatprep.subr.mxu0 0.0
        %1113 = vmatpush2.msra.mxu0 0.0
        %1114 = vmatprep.subr.mxu0 0.0
        %1115 = vmatpush2.msra.mxu0 0.0
        %1116 = vmatprep.subr.mxu0 0.0
        %1117 = vmatpush2.msra.mxu0 0.0
        %1118 = vmatprep.subr.mxu0 0.0
        %1119 = vmatpush2.msra.mxu0 0.0
        %1120 = vmatprep.mubr.f32.mxu0 0.0
        %1121 = vmatmul.mubr.f32.gmra.mxu0 %v1054
        %v1122 = vpop.f32.mrf.mxu0
        %v1123 = vadd.f32 0.0, %v1122
        %v1124 = vpop.f32.mrf.mxu0
        %1125 = vdwg.mxu0
        %1126 = vrot.lane.b32.xlu0 %v871, 64
        %v1127 = vpop.permute.xlu0 %1126
        %v1130 = vsel %vm1027, %v1049, 0
        %1132 = vmatprep.subr.mxu0 0.0
        %1133 = vmatpush1.msra.mxu0 0.0
        %1134 = vmatprep.subr.mxu0 0.0
        %1135 = vmatpush1.msra.mxu0 0.0
        %1136 = vmatprep.subr.mxu0 0.0
        %1137 = vmatpush1.msra.mxu0 0.0
        %1138 = vmatprep.subr.mxu0 0.0
        %1139 = vmatpush1.msra.mxu0 0.0
        %1140 = vmatprep.subr.mxu0 0.0
        %1141 = vmatpush1.msra.mxu0 0.0
        %1142 = vmatprep.subr.mxu0 0.0
        %1143 = vmatpush1.msra.mxu0 0.0
        %1144 = vmatprep.subr.mxu0 0.0
        %1145 = vmatpush1.msra.mxu0 0.0
        %1146 = vmatprep.subr.mxu0 0.0
        %1147 = vmatpush1.msra.mxu0 0.0
        %1148 = vmatprep.subr.mxu0 0.0
        %1149 = vmatpush1.msra.mxu0 0.0
        %1150 = vmatprep.subr.mxu0 0.0
        %1151 = vmatpush1.msra.mxu0 0.0
        %1152 = vmatprep.subr.mxu0 0.0
        %1153 = vmatpush1.msra.mxu0 0.0
        %1154 = vmatprep.subr.mxu0 0.0
        %1155 = vmatpush1.msra.mxu0 0.0
        %1156 = vmatprep.subr.mxu0 0.0
        %1157 = vmatpush1.msra.mxu0 0.0
        %1158 = vmatprep.subr.mxu0 0.0
        %1159 = vmatpush1.msra.mxu0 0.0
        %1160 = vmatprep.subr.mxu0 0.0
        %1161 = vmatpush1.msra.mxu0 0.0
        %1162 = vmatprep.subr.mxu0 0.0
        %1163 = vmatpush1.msra.mxu0 %v1127
        %1164 = vmatprep.subr.mxu0 0.0
        %1165 = vmatpush2.msra.mxu0 0.0
        %1166 = vmatprep.subr.mxu0 0.0
        %1167 = vmatpush2.msra.mxu0 0.0
        %1168 = vmatprep.subr.mxu0 0.0
        %1169 = vmatpush2.msra.mxu0 0.0
        %1170 = vmatprep.subr.mxu0 0.0
        %1171 = vmatpush2.msra.mxu0 0.0
        %1172 = vmatprep.subr.mxu0 0.0
        %1173 = vmatpush2.msra.mxu0 0.0
        %1174 = vmatprep.subr.mxu0 0.0
        %1175 = vmatpush2.msra.mxu0 0.0
        %1176 = vmatprep.subr.mxu0 0.0
        %1177 = vmatpush2.msra.mxu0 0.0
        %1178 = vmatprep.subr.mxu0 0.0
        %1179 = vmatpush2.msra.mxu0 0.0
        %1180 = vmatprep.subr.mxu0 0.0
        %1181 = vmatpush2.msra.mxu0 0.0
        %1182 = vmatprep.subr.mxu0 0.0
        %1183 = vmatpush2.msra.mxu0 0.0
        %1184 = vmatprep.subr.mxu0 0.0
        %1185 = vmatpush2.msra.mxu0 0.0
        %1186 = vmatprep.subr.mxu0 0.0
        %1187 = vmatpush2.msra.mxu0 0.0
        %1188 = vmatprep.subr.mxu0 0.0
        %1189 = vmatpush2.msra.mxu0 0.0
        %1190 = vmatprep.subr.mxu0 0.0
        %1191 = vmatpush2.msra.mxu0 0.0
        %1192 = vmatprep.subr.mxu0 0.0
        %1193 = vmatpush2.msra.mxu0 0.0
        %1194 = vmatprep.subr.mxu0 0.0
        %1195 = vmatpush2.msra.mxu0 0.0
        %1196 = vmatprep.mubr.f32.mxu0 0.0
        %1197 = vmatmul.mubr.f32.gmra.mxu0 %v1130
        %v1198 = vpop.f32.mrf.mxu0
        %v1199 = vadd.f32 0.0, %v1198
        %v1200 = vpop.f32.mrf.mxu0
        %1201 = vdwg.mxu0
        %1203 = vrot.lane.b32.xlu0 %v1199, 16
        %v1204 = vpop.permute.xlu0 %1203
        %v1206 = vsel %vm874, %v1123, %v1204
        %v1207 = vld [vmem:[%s8] sm:$0xff]
        %v1208 = vld [vmem:[%s8 + $0x8] sm:$0xff]
        %v1209 = vld [vmem:[%s8 + $0x10] sm:$0xff]
        %v1210 = vld [vmem:[%s8 + $0x18] sm:$0xff]
        %v1211 = vld [vmem:[%s9] sm:$0x1]
        %v1213 = vlaneseq
        %v1214 = vshrl.u32 %v1213, 7
        %v1215 = vsub.s32 0, %v1214
        %v1216 = vrot.slane %v1211, %v1215
        %v1219 = vsel %vm756, %v1206, 0
        %1221 = vmatprep.subr.mxu0 0.0
        %1222 = vmatpush1.msra.mxu0 0.0
        %1223 = vmatprep.subr.mxu0 0.0
        %1224 = vmatpush1.msra.mxu0 0.0
        %1225 = vmatprep.subr.mxu0 0.0
        %1226 = vmatpush1.msra.mxu0 0.0
        %1227 = vmatprep.subr.mxu0 0.0
        %1228 = vmatpush1.msra.mxu0 0.0
        %1229 = vmatprep.subr.mxu0 0.0
        %1230 = vmatpush1.msra.mxu0 0.0
        %1231 = vmatprep.subr.mxu0 0.0
        %1232 = vmatpush1.msra.mxu0 0.0
        %1233 = vmatprep.subr.mxu0 0.0
        %1234 = vmatpush1.msra.mxu0 0.0
        %1235 = vmatprep.subr.mxu0 0.0
        %1236 = vmatpush1.msra.mxu0 0.0
        %1237 = vmatprep.subr.mxu0 0.0
        %1238 = vmatpush1.msra.mxu0 0.0
        %1239 = vmatprep.subr.mxu0 0.0
        %1240 = vmatpush1.msra.mxu0 0.0
        %1241 = vmatprep.subr.mxu0 0.0
        %1242 = vmatpush1.msra.mxu0 0.0
        %1243 = vmatprep.subr.mxu0 0.0
        %1244 = vmatpush1.msra.mxu0 0.0
        %1245 = vmatprep.subr.mxu0 0.0
        %1246 = vmatpush1.msra.mxu0 %v1210
        %1247 = vmatprep.subr.mxu0 0.0
        %1248 = vmatpush1.msra.mxu0 %v1209
        %1249 = vmatprep.subr.mxu0 0.0
        %1250 = vmatpush1.msra.mxu0 %v1208
        %1251 = vmatprep.subr.mxu0 0.0
        %1252 = vmatpush1.msra.mxu0 %v1207
        %1253 = vmatprep.subr.mxu0 0.0
        %1254 = vmatpush2.msra.mxu0 0.0
        %1255 = vmatprep.subr.mxu0 0.0
        %1256 = vmatpush2.msra.mxu0 0.0
        %1257 = vmatprep.subr.mxu0 0.0
        %1258 = vmatpush2.msra.mxu0 0.0
        %1259 = vmatprep.subr.mxu0 0.0
        %1260 = vmatpush2.msra.mxu0 0.0
        %1261 = vmatprep.subr.mxu0 0.0
        %1262 = vmatpush2.msra.mxu0 0.0
        %1263 = vmatprep.subr.mxu0 0.0
        %1264 = vmatpush2.msra.mxu0 0.0
        %1265 = vmatprep.subr.mxu0 0.0
        %1266 = vmatpush2.msra.mxu0 0.0
        %1267 = vmatprep.subr.mxu0 0.0
        %1268 = vmatpush2.msra.mxu0 0.0
        %1269 = vmatprep.subr.mxu0 0.0
        %1270 = vmatpush2.msra.mxu0 0.0
        %1271 = vmatprep.subr.mxu0 0.0
        %1272 = vmatpush2.msra.mxu0 0.0
        %1273 = vmatprep.subr.mxu0 0.0
        %1274 = vmatpush2.msra.mxu0 0.0
        %1275 = vmatprep.subr.mxu0 0.0
        %1276 = vmatpush2.msra.mxu0 0.0
        %1277 = vmatprep.subr.mxu0 0.0
        %1278 = vmatpush2.msra.mxu0 0.0
        %1279 = vmatprep.subr.mxu0 0.0
        %1280 = vmatpush2.msra.mxu0 0.0
        %1281 = vmatprep.subr.mxu0 0.0
        %1282 = vmatpush2.msra.mxu0 0.0
        %1283 = vmatprep.subr.mxu0 0.0
        %1284 = vmatpush2.msra.mxu0 0.0
        %1285 = vmatprep.mubr.f32.mxu0 0.0
        %1286 = vmatmul.mubr.f32.gmra.mxu0 %v1219
        %v1287 = vpop.f32.mrf.mxu0
        %v1288 = vadd.f32 %v1216, %v1287
        %v1289 = vpop.f32.mrf.mxu0
        %1290 = vdwg.mxu0
        %v1291 = vadd.f32 %v1288, %v784
        %v1292 = vld [vmem:[%s10] sm:$0x1]
        %v1293 = vld [vmem:[%s11] sm:$0x1]
        %v1294 = vsel %vm756, %v1291, 0.0
        %1295 = vadd.xlane.f32.xlu0 %v1294
        %v1296 = vpop.xlane.xlu0 %1295
        %v1297 = vmul.f32 %v1296, %v760
        %v1298 = vsub.f32 %v1291, %v1297
        %v1299 = vmul.f32 %v1298, %v1298
        %v1300 = vsel %vm756, %v1299, 0.0
        %1301 = vadd.xlane.f32.xlu0 %v1300
        %v1302 = vpop.xlane.xlu0 %1301
        %v1303 = vmul.f32 %v1302, %v760
        %v1304 = vadd.f32 %v1303, 1e-12
        %v1305 = vrsqrt.pop %v1304
        %v1306 = vmul.f32 %v1298, %v1305
        %v1308 = vlaneseq
        %v1309 = vshrl.u32 %v1308, 7
        %v1310 = vsub.s32 0, %v1309
        %v1311 = vrot.slane %v1292, %v1310
        %v1313 = vmul.f32 %v1306, %v1311
        %v1315 = vlaneseq
        %v1316 = vshrl.u32 %v1315, 7
        %v1317 = vsub.s32 0, %v1316
        %v1318 = vrot.slane %v1293, %v1317
        %v1320 = vadd.f32 %v1313, %v1318
        %v1321 = vld [vmem:[%s12] sm:$0xff]
        %v1322 = vld [vmem:[%s12 + $0x8] sm:$0xff]
        %v1323 = vld [vmem:[%s12 + $0x10] sm:$0xff]
        %v1324 = vld [vmem:[%s12 + $0x18] sm:$0xff]
        %v1325 = vld [vmem:[%s13] sm:$0x1]
        %v1327 = vlaneseq
        %v1328 = vshrl.u32 %v1327, 7
        %v1329 = vsub.s32 0, %v1328
        %v1330 = vrot.slane %v1325, %v1329
        %v1333 = vsel %vm756, %v1320, 0
        %1335 = vmatprep.subr.mxu0 0.0
        %1336 = vmatpush1.msra.mxu0 0.0
        %1337 = vmatprep.subr.mxu0 0.0
        %1338 = vmatpush1.msra.mxu0 0.0
        %1339 = vmatprep.subr.mxu0 0.0
        %1340 = vmatpush1.msra.mxu0 0.0
        %1341 = vmatprep.subr.mxu0 0.0
        %1342 = vmatpush1.msra.mxu0 0.0
        %1343 = vmatprep.subr.mxu0 0.0
        %1344 = vmatpush1.msra.mxu0 0.0
        %1345 = vmatprep.subr.mxu0 0.0
        %1346 = vmatpush1.msra.mxu0 0.0
        %1347 = vmatprep.subr.mxu0 0.0
        %1348 = vmatpush1.msra.mxu0 0.0
        %1349 = vmatprep.subr.mxu0 0.0
        %1350 = vmatpush1.msra.mxu0 0.0
        %1351 = vmatprep.subr.mxu0 0.0
        %1352 = vmatpush1.msra.mxu0 0.0
        %1353 = vmatprep.subr.mxu0 0.0
        %1354 = vmatpush1.msra.mxu0 0.0
        %1355 = vmatprep.subr.mxu0 0.0
        %1356 = vmatpush1.msra.mxu0 0.0
        %1357 = vmatprep.subr.mxu0 0.0
        %1358 = vmatpush1.msra.mxu0 0.0
        %1359 = vmatprep.subr.mxu0 0.0
        %1360 = vmatpush1.msra.mxu0 %v1324
        %1361 = vmatprep.subr.mxu0 0.0
        %1362 = vmatpush1.msra.mxu0 %v1323
        %1363 = vmatprep.subr.mxu0 0.0
        %1364 = vmatpush1.msra.mxu0 %v1322
        %1365 = vmatprep.subr.mxu0 0.0
        %1366 = vmatpush1.msra.mxu0 %v1321
        %1367 = vmatprep.subr.mxu0 0.0
        %1368 = vmatpush2.msra.mxu0 0.0
        %1369 = vmatprep.subr.mxu0 0.0
        %1370 = vmatpush2.msra.mxu0 0.0
        %1371 = vmatprep.subr.mxu0 0.0
        %1372 = vmatpush2.msra.mxu0 0.0
        %1373 = vmatprep.subr.mxu0 0.0
        %1374 = vmatpush2.msra.mxu0 0.0
        %1375 = vmatprep.subr.mxu0 0.0
        %1376 = vmatpush2.msra.mxu0 0.0
        %1377 = vmatprep.subr.mxu0 0.0
        %1378 = vmatpush2.msra.mxu0 0.0
        %1379 = vmatprep.subr.mxu0 0.0
        %1380 = vmatpush2.msra.mxu0 0.0
        %1381 = vmatprep.subr.mxu0 0.0
        %1382 = vmatpush2.msra.mxu0 0.0
        %1383 = vmatprep.subr.mxu0 0.0
        %1384 = vmatpush2.msra.mxu0 0.0
        %1385 = vmatprep.subr.mxu0 0.0
        %1386 = vmatpush2.msra.mxu0 0.0
        %1387 = vmatprep.subr.mxu0 0.0
        %1388 = vmatpush2.msra.mxu0 0.0
        %1389 = vmatprep.subr.mxu0 0.0
        %1390 = vmatpush2.msra.mxu0 0.0
        %1391 = vmatprep.subr.mxu0 0.0
        %1392 = vmatpush2.msra.mxu0 0.0
        %1393 = vmatprep.subr.mxu0 0.0
        %1394 = vmatpush2.msra.mxu0 0.0
        %1395 = vmatprep.subr.mxu0 0.0
        %1396 = vmatpush2.msra.mxu0 0.0
        %1397 = vmatprep.subr.mxu0 0.0
        %1398 = vmatpush2.msra.mxu0 0.0
        %1399 = vmatprep.mubr.f32.mxu0 0.0
        %1400 = vmatmul.mubr.f32.gmra.mxu0 %v1333
        %v1401 = vpop.f32.mrf.mxu0
        %v1402 = vadd.f32 %v1330, %v1401
        %v1403 = vpop.f32.mrf.mxu0
        %1404 = vdwg.mxu0
        %v1405 = vmul.f32 %v1402, %v1402
        %v1406 = vmul.f32 %v1402, %v1405
        %v1407 = vmul.f32 %v1406, 0.044715
        %v1408 = vadd.f32 %v1402, %v1407
        %v1409 = vmul.f32 %v1408, 0.7978846
        %v1410 = vtanh.pop %v1409
        %v1411 = vadd.f32 %v1410, 1.0
        %v1412 = vmul.f32 %v1411, 0.5
        %v1413 = vmul.f32 %v1402, %v1412
        %v1414 = vld [vmem:[%s14] sm:$0xff]
        %v1415 = vld [vmem:[%s14 + $0x8] sm:$0xff]
        %v1416 = vld [vmem:[%s14 + $0x10] sm:$0xff]
        %v1417 = vld [vmem:[%s14 + $0x18] sm:$0xff]
        %v1418 = vld [vmem:[%s14 + $0x20] sm:$0xff]
        %v1419 = vld [vmem:[%s14 + $0x28] sm:$0xff]
        %v1420 = vld [vmem:[%s14 + $0x30] sm:$0xff]
        %v1421 = vld [vmem:[%s14 + $0x38] sm:$0xff]
        %v1422 = vld [vmem:[%s15] sm:$0x1]
        %v1424 = vlaneseq
        %v1425 = vshrl.u32 %v1424, 7
        %v1426 = vsub.s32 0, %v1425
        %v1427 = vrot.slane %v1422, %v1426
        %vm1429 = vcmask 523264
        %v1431 = vsel %vm1429, %v1413, 0
        %1433 = vmatprep.subr.mxu0 0.0
        %1434 = vmatpush1.msra.mxu0 0.0
        %1435 = vmatprep.subr.mxu0 0.0
        %1436 = vmatpush1.msra.mxu0 0.0
        %1437 = vmatprep.subr.mxu0 0.0
        %1438 = vmatpush1.msra.mxu0 0.0
        %1439 = vmatprep.subr.mxu0 0.0
        %1440 = vmatpush1.msra.mxu0 0.0
        %1441 = vmatprep.subr.mxu0 0.0
        %1442 = vmatpush1.msra.mxu0 0.0
        %1443 = vmatprep.subr.mxu0 0.0
        %1444 = vmatpush1.msra.mxu0 0.0
        %1445 = vmatprep.subr.mxu0 0.0
        %1446 = vmatpush1.msra.mxu0 0.0
        %1447 = vmatprep.subr.mxu0 0.0
        %1448 = vmatpush1.msra.mxu0 0.0
        %1449 = vmatprep.subr.mxu0 0.0
        %1450 = vmatpush1.msra.mxu0 %v1421
        %1451 = vmatprep.subr.mxu0 0.0
        %1452 = vmatpush1.msra.mxu0 %v1420
        %1453 = vmatprep.subr.mxu0 0.0
        %1454 = vmatpush1.msra.mxu0 %v1419
        %1455 = vmatprep.subr.mxu0 0.0
        %1456 = vmatpush1.msra.mxu0 %v1418
        %1457 = vmatprep.subr.mxu0 0.0
        %1458 = vmatpush1.msra.mxu0 %v1417
        %1459 = vmatprep.subr.mxu0 0.0
        %1460 = vmatpush1.msra.mxu0 %v1416
        %1461 = vmatprep.subr.mxu0 0.0
        %1462 = vmatpush1.msra.mxu0 %v1415
        %1463 = vmatprep.subr.mxu0 0.0
        %1464 = vmatpush1.msra.mxu0 %v1414
        %1465 = vmatprep.subr.mxu0 0.0
        %1466 = vmatpush2.msra.mxu0 0.0
        %1467 = vmatprep.subr.mxu0 0.0
        %1468 = vmatpush2.msra.mxu0 0.0
        %1469 = vmatprep.subr.mxu0 0.0
        %1470 = vmatpush2.msra.mxu0 0.0
        %1471 = vmatprep.subr.mxu0 0.0
        %1472 = vmatpush2.msra.mxu0 0.0
        %1473 = vmatprep.subr.mxu0 0.0
        %1474 = vmatpush2.msra.mxu0 0.0
        %1475 = vmatprep.subr.mxu0 0.0
        %1476 = vmatpush2.msra.mxu0 0.0
        %1477 = vmatprep.subr.mxu0 0.0
        %1478 = vmatpush2.msra.mxu0 0.0
        %1479 = vmatprep.subr.mxu0 0.0
        %1480 = vmatpush2.msra.mxu0 0.0
        %1481 = vmatprep.subr.mxu0 0.0
        %1482 = vmatpush2.msra.mxu0 0.0
        %1483 = vmatprep.subr.mxu0 0.0
        %1484 = vmatpush2.msra.mxu0 0.0
        %1485 = vmatprep.subr.mxu0 0.0
        %1486 = vmatpush2.msra.mxu0 0.0
        %1487 = vmatprep.subr.mxu0 0.0
        %1488 = vmatpush2.msra.mxu0 0.0
        %1489 = vmatprep.subr.mxu0 0.0
        %1490 = vmatpush2.msra.mxu0 0.0
        %1491 = vmatprep.subr.mxu0 0.0
        %1492 = vmatpush2.msra.mxu0 0.0
        %1493 = vmatprep.subr.mxu0 0.0
        %1494 = vmatpush2.msra.mxu0 0.0
        %1495 = vmatprep.subr.mxu0 0.0
        %1496 = vmatpush2.msra.mxu0 0.0
        %1497 = vmatprep.mubr.f32.mxu0 0.0
        %1498 = vmatmul.mubr.f32.gmra.mxu0 %v1431
        %v1499 = vpop.f32.mrf.mxu0
        %v1500 = vadd.f32 %v1427, %v1499
        %v1501 = vpop.f32.mrf.mxu0
        %1502 = vdwg.mxu0
        %v1503 = vadd.f32 %v1500, %v1320
        %v1504 = vld [vmem:[%s16] sm:$0x1]
        %v1505 = vld [vmem:[%s17] sm:$0x1]
        %v1506 = vsel %vm756, %v1503, 0.0
        %1507 = vadd.xlane.f32.xlu0 %v1506
        %v1508 = vpop.xlane.xlu0 %1507
        %v1509 = vmul.f32 %v1508, %v760
        %v1510 = vsub.f32 %v1503, %v1509
        %v1511 = vmul.f32 %v1510, %v1510
        %v1512 = vsel %vm756, %v1511, 0.0
        %1513 = vadd.xlane.f32.xlu0 %v1512
        %v1514 = vpop.xlane.xlu0 %1513
        %v1515 = vmul.f32 %v1514, %v760
        %v1516 = vadd.f32 %v1515, 1e-12
        %v1517 = vrsqrt.pop %v1516
        %v1518 = vmul.f32 %v1510, %v1517
        %v1520 = vlaneseq
        %v1521 = vshrl.u32 %v1520, 7
        %v1522 = vsub.s32 0, %v1521
        %v1523 = vrot.slane %v1504, %v1522
        %v1525 = vmul.f32 %v1518, %v1523
        %v1527 = vlaneseq
        %v1528 = vshrl.u32 %v1527, 7
        %v1529 = vsub.s32 0, %v1528
        %v1530 = vrot.slane %v1505, %v1529
        %v1532 = vadd.f32 %v1525, %v1530
        %s1533 = scalar_lea.vmem %s6, 32
        %v1534 = vld [vmem:[%s1533] sm:$0xff]
        %v1535 = vld [vmem:[%s1533 + $0x8] sm:$0xff]
        %v1536 = vld [vmem:[%s1533 + $0x10] sm:$0xff]
        %v1537 = vld [vmem:[%s1533 + $0x18] sm:$0xff]
        %s1538 = scalar_lea.vmem %s7, 1
        %v1539 = vld [vmem:[%s1538] sm:$0x1]
        %v1541 = vlaneseq
        %v1542 = vshrl.u32 %v1541, 7
        %v1543 = vsub.s32 0, %v1542
        %v1544 = vrot.slane %v1539, %v1543
        %v1547 = vsel %vm756, %v1532, 0
        %1549 = vmatprep.subr.mxu0 0.0
        %1550 = vmatpush1.msra.mxu0 0.0
        %1551 = vmatprep.subr.mxu0 0.0
        %1552 = vmatpush1.msra.mxu0 0.0
        %1553 = vmatprep.subr.mxu0 0.0
        %1554 = vmatpush1.msra.mxu0 0.0
        %1555 = vmatprep.subr.mxu0 0.0
        %1556 = vmatpush1.msra.mxu0 0.0
        %1557 = vmatprep.subr.mxu0 0.0
        %1558 = vmatpush1.msra.mxu0 0.0
        %1559 = vmatprep.subr.mxu0 0.0
        %1560 = vmatpush1.msra.mxu0 0.0
        %1561 = vmatprep.subr.mxu0 0.0
        %1562 = vmatpush1.msra.mxu0 0.0
        %1563 = vmatprep.subr.mxu0 0.0
        %1564 = vmatpush1.msra.mxu0 0.0
        %1565 = vmatprep.subr.mxu0 0.0
        %1566 = vmatpush1.msra.mxu0 0.0
        %1567 = vmatprep.subr.mxu0 0.0
        %1568 = vmatpush1.msra.mxu0 0.0
        %1569 = vmatprep.subr.mxu0 0.0
        %1570 = vmatpush1.msra.mxu0 0.0
        %1571 = vmatprep.subr.mxu0 0.0
        %1572 = vmatpush1.msra.mxu0 0.0
        %1573 = vmatprep.subr.mxu0 0.0
        %1574 = vmatpush1.msra.mxu0 %v1537
        %1575 = vmatprep.subr.mxu0 0.0
        %1576 = vmatpush1.msra.mxu0 %v1536
        %1577 = vmatprep.subr.mxu0 0.0
        %1578 = vmatpush1.msra.mxu0 %v1535
        %1579 = vmatprep.subr.mxu0 0.0
        %1580 = vmatpush1.msra.mxu0 %v1534
        %1581 = vmatprep.subr.mxu0 0.0
        %1582 = vmatpush2.msra.mxu0 0.0
        %1583 = vmatprep.subr.mxu0 0.0
        %1584 = vmatpush2.msra.mxu0 0.0
        %1585 = vmatprep.subr.mxu0 0.0
        %1586 = vmatpush2.msra.mxu0 0.0
        %1587 = vmatprep.subr.mxu0 0.0
        %1588 = vmatpush2.msra.mxu0 0.0
        %1589 = vmatprep.subr.mxu0 0.0
        %1590 = vmatpush2.msra.mxu0 0.0
        %1591 = vmatprep.subr.mxu0 0.0
        %1592 = vmatpush2.msra.mxu0 0.0
        %1593 = vmatprep.subr.mxu0 0.0
        %1594 = vmatpush2.msra.mxu0 0.0
        %1595 = vmatprep.subr.mxu0 0.0
        %1596 = vmatpush2.msra.mxu0 0.0
        %1597 = vmatprep.subr.mxu0 0.0
        %1598 = vmatpush2.msra.mxu0 0.0
        %1599 = vmatprep.subr.mxu0 0.0
        %1600 = vmatpush2.msra.mxu0 0.0
        %1601 = vmatprep.subr.mxu0 0.0
        %1602 = vmatpush2.msra.mxu0 0.0
        %1603 = vmatprep.subr.mxu0 0.0
        %1604 = vmatpush2.msra.mxu0 0.0
        %1605 = vmatprep.subr.mxu0 0.0
        %1606 = vmatpush2.msra.mxu0 0.0
        %1607 = vmatprep.subr.mxu0 0.0
        %1608 = vmatpush2.msra.mxu0 0.0
        %1609 = vmatprep.subr.mxu0 0.0
        %1610 = vmatpush2.msra.mxu0 0.0
        %1611 = vmatprep.subr.mxu0 0.0
        %1612 = vmatpush2.msra.mxu0 0.0
        %1613 = vmatprep.mubr.f32.mxu0 0.0
        %1614 = vmatmul.mubr.f32.gmra.mxu0 %v1547
        %v1615 = vpop.f32.mrf.mxu0
        %v1616 = vadd.f32 %v1544, %v1615
        %v1617 = vpop.f32.mrf.mxu0
        %1618 = vdwg.mxu0
        %1620 = vrot.lane.b32.xlu0 %v1616, 112
        %v1621 = vpop.permute.xlu0 %1620
        %1622 = vrot.lane.b32.xlu0 %v1616, 96
        %v1623 = vpop.permute.xlu0 %1622
        %v1624 = vsel %vm874, %v1616, 0
        %v1626 = vsel %vm874, %v1623, 0
        %1628 = vmatprep.subr.mxu0 0.0
        %1629 = vmatpush1.xpose.msra.mxu0 0.0
        %1630 = vmatprep.subr.mxu0 0.0
        %1631 = vmatpush1.xpose.msra.mxu0 0.0
        %1632 = vmatprep.subr.mxu0 0.0
        %1633 = vmatpush1.xpose.msra.mxu0 0.0
        %1634 = vmatprep.subr.mxu0 0.0
        %1635 = vmatpush1.xpose.msra.mxu0 0.0
        %1636 = vmatprep.subr.mxu0 0.0
        %1637 = vmatpush1.xpose.msra.mxu0 0.0
        %1638 = vmatprep.subr.mxu0 0.0
        %1639 = vmatpush1.xpose.msra.mxu0 0.0
        %1640 = vmatprep.subr.mxu0 0.0
        %1641 = vmatpush1.xpose.msra.mxu0 0.0
        %1642 = vmatprep.subr.mxu0 0.0
        %1643 = vmatpush1.xpose.msra.mxu0 0.0
        %1644 = vmatprep.subr.mxu0 0.0
        %1645 = vmatpush1.xpose.msra.mxu0 0.0
        %1646 = vmatprep.subr.mxu0 0.0
        %1647 = vmatpush1.xpose.msra.mxu0 0.0
        %1648 = vmatprep.subr.mxu0 0.0
        %1649 = vmatpush1.xpose.msra.mxu0 0.0
        %1650 = vmatprep.subr.mxu0 0.0
        %1651 = vmatpush1.xpose.msra.mxu0 0.0
        %1652 = vmatprep.subr.mxu0 0.0
        %1653 = vmatpush1.xpose.msra.mxu0 0.0
        %1654 = vmatprep.subr.mxu0 0.0
        %1655 = vmatpush1.xpose.msra.mxu0 0.0
        %1656 = vmatprep.subr.mxu0 0.0
        %1657 = vmatpush1.xpose.msra.mxu0 0.0
        %1658 = vmatprep.subr.mxu0 0.0
        %1659 = vmatpush1.xpose.msra.mxu0 %v1626
        %1660 = vmatprep.subr.mxu0 0.0
        %1661 = vmatpush2.xpose.msra.mxu0 0.0
        %1662 = vmatprep.subr.mxu0 0.0
        %1663 = vmatpush2.xpose.msra.mxu0 0.0
        %1664 = vmatprep.subr.mxu0 0.0
        %1665 = vmatpush2.xpose.msra.mxu0 0.0
        %1666 = vmatprep.subr.mxu0 0.0
        %1667 = vmatpush2.xpose.msra.mxu0 0.0
        %1668 = vmatprep.subr.mxu0 0.0
        %1669 = vmatpush2.xpose.msra.mxu0 0.0
        %1670 = vmatprep.subr.mxu0 0.0
        %1671 = vmatpush2.xpose.msra.mxu0 0.0
        %1672 = vmatprep.subr.mxu0 0.0
        %1673 = vmatpush2.xpose.msra.mxu0 0.0
        %1674 = vmatprep.subr.mxu0 0.0
        %1675 = vmatpush2.xpose.msra.mxu0 0.0
        %1676 = vmatprep.subr.mxu0 0.0
        %1677 = vmatpush2.xpose.msra.mxu0 0.0
        %1678 = vmatprep.subr.mxu0 0.0
        %1679 = vmatpush2.xpose.msra.mxu0 0.0
        %1680 = vmatprep.subr.mxu0 0.0
        %1681 = vmatpush2.xpose.msra.mxu0 0.0
        %1682 = vmatprep.subr.mxu0 0.0
        %1683 = vmatpush2.xpose.msra.mxu0 0.0
        %1684 = vmatprep.subr.mxu0 0.0
        %1685 = vmatpush2.xpose.msra.mxu0 0.0
        %1686 = vmatprep.subr.mxu0 0.0
        %1687 = vmatpush2.xpose.msra.mxu0 0.0
        %1688 = vmatprep.subr.mxu0 0.0
        %1689 = vmatpush2.xpose.msra.mxu0 0.0
        %1690 = vmatprep.subr.mxu0 0.0
        %1691 = vmatpush2.xpose.msra.mxu0 0.0
        %1692 = vmatprep.mubr.f32.mxu0 0.0
        %1693 = vmatmul.mubr.f32.gmra.mxu0 %v1624
        %v1694 = vpop.f32.mrf.mxu0
        %v1695 = vadd.f32 0.0, %v1694
        %v1696 = vpop.f32.mrf.mxu0
        %1697 = vdwg.mxu0
        %1698 = vrot.lane.b32.xlu0 %v1621, 96
        %v1699 = vpop.permute.xlu0 %1698
        %v1700 = vsel %vm874, %v1621, 0
        %v1702 = vsel %vm874, %v1699, 0
        %1704 = vmatprep.subr.mxu0 0.0
        %1705 = vmatpush1.xpose.msra.mxu0 0.0
        %1706 = vmatprep.subr.mxu0 0.0
        %1707 = vmatpush1.xpose.msra.mxu0 0.0
        %1708 = vmatprep.subr.mxu0 0.0
        %1709 = vmatpush1.xpose.msra.mxu0 0.0
        %1710 = vmatprep.subr.mxu0 0.0
        %1711 = vmatpush1.xpose.msra.mxu0 0.0
        %1712 = vmatprep.subr.mxu0 0.0
        %1713 = vmatpush1.xpose.msra.mxu0 0.0
        %1714 = vmatprep.subr.mxu0 0.0
        %1715 = vmatpush1.xpose.msra.mxu0 0.0
        %1716 = vmatprep.subr.mxu0 0.0
        %1717 = vmatpush1.xpose.msra.mxu0 0.0
        %1718 = vmatprep.subr.mxu0 0.0
        %1719 = vmatpush1.xpose.msra.mxu0 0.0
        %1720 = vmatprep.subr.mxu0 0.0
        %1721 = vmatpush1.xpose.msra.mxu0 0.0
        %1722 = vmatprep.subr.mxu0 0.0
        %1723 = vmatpush1.xpose.msra.mxu0 0.0
        %1724 = vmatprep.subr.mxu0 0.0
        %1725 = vmatpush1.xpose.msra.mxu0 0.0
        %1726 = vmatprep.subr.mxu0 0.0
        %1727 = vmatpush1.xpose.msra.mxu0 0.0
        %1728 = vmatprep.subr.mxu0 0.0
        %1729 = vmatpush1.xpose.msra.mxu0 0.0
        %1730 = vmatprep.subr.mxu0 0.0
        %1731 = vmatpush1.xpose.msra.mxu0 0.0
        %1732 = vmatprep.subr.mxu0 0.0
        %1733 = vmatpush1.xpose.msra.mxu0 0.0
        %1734 = vmatprep.subr.mxu0 0.0
        %1735 = vmatpush1.xpose.msra.mxu0 %v1702
        %1736 = vmatprep.subr.mxu0 0.0
        %1737 = vmatpush2.xpose.msra.mxu0 0.0
        %1738 = vmatprep.subr.mxu0 0.0
        %1739 = vmatpush2.xpose.msra.mxu0 0.0
        %1740 = vmatprep.subr.mxu0 0.0
        %1741 = vmatpush2.xpose.msra.mxu0 0.0
        %1742 = vmatprep.subr.mxu0 0.0
        %1743 = vmatpush2.xpose.msra.mxu0 0.0
        %1744 = vmatprep.subr.mxu0 0.0
        %1745 = vmatpush2.xpose.msra.mxu0 0.0
        %1746 = vmatprep.subr.mxu0 0.0
        %1747 = vmatpush2.xpose.msra.mxu0 0.0
        %1748 = vmatprep.subr.mxu0 0.0
        %1749 = vmatpush2.xpose.msra.mxu0 0.0
        %1750 = vmatprep.subr.mxu0 0.0
        %1751 = vmatpush2.xpose.msra.mxu0 0.0
        %1752 = vmatprep.subr.mxu0 0.0
        %1753 = vmatpush2.xpose.msra.mxu0 0.0
        %1754 = vmatprep.subr.mxu0 0.0
        %1755 = vmatpush2.xpose.msra.mxu0 0.0
        %1756 = vmatprep.subr.mxu0 0.0
        %1757 = vmatpush2.xpose.msra.mxu0 0.0
        %1758 = vmatprep.subr.mxu0 0.0
        %1759 = vmatpush2.xpose.msra.mxu0 0.0
        %1760 = vmatprep.subr.mxu0 0.0
        %1761 = vmatpush2.xpose.msra.mxu0 0.0
        %1762 = vmatprep.subr.mxu0 0.0
        %1763 = vmatpush2.xpose.msra.mxu0 0.0
        %1764 = vmatprep.subr.mxu0 0.0
        %1765 = vmatpush2.xpose.msra.mxu0 0.0
        %1766 = vmatprep.subr.mxu0 0.0
        %1767 = vmatpush2.xpose.msra.mxu0 0.0
        %1768 = vmatprep.mubr.f32.mxu0 0.0
        %1769 = vmatmul.mubr.f32.gmra.mxu0 %v1700
        %v1770 = vpop.f32.mrf.mxu0
        %v1771 = vadd.f32 0.0, %v1770
        %v1772 = vpop.f32.mrf.mxu0
        %1773 = vdwg.mxu0
        %v1774 = vmul.f32 %v1695, 0.25
        %v1775 = vmul.f32 %v1771, 0.25
        %v1776 = vsel %vm1027, %v1774, -inf
        %1777 = vmax.xlane.f32.xlu0 %v1776
        %v1778 = vpop.xlane.xlu0 %1777
        %v1779 = vsel %vm1027, %v1775, -inf
        %1780 = vmax.xlane.f32.xlu0 %v1779
        %v1781 = vpop.xlane.xlu0 %1780
        %v1782 = vsub.f32 %v1774, %v1778
        %v1783 = vsub.f32 %v1775, %v1781
        %v1784 = vmul.f32 %v1782, 1.442695
        %v1785 = vpow.pop %v1784
        %v1786 = vmul.f32 %v1783, 1.442695
        %v1787 = vpow.pop %v1786
        %v1788 = vsel %vm1027, %v1785, 0.0
        %1789 = vadd.xlane.f32.xlu0 %v1788
        %v1790 = vpop.xlane.xlu0 %1789
        %v1791 = vsel %vm1027, %v1787, 0.0
        %1792 = vadd.xlane.f32.xlu0 %v1791
        %v1793 = vpop.xlane.xlu0 %1792
        %v1794 = vrcp.pop %v1790
        %v1795 = vrcp.pop %v1793
        %v1796 = vmul.f32 %v1785, %v1794
        %v1797 = vmul.f32 %v1787, %v1795
        %1798 = vrot.lane.b32.xlu0 %v1616, 64
        %v1799 = vpop.permute.xlu0 %1798
        %v1802 = vsel %vm1027, %v1796, 0
        %1804 = vmatprep.subr.mxu0 0.0
        %1805 = vmatpush1.msra.mxu0 0.0
        %1806 = vmatprep.subr.mxu0 0.0
        %1807 = vmatpush1.msra.mxu0 0.0
        %1808 = vmatprep.subr.mxu0 0.0
        %1809 = vmatpush1.msra.mxu0 0.0
        %1810 = vmatprep.subr.mxu0 0.0
        %1811 = vmatpush1.msra.mxu0 0.0
        %1812 = vmatprep.subr.mxu0 0.0
        %1813 = vmatpush1.msra.mxu0 0.0
        %1814 = vmatprep.subr.mxu0 0.0
        %1815 = vmatpush1.msra.mxu0 0.0
        %1816 = vmatprep.subr.mxu0 0.0
        %1817 = vmatpush1.msra.mxu0 0.0
        %1818 = vmatprep.subr.mxu0 0.0
        %1819 = vmatpush1.msra.mxu0 0.0
        %1820 = vmatprep.subr.mxu0 0.0
        %1821 = vmatpush1.msra.mxu0 0.0
        %1822 = vmatprep.subr.mxu0 0.0
        %1823 = vmatpush1.msra.mxu0 0.0
        %1824 = vmatprep.subr.mxu0 0.0
        %1825 = vmatpush1.msra.mxu0 0.0
        %1826 = vmatprep.subr.mxu0 0.0
        %1827 = vmatpush1.msra.mxu0 0.0
        %1828 = vmatprep.subr.mxu0 0.0
        %1829 = vmatpush1.msra.mxu0 0.0
        %1830 = vmatprep.subr.mxu0 0.0
        %1831 = vmatpush1.msra.mxu0 0.0
        %1832 = vmatprep.subr.mxu0 0.0
        %1833 = vmatpush1.msra.mxu0 0.0
        %1834 = vmatprep.subr.mxu0 0.0
        %1835 = vmatpush1.msra.mxu0 %v1799
        %1836 = vmatprep.subr.mxu0 0.0
        %1837 = vmatpush2.msra.mxu0 0.0
        %1838 = vmatprep.subr.mxu0 0.0
        %1839 = vmatpush2.msra.mxu0 0.0
        %1840 = vmatprep.subr.mxu0 0.0
        %1841 = vmatpush2.msra.mxu0 0.0
        %1842 = vmatprep.subr.mxu0 0.0
        %1843 = vmatpush2.msra.mxu0 0.0
        %1844 = vmatprep.subr.mxu0 0.0
        %1845 = vmatpush2.msra.mxu0 0.0
        %1846 = vmatprep.subr.mxu0 0.0
        %1847 = vmatpush2.msra.mxu0 0.0
        %1848 = vmatprep.subr.mxu0 0.0
        %1849 = vmatpush2.msra.mxu0 0.0
        %1850 = vmatprep.subr.mxu0 0.0
        %1851 = vmatpush2.msra.mxu0 0.0
        %1852 = vmatprep.subr.mxu0 0.0
        %1853 = vmatpush2.msra.mxu0 0.0
        %1854 = vmatprep.subr.mxu0 0.0
        %1855 = vmatpush2.msra.mxu0 0.0
        %1856 = vmatprep.subr.mxu0 0.0
        %1857 = vmatpush2.msra.mxu0 0.0
        %1858 = vmatprep.subr.mxu0 0.0
        %1859 = vmatpush2.msra.mxu0 0.0
        %1860 = vmatprep.subr.mxu0 0.0
        %1861 = vmatpush2.msra.mxu0 0.0
        %1862 = vmatprep.subr.mxu0 0.0
        %1863 = vmatpush2.msra.mxu0 0.0
        %1864 = vmatprep.subr.mxu0 0.0
        %1865 = vmatpush2.msra.mxu0 0.0
        %1866 = vmatprep.subr.mxu0 0.0
        %1867 = vmatpush2.msra.mxu0 0.0
        %1868 = vmatprep.mubr.f32.mxu0 0.0
        %1869 = vmatmul.mubr.f32.gmra.mxu0 %v1802
        %v1870 = vpop.f32.mrf.mxu0
        %v1871 = vadd.f32 0.0, %v1870
        %v1872 = vpop.f32.mrf.mxu0
        %1873 = vdwg.mxu0
        %1874 = vrot.lane.b32.xlu0 %v1621, 64
        %v1875 = vpop.permute.xlu0 %1874
        %v1878 = vsel %vm1027, %v1797, 0
        %1880 = vmatprep.subr.mxu0 0.0
        %1881 = vmatpush1.msra.mxu0 0.0
        %1882 = vmatprep.subr.mxu0 0.0
        %1883 = vmatpush1.msra.mxu0 0.0
        %1884 = vmatprep.subr.mxu0 0.0
        %1885 = vmatpush1.msra.mxu0 0.0
        %1886 = vmatprep.subr.mxu0 0.0
        %1887 = vmatpush1.msra.mxu0 0.0
        %1888 = vmatprep.subr.mxu0 0.0
        %1889 = vmatpush1.msra.mxu0 0.0
        %1890 = vmatprep.subr.mxu0 0.0
        %1891 = vmatpush1.msra.mxu0 0.0
        %1892 = vmatprep.subr.mxu0 0.0
        %1893 = vmatpush1.msra.mxu0 0.0
        %1894 = vmatprep.subr.mxu0 0.0
        %1895 = vmatpush1.msra.mxu0 0.0
        %1896 = vmatprep.subr.mxu0 0.0
        %1897 = vmatpush1.msra.mxu0 0.0
        %1898 = vmatprep.subr.mxu0 0.0
        %1899 = vmatpush1.msra.mxu0 0.0
        %1900 = vmatprep.subr.mxu0 0.0
        %1901 = vmatpush1.msra.mxu0 0.0
        %1902 = vmatprep.subr.mxu0 0.0
        %1903 = vmatpush1.msra.mxu0 0.0
        %1904 = vmatprep.subr.mxu0 0.0
        %1905 = vmatpush1.msra.mxu0 0.0
        %1906 = vmatprep.subr.mxu0 0.0
        %1907 = vmatpush1.msra.mxu0 0.0
        %1908 = vmatprep.subr.mxu0 0.0
        %1909 = vmatpush1.msra.mxu0 0.0
        %1910 = vmatprep.subr.mxu0 0.0
        %1911 = vmatpush1.msra.mxu0 %v1875
        %1912 = vmatprep.subr.mxu0 0.0
        %1913 = vmatpush2.msra.mxu0 0.0
        %1914 = vmatprep.subr.mxu0 0.0
        %1915 = vmatpush2.msra.mxu0 0.0
        %1916 = vmatprep.subr.mxu0 0.0
        %1917 = vmatpush2.msra.mxu0 0.0
        %1918 = vmatprep.subr.mxu0 0.0
        %1919 = vmatpush2.msra.mxu0 0.0
        %1920 = vmatprep.subr.mxu0 0.0
        %1921 = vmatpush2.msra.mxu0 0.0
        %1922 = vmatprep.subr.mxu0 0.0
        %1923 = vmatpush2.msra.mxu0 0.0
        %1924 = vmatprep.subr.mxu0 0.0
        %1925 = vmatpush2.msra.mxu0 0.0
        %1926 = vmatprep.subr.mxu0 0.0
        %1927 = vmatpush2.msra.mxu0 0.0
        %1928 = vmatprep.subr.mxu0 0.0
        %1929 = vmatpush2.msra.mxu0 0.0
        %1930 = vmatprep.subr.mxu0 0.0
        %1931 = vmatpush2.msra.mxu0 0.0
        %1932 = vmatprep.subr.mxu0 0.0
        %1933 = vmatpush2.msra.mxu0 0.0
        %1934 = vmatprep.subr.mxu0 0.0
        %1935 = vmatpush2.msra.mxu0 0.0
        %1936 = vmatprep.subr.mxu0 0.0
        %1937 = vmatpush2.msra.mxu0 0.0
        %1938 = vmatprep.subr.mxu0 0.0
        %1939 = vmatpush2.msra.mxu0 0.0
        %1940 = vmatprep.subr.mxu0 0.0
        %1941 = vmatpush2.msra.mxu0 0.0
        %1942 = vmatprep.subr.mxu0 0.0
        %1943 = vmatpush2.msra.mxu0 0.0
        %1944 = vmatprep.mubr.f32.mxu0 0.0
        %1945 = vmatmul.mubr.f32.gmra.mxu0 %v1878
        %v1946 = vpop.f32.mrf.mxu0
        %v1947 = vadd.f32 0.0, %v1946
        %v1948 = vpop.f32.mrf.mxu0
        %1949 = vdwg.mxu0
        %1951 = vrot.lane.b32.xlu0 %v1947, 16
        %v1952 = vpop.permute.xlu0 %1951
        %v1954 = vsel %vm874, %v1871, %v1952
        %s1955 = scalar_lea.vmem %s8, 32
        %v1956 = vld [vmem:[%s1955] sm:$0xff]
        %v1957 = vld [vmem:[%s1955 + $0x8] sm:$0xff]
        %v1958 = vld [vmem:[%s1955 + $0x10] sm:$0xff]
        %v1959 = vld [vmem:[%s1955 + $0x18] sm:$0xff]
        %s1960 = scalar_lea.vmem %s9, 1
        %v1961 = vld [vmem:[%s1960] sm:$0x1]
        %v1963 = vlaneseq
        %v1964 = vshrl.u32 %v1963, 7
        %v1965 = vsub.s32 0, %v1964
        %v1966 = vrot.slane %v1961, %v1965
        %v1969 = vsel %vm756, %v1954, 0
        %1971 = vmatprep.subr.mxu0 0.0
        %1972 = vmatpush1.msra.mxu0 0.0
        %1973 = vmatprep.subr.mxu0 0.0
        %1974 = vmatpush1.msra.mxu0 0.0
        %1975 = vmatprep.subr.mxu0 0.0
        %1976 = vmatpush1.msra.mxu0 0.0
        %1977 = vmatprep.subr.mxu0 0.0
        %1978 = vmatpush1.msra.mxu0 0.0
        %1979 = vmatprep.subr.mxu0 0.0
        %1980 = vmatpush1.msra.mxu0 0.0
        %1981 = vmatprep.subr.mxu0 0.0
        %1982 = vmatpush1.msra.mxu0 0.0
        %1983 = vmatprep.subr.mxu0 0.0
        %1984 = vmatpush1.msra.mxu0 0.0
        %1985 = vmatprep.subr.mxu0 0.0
        %1986 = vmatpush1.msra.mxu0 0.0
        %1987 = vmatprep.subr.mxu0 0.0
        %1988 = vmatpush1.msra.mxu0 0.0
        %1989 = vmatprep.subr.mxu0 0.0
        %1990 = vmatpush1.msra.mxu0 0.0
        %1991 = vmatprep.subr.mxu0 0.0
        %1992 = vmatpush1.msra.mxu0 0.0
        %1993 = vmatprep.subr.mxu0 0.0
        %1994 = vmatpush1.msra.mxu0 0.0
        %1995 = vmatprep.subr.mxu0 0.0
        %1996 = vmatpush1.msra.mxu0 %v1959
        %1997 = vmatprep.subr.mxu0 0.0
        %1998 = vmatpush1.msra.mxu0 %v1958
        %1999 = vmatprep.subr.mxu0 0.0
        %2000 = vmatpush1.msra.mxu0 %v1957
        %2001 = vmatprep.subr.mxu0 0.0
        %2002 = vmatpush1.msra.mxu0 %v1956
        %2003 = vmatprep.subr.mxu0 0.0
        %2004 = vmatpush2.msra.mxu0 0.0
        %2005 = vmatprep.subr.mxu0 0.0
        %2006 = vmatpush2.msra.mxu0 0.0
        %2007 = vmatprep.subr.mxu0 0.0
        %2008 = vmatpush2.msra.mxu0 0.0
        %2009 = vmatprep.subr.mxu0 0.0
        %2010 = vmatpush2.msra.mxu0 0.0
        %2011 = vmatprep.subr.mxu0 0.0
        %2012 = vmatpush2.msra.mxu0 0.0
        %2013 = vmatprep.subr.mxu0 0.0
        %2014 = vmatpush2.msra.mxu0 0.0
        %2015 = vmatprep.subr.mxu0 0.0
        %2016 = vmatpush2.msra.mxu0 0.0
        %2017 = vmatprep.subr.mxu0 0.0
        %2018 = vmatpush2.msra.mxu0 0.0
        %2019 = vmatprep.subr.mxu0 0.0
        %2020 = vmatpush2.msra.mxu0 0.0
        %2021 = vmatprep.subr.mxu0 0.0
        %2022 = vmatpush2.msra.mxu0 0.0
        %2023 = vmatprep.subr.mxu0 0.0
        %2024 = vmatpush2.msra.mxu0 0.0
        %2025 = vmatprep.subr.mxu0 0.0
        %2026 = vmatpush2.msra.mxu0 0.0
        %2027 = vmatprep.subr.mxu0 0.0
        %2028 = vmatpush2.msra.mxu0 0.0
        %2029 = vmatprep.subr.mxu0 0.0
        %2030 = vmatpush2.msra.mxu0 0.0
        %2031 = vmatprep.subr.mxu0 0.0
        %2032 = vmatpush2.msra.mxu0 0.0
        %2033 = vmatprep.subr.mxu0 0.0
        %2034 = vmatpush2.msra.mxu0 0.0
        %2035 = vmatprep.mubr.f32.mxu0 0.0
        %2036 = vmatmul.mubr.f32.gmra.mxu0 %v1969
        %v2037 = vpop.f32.mrf.mxu0
        %v2038 = vadd.f32 %v1966, %v2037
        %v2039 = vpop.f32.mrf.mxu0
        %2040 = vdwg.mxu0
        %v2041 = vadd.f32 %v2038, %v1532
        %s2042 = scalar_lea.vmem %s10, 1
        %v2043 = vld [vmem:[%s2042] sm:$0x1]
        %s2044 = scalar_lea.vmem %s11, 1
        %v2045 = vld [vmem:[%s2044] sm:$0x1]
        %v2046 = vsel %vm756, %v2041, 0.0
        %2047 = vadd.xlane.f32.xlu0 %v2046
        %v2048 = vpop.xlane.xlu0 %2047
        %v2049 = vmul.f32 %v2048, %v760
        %v2050 = vsub.f32 %v2041, %v2049
        %v2051 = vmul.f32 %v2050, %v2050
        %v2052 = vsel %vm756, %v2051, 0.0
        %2053 = vadd.xlane.f32.xlu0 %v2052
        %v2054 = vpop.xlane.xlu0 %2053
        %v2055 = vmul.f32 %v2054, %v760
        %v2056 = vadd.f32 %v2055, 1e-12
        %v2057 = vrsqrt.pop %v2056
        %v2058 = vmul.f32 %v2050, %v2057
        %v2060 = vlaneseq
        %v2061 = vshrl.u32 %v2060, 7
        %v2062 = vsub.s32 0, %v2061
        %v2063 = vrot.slane %v2043, %v2062
        %v2065 = vmul.f32 %v2058, %v2063
        %v2067 = vlaneseq
        %v2068 = vshrl.u32 %v2067, 7
        %v2069 = vsub.s32 0, %v2068
        %v2070 = vrot.slane %v2045, %v2069
        %v2072 = vadd.f32 %v2065, %v2070
        %s2073 = scalar_lea.vmem %s12, 32
        %v2074 = vld [vmem:[%s2073] sm:$0xff]
        %v2075 = vld [vmem:[%s2073 + $0x8] sm:$0xff]
        %v2076 = vld [vmem:[%s2073 + $0x10] sm:$0xff]
        %v2077 = vld [vmem:[%s2073 + $0x18] sm:$0xff]
        %s2078 = scalar_lea.vmem %s13, 1
        %v2079 = vld [vmem:[%s2078] sm:$0x1]
        %v2081 = vlaneseq
        %v2082 = vshrl.u32 %v2081, 7
        %v2083 = vsub.s32 0, %v2082
        %v2084 = vrot.slane %v2079, %v2083
        %v2087 = vsel %vm756, %v2072, 0
        %2089 = vmatprep.subr.mxu0 0.0
        %2090 = vmatpush1.msra.mxu0 0.0
        %2091 = vmatprep.subr.mxu0 0.0
        %2092 = vmatpush1.msra.mxu0 0.0
        %2093 = vmatprep.subr.mxu0 0.0
        %2094 = vmatpush1.msra.mxu0 0.0
        %2095 = vmatprep.subr.mxu0 0.0
        %2096 = vmatpush1.msra.mxu0 0.0
        %2097 = vmatprep.subr.mxu0 0.0
        %2098 = vmatpush1.msra.mxu0 0.0
        %2099 = vmatprep.subr.mxu0 0.0
        %2100 = vmatpush1.msra.mxu0 0.0
        %2101 = vmatprep.subr.mxu0 0.0
        %2102 = vmatpush1.msra.mxu0 0.0
        %2103 = vmatprep.subr.mxu0 0.0
        %2104 = vmatpush1.msra.mxu0 0.0
        %2105 = vmatprep.subr.mxu0 0.0
        %2106 = vmatpush1.msra.mxu0 0.0
        %2107 = vmatprep.subr.mxu0 0.0
        %2108 = vmatpush1.msra.mxu0 0.0
        %2109 = vmatprep.subr.mxu0 0.0
        %2110 = vmatpush1.msra.mxu0 0.0
        %2111 = vmatprep.subr.mxu0 0.0
        %2112 = vmatpush1.msra.mxu0 0.0
        %2113 = vmatprep.subr.mxu0 0.0
        %2114 = vmatpush1.msra.mxu0 %v2077
        %2115 = vmatprep.subr.mxu0 0.0
        %2116 = vmatpush1.msra.mxu0 %v2076
        %2117 = vmatprep.subr.mxu0 0.0
        %2118 = vmatpush1.msra.mxu0 %v2075
        %2119 = vmatprep.subr.mxu0 0.0
        %2120 = vmatpush1.msra.mxu0 %v2074
        %2121 = vmatprep.subr.mxu0 0.0
        %2122 = vmatpush2.msra.mxu0 0.0
        %2123 = vmatprep.subr.mxu0 0.0
        %2124 = vmatpush2.msra.mxu0 0.0
        %2125 = vmatprep.subr.mxu0 0.0
        %2126 = vmatpush2.msra.mxu0 0.0
        %2127 = vmatprep.subr.mxu0 0.0
        %2128 = vmatpush2.msra.mxu0 0.0
        %2129 = vmatprep.subr.mxu0 0.0
        %2130 = vmatpush2.msra.mxu0 0.0
        %2131 = vmatprep.subr.mxu0 0.0
        %2132 = vmatpush2.msra.mxu0 0.0
        %2133 = vmatprep.subr.mxu0 0.0
        %2134 = vmatpush2.msra.mxu0 0.0
        %2135 = vmatprep.subr.mxu0 0.0
        %2136 = vmatpush2.msra.mxu0 0.0
        %2137 = vmatprep.subr.mxu0 0.0
        %2138 = vmatpush2.msra.mxu0 0.0
        %2139 = vmatprep.subr.mxu0 0.0
        %2140 = vmatpush2.msra.mxu0 0.0
        %2141 = vmatprep.subr.mxu0 0.0
        %2142 = vmatpush2.msra.mxu0 0.0
        %2143 = vmatprep.subr.mxu0 0.0
        %2144 = vmatpush2.msra.mxu0 0.0
        %2145 = vmatprep.subr.mxu0 0.0
        %2146 = vmatpush2.msra.mxu0 0.0
        %2147 = vmatprep.subr.mxu0 0.0
        %2148 = vmatpush2.msra.mxu0 0.0
        %2149 = vmatprep.subr.mxu0 0.0
        %2150 = vmatpush2.msra.mxu0 0.0
        %2151 = vmatprep.subr.mxu0 0.0
        %2152 = vmatpush2.msra.mxu0 0.0
        %2153 = vmatprep.mubr.f32.mxu0 0.0
        %2154 = vmatmul.mubr.f32.gmra.mxu0 %v2087
        %v2155 = vpop.f32.mrf.mxu0
        %v2156 = vadd.f32 %v2084, %v2155
        %v2157 = vpop.f32.mrf.mxu0
        %2158 = vdwg.mxu0
        %v2159 = vmul.f32 %v2156, %v2156
        %v2160 = vmul.f32 %v2156, %v2159
        %v2161 = vmul.f32 %v2160, 0.044715
        %v2162 = vadd.f32 %v2156, %v2161
        %v2163 = vmul.f32 %v2162, 0.7978846
        %v2164 = vtanh.pop %v2163
        %v2165 = vadd.f32 %v2164, 1.0
        %v2166 = vmul.f32 %v2165, 0.5
        %v2167 = vmul.f32 %v2156, %v2166
        %s2168 = scalar_lea.vmem %s14, 64
        %v2169 = vld [vmem:[%s2168] sm:$0xff]
        %v2170 = vld [vmem:[%s2168 + $0x8] sm:$0xff]
        %v2171 = vld [vmem:[%s2168 + $0x10] sm:$0xff]
        %v2172 = vld [vmem:[%s2168 + $0x18] sm:$0xff]
        %v2173 = vld [vmem:[%s2168 + $0x20] sm:$0xff]
        %v2174 = vld [vmem:[%s2168 + $0x28] sm:$0xff]
        %v2175 = vld [vmem:[%s2168 + $0x30] sm:$0xff]
        %v2176 = vld [vmem:[%s2168 + $0x38] sm:$0xff]
        %s2177 = scalar_lea.vmem %s15, 1
        %v2178 = vld [vmem:[%s2177] sm:$0x1]
        %v2180 = vlaneseq
        %v2181 = vshrl.u32 %v2180, 7
        %v2182 = vsub.s32 0, %v2181
        %v2183 = vrot.slane %v2178, %v2182
        %v2186 = vsel %vm1429, %v2167, 0
        %2188 = vmatprep.subr.mxu0 0.0
        %2189 = vmatpush1.msra.mxu0 0.0
        %2190 = vmatprep.subr.mxu0 0.0
        %2191 = vmatpush1.msra.mxu0 0.0
        %2192 = vmatprep.subr.mxu0 0.0
        %2193 = vmatpush1.msra.mxu0 0.0
        %2194 = vmatprep.subr.mxu0 0.0
        %2195 = vmatpush1.msra.mxu0 0.0
        %2196 = vmatprep.subr.mxu0 0.0
        %2197 = vmatpush1.msra.mxu0 0.0
        %2198 = vmatprep.subr.mxu0 0.0
        %2199 = vmatpush1.msra.mxu0 0.0
        %2200 = vmatprep.subr.mxu0 0.0
        %2201 = vmatpush1.msra.mxu0 0.0
        %2202 = vmatprep.subr.mxu0 0.0
        %2203 = vmatpush1.msra.mxu0 0.0
        %2204 = vmatprep.subr.mxu0 0.0
        %2205 = vmatpush1.msra.mxu0 %v2176
        %2206 = vmatprep.subr.mxu0 0.0
        %2207 = vmatpush1.msra.mxu0 %v2175
        %2208 = vmatprep.subr.mxu0 0.0
        %2209 = vmatpush1.msra.mxu0 %v2174
        %2210 = vmatprep.subr.mxu0 0.0
        %2211 = vmatpush1.msra.mxu0 %v2173
        %2212 = vmatprep.subr.mxu0 0.0
        %2213 = vmatpush1.msra.mxu0 %v2172
        %2214 = vmatprep.subr.mxu0 0.0
        %2215 = vmatpush1.msra.mxu0 %v2171
        %2216 = vmatprep.subr.mxu0 0.0
        %2217 = vmatpush1.msra.mxu0 %v2170
        %2218 = vmatprep.subr.mxu0 0.0
        %2219 = vmatpush1.msra.mxu0 %v2169
        %2220 = vmatprep.subr.mxu0 0.0
        %2221 = vmatpush2.msra.mxu0 0.0
        %2222 = vmatprep.subr.mxu0 0.0
        %2223 = vmatpush2.msra.mxu0 0.0
        %2224 = vmatprep.subr.mxu0 0.0
        %2225 = vmatpush2.msra.mxu0 0.0
        %2226 = vmatprep.subr.mxu0 0.0
        %2227 = vmatpush2.msra.mxu0 0.0
        %2228 = vmatprep.subr.mxu0 0.0
        %2229 = vmatpush2.msra.mxu0 0.0
        %2230 = vmatprep.subr.mxu0 0.0
        %2231 = vmatpush2.msra.mxu0 0.0
        %2232 = vmatprep.subr.mxu0 0.0
        %2233 = vmatpush2.msra.mxu0 0.0
        %2234 = vmatprep.subr.mxu0 0.0
        %2235 = vmatpush2.msra.mxu0 0.0
        %2236 = vmatprep.subr.mxu0 0.0
        %2237 = vmatpush2.msra.mxu0 0.0
        %2238 = vmatprep.subr.mxu0 0.0
        %2239 = vmatpush2.msra.mxu0 0.0
        %2240 = vmatprep.subr.mxu0 0.0
        %2241 = vmatpush2.msra.mxu0 0.0
        %2242 = vmatprep.subr.mxu0 0.0
        %2243 = vmatpush2.msra.mxu0 0.0
        %2244 = vmatprep.subr.mxu0 0.0
        %2245 = vmatpush2.msra.mxu0 0.0
        %2246 = vmatprep.subr.mxu0 0.0
        %2247 = vmatpush2.msra.mxu0 0.0
        %2248 = vmatprep.subr.mxu0 0.0
        %2249 = vmatpush2.msra.mxu0 0.0
        %2250 = vmatprep.subr.mxu0 0.0
        %2251 = vmatpush2.msra.mxu0 0.0
        %2252 = vmatprep.mubr.f32.mxu0 0.0
        %2253 = vmatmul.mubr.f32.gmra.mxu0 %v2186
        %v2254 = vpop.f32.mrf.mxu0
        %v2255 = vadd.f32 %v2183, %v2254
        %v2256 = vpop.f32.mrf.mxu0
        %2257 = vdwg.mxu0
        %v2258 = vadd.f32 %v2255, %v2072
        %s2259 = scalar_lea.vmem %s16, 1
        %v2260 = vld [vmem:[%s2259] sm:$0x1]
        %s2261 = scalar_lea.vmem %s17, 1
        %v2262 = vld [vmem:[%s2261] sm:$0x1]
        %v2263 = vsel %vm756, %v2258, 0.0
        %2264 = vadd.xlane.f32.xlu0 %v2263
        %v2265 = vpop.xlane.xlu0 %2264
        %v2266 = vmul.f32 %v2265, %v760
        %v2267 = vsub.f32 %v2258, %v2266
        %v2268 = vmul.f32 %v2267, %v2267
        %v2269 = vsel %vm756, %v2268, 0.0
        %2270 = vadd.xlane.f32.xlu0 %v2269
        %v2271 = vpop.xlane.xlu0 %2270
        %v2272 = vmul.f32 %v2271, %v760
        %v2273 = vadd.f32 %v2272, 1e-12
        %v2274 = vrsqrt.pop %v2273
        %v2275 = vmul.f32 %v2267, %v2274
        %v2277 = vlaneseq
        %v2278 = vshrl.u32 %v2277, 7
        %v2279 = vsub.s32 0, %v2278
        %v2280 = vrot.slane %v2260, %v2279
        %v2282 = vmul.f32 %v2275, %v2280
        %v2284 = vlaneseq
        %v2285 = vshrl.u32 %v2284, 7
        %v2286 = vsub.s32 0, %v2285
        %v2287 = vrot.slane %v2262, %v2286
        %v2289 = vadd.f32 %v2282, %v2287
        %v2290 = vld [vmem:[%s18] sm:$0xff]
        %v2291 = vld [vmem:[%s18 + $0x8] sm:$0xff]
        %v2292 = vld [vmem:[%s18 + $0x10] sm:$0xff]
        %v2293 = vld [vmem:[%s18 + $0x18] sm:$0xff]
        %v2294 = vld [vmem:[%s20] sm:$0x1]
        %v2296 = vlaneseq
        %v2297 = vshrl.u32 %v2296, 7
        %v2298 = vsub.s32 0, %v2297
        %v2299 = vrot.slane %v2294, %v2298
        %v2302 = vsel %vm756, %v2289, 0
        %2304 = vmatprep.subr.mxu0 0.0
        %2305 = vmatpush1.msra.mxu0 0.0
        %2306 = vmatprep.subr.mxu0 0.0
        %2307 = vmatpush1.msra.mxu0 0.0
        %2308 = vmatprep.subr.mxu0 0.0
        %2309 = vmatpush1.msra.mxu0 0.0
        %2310 = vmatprep.subr.mxu0 0.0
        %2311 = vmatpush1.msra.mxu0 0.0
        %2312 = vmatprep.subr.mxu0 0.0
        %2313 = vmatpush1.msra.mxu0 0.0
        %2314 = vmatprep.subr.mxu0 0.0
        %2315 = vmatpush1.msra.mxu0 0.0
        %2316 = vmatprep.subr.mxu0 0.0
        %2317 = vmatpush1.msra.mxu0 0.0
        %2318 = vmatprep.subr.mxu0 0.0
        %2319 = vmatpush1.msra.mxu0 0.0
        %2320 = vmatprep.subr.mxu0 0.0
        %2321 = vmatpush1.msra.mxu0 0.0
        %2322 = vmatprep.subr.mxu0 0.0
        %2323 = vmatpush1.msra.mxu0 0.0
        %2324 = vmatprep.subr.mxu0 0.0
        %2325 = vmatpush1.msra.mxu0 0.0
        %2326 = vmatprep.subr.mxu0 0.0
        %2327 = vmatpush1.msra.mxu0 0.0
        %2328 = vmatprep.subr.mxu0 0.0
        %2329 = vmatpush1.msra.mxu0 %v2293
        %2330 = vmatprep.subr.mxu0 0.0
        %2331 = vmatpush1.msra.mxu0 %v2292
        %2332 = vmatprep.subr.mxu0 0.0
        %2333 = vmatpush1.msra.mxu0 %v2291
        %2334 = vmatprep.subr.mxu0 0.0
        %2335 = vmatpush1.msra.mxu0 %v2290
        %2336 = vmatprep.subr.mxu0 0.0
        %2337 = vmatpush2.msra.mxu0 0.0
        %2338 = vmatprep.subr.mxu0 0.0
        %2339 = vmatpush2.msra.mxu0 0.0
        %2340 = vmatprep.subr.mxu0 0.0
        %2341 = vmatpush2.msra.mxu0 0.0
        %2342 = vmatprep.subr.mxu0 0.0
        %2343 = vmatpush2.msra.mxu0 0.0
        %2344 = vmatprep.subr.mxu0 0.0
        %2345 = vmatpush2.msra.mxu0 0.0
        %2346 = vmatprep.subr.mxu0 0.0
        %2347 = vmatpush2.msra.mxu0 0.0
        %2348 = vmatprep.subr.mxu0 0.0
        %2349 = vmatpush2.msra.mxu0 0.0
        %2350 = vmatprep.subr.mxu0 0.0
        %2351 = vmatpush2.msra.mxu0 0.0
        %2352 = vmatprep.subr.mxu0 0.0
        %2353 = vmatpush2.msra.mxu0 0.0
        %2354 = vmatprep.subr.mxu0 0.0
        %2355 = vmatpush2.msra.mxu0 0.0
        %2356 = vmatprep.subr.mxu0 0.0
        %2357 = vmatpush2.msra.mxu0 0.0
        %2358 = vmatprep.subr.mxu0 0.0
        %2359 = vmatpush2.msra.mxu0 0.0
        %2360 = vmatprep.subr.mxu0 0.0
        %2361 = vmatpush2.msra.mxu0 0.0
        %2362 = vmatprep.subr.mxu0 0.0
        %2363 = vmatpush2.msra.mxu0 0.0
        %2364 = vmatprep.subr.mxu0 0.0
        %2365 = vmatpush2.msra.mxu0 0.0
        %2366 = vmatprep.subr.mxu0 0.0
        %2367 = vmatpush2.msra.mxu0 0.0
        %2368 = vmatprep.mubr.f32.mxu0 0.0
        %2369 = vmatmul.mubr.f32.gmra.mxu0 %v2302
        %v2370 = vpop.f32.mrf.mxu0
        %v2371 = vadd.f32 %v2299, %v2370
        %v2372 = vpop.f32.mrf.mxu0
        %2373 = vdwg.mxu0
        %v2374 = vld [vmem:[%s19] sm:$0xff]
        %v2375 = vld [vmem:[%s19 + $0x8] sm:$0xff]
        %v2376 = vld [vmem:[%s19 + $0x10] sm:$0xff]
        %v2377 = vld [vmem:[%s19 + $0x18] sm:$0xff]
        %v2379 = vsel %vm756, 0.0, 0
        %2381 = vmatprep.subr.mxu0 0.0
        %2382 = vmatpush1.msra.mxu0 0.0
        %2383 = vmatprep.subr.mxu0 0.0
        %2384 = vmatpush1.msra.mxu0 0.0
        %2385 = vmatprep.subr.mxu0 0.0
        %2386 = vmatpush1.msra.mxu0 0.0
        %2387 = vmatprep.subr.mxu0 0.0
        %2388 = vmatpush1.msra.mxu0 0.0
        %2389 = vmatprep.subr.mxu0 0.0
        %2390 = vmatpush1.msra.mxu0 0.0
        %2391 = vmatprep.subr.mxu0 0.0
        %2392 = vmatpush1.msra.mxu0 0.0
        %2393 = vmatprep.subr.mxu0 0.0
        %2394 = vmatpush1.msra.mxu0 0.0
        %2395 = vmatprep.subr.mxu0 0.0
        %2396 = vmatpush1.msra.mxu0 0.0
        %2397 = vmatprep.subr.mxu0 0.0
        %2398 = vmatpush1.msra.mxu0 0.0
        %2399 = vmatprep.subr.mxu0 0.0
        %2400 = vmatpush1.msra.mxu0 0.0
        %2401 = vmatprep.subr.mxu0 0.0
        %2402 = vmatpush1.msra.mxu0 0.0
        %2403 = vmatprep.subr.mxu0 0.0
        %2404 = vmatpush1.msra.mxu0 0.0
        %2405 = vmatprep.subr.mxu0 0.0
        %2406 = vmatpush1.msra.mxu0 %v2377
        %2407 = vmatprep.subr.mxu0 0.0
        %2408 = vmatpush1.msra.mxu0 %v2376
        %2409 = vmatprep.subr.mxu0 0.0
        %2410 = vmatpush1.msra.mxu0 %v2375
        %2411 = vmatprep.subr.mxu0 0.0
        %2412 = vmatpush1.msra.mxu0 %v2374
        %2413 = vmatprep.subr.mxu0 0.0
        %2414 = vmatpush2.msra.mxu0 0.0
        %2415 = vmatprep.subr.mxu0 0.0
        %2416 = vmatpush2.msra.mxu0 0.0
        %2417 = vmatprep.subr.mxu0 0.0
        %2418 = vmatpush2.msra.mxu0 0.0
        %2419 = vmatprep.subr.mxu0 0.0
        %2420 = vmatpush2.msra.mxu0 0.0
        %2421 = vmatprep.subr.mxu0 0.0
        %2422 = vmatpush2.msra.mxu0 0.0
        %2423 = vmatprep.subr.mxu0 0.0
        %2424 = vmatpush2.msra.mxu0 0.0
        %2425 = vmatprep.subr.mxu0 0.0
        %2426 = vmatpush2.msra.mxu0 0.0
        %2427 = vmatprep.subr.mxu0 0.0
        %2428 = vmatpush2.msra.mxu0 0.0
        %2429 = vmatprep.subr.mxu0 0.0
        %2430 = vmatpush2.msra.mxu0 0.0
        %2431 = vmatprep.subr.mxu0 0.0
        %2432 = vmatpush2.msra.mxu0 0.0
        %2433 = vmatprep.subr.mxu0 0.0
        %2434 = vmatpush2.msra.mxu0 0.0
        %2435 = vmatprep.subr.mxu0 0.0
        %2436 = vmatpush2.msra.mxu0 0.0
        %2437 = vmatprep.subr.mxu0 0.0
        %2438 = vmatpush2.msra.mxu0 0.0
        %2439 = vmatprep.subr.mxu0 0.0
        %2440 = vmatpush2.msra.mxu0 0.0
        %2441 = vmatprep.subr.mxu0 0.0
        %2442 = vmatpush2.msra.mxu0 0.0
        %2443 = vmatprep.subr.mxu0 0.0
        %2444 = vmatpush2.msra.mxu0 0.0
        %2445 = vmatprep.mubr.f32.mxu0 0.0
        %2446 = vmatmul.mubr.f32.gmra.mxu0 %v2379
        %v2447 = vpop.f32.mrf.mxu0
        %v2448 = vadd.f32 0.0, %v2447
        %v2449 = vpop.f32.mrf.mxu0
        %2450 = vdwg.mxu0
        %v2451 = vadd.f32 %v2371, %v2448
        %v2452 = vxor.u32 %v2451, 2147483648
        %v2453 = vmul.f32 %v2452, 1.442695
        %v2454 = vpow.pop %v2453
        %v2455 = vadd.f32 %v2454, 1.0
        %v2456 = vrcp.pop %v2455
        %v2457 = vmul.f32 1.0, %v2456
        %v2458 = vtanh.pop %v2451
        %v2459 = vmul.f32 %v2457, 0.0
        %2461 = vrot.lane.b32.xlu0 %v2458, 64
        %v2462 = vpop.permute.xlu0 %2461
        %v2464 = vmul.f32 %v2457, %v2462
        %2466 = vrot.lane.b32.xlu0 %v2464, 32
        %v2467 = vpop.permute.xlu0 %2466
        %v2469 = vadd.f32 %v2459, %v2467
        %v2470 = vtanh.pop %v2469
        %2472 = vrot.lane.b32.xlu0 %v2470, 64
        %v2473 = vpop.permute.xlu0 %2472
        %v2475 = vmul.f32 %v2457, %v2473
        %2477 = vrot.lane.b32.xlu0 %v2475, 32
        %v2478 = vpop.permute.xlu0 %2477
        %v2479 = vsel %vm756, %v2478, 0
        %2481 = vmatprep.subr.mxu0 0.0
        %2482 = vmatpush1.msra.mxu0 0.0
        %2483 = vmatprep.subr.mxu0 0.0
        %2484 = vmatpush1.msra.mxu0 0.0
        %2485 = vmatprep.subr.mxu0 0.0
        %2486 = vmatpush1.msra.mxu0 0.0
        %2487 = vmatprep.subr.mxu0 0.0
        %2488 = vmatpush1.msra.mxu0 0.0
        %2489 = vmatprep.subr.mxu0 0.0
        %2490 = vmatpush1.msra.mxu0 0.0
        %2491 = vmatprep.subr.mxu0 0.0
        %2492 = vmatpush1.msra.mxu0 0.0
        %2493 = vmatprep.subr.mxu0 0.0
        %2494 = vmatpush1.msra.mxu0 0.0
        %2495 = vmatprep.subr.mxu0 0.0
        %2496 = vmatpush1.msra.mxu0 0.0
        %2497 = vmatprep.subr.mxu0 0.0
        %2498 = vmatpush1.msra.mxu0 0.0
        %2499 = vmatprep.subr.mxu0 0.0
        %2500 = vmatpush1.msra.mxu0 0.0
        %2501 = vmatprep.subr.mxu0 0.0
        %2502 = vmatpush1.msra.mxu0 0.0
        %2503 = vmatprep.subr.mxu0 0.0
        %2504 = vmatpush1.msra.mxu0 0.0
        %2505 = vmatprep.subr.mxu0 0.0
        %2506 = vmatpush1.msra.mxu0 %v2377
        %2507 = vmatprep.subr.mxu0 0.0
        %2508 = vmatpush1.msra.mxu0 %v2376
        %2509 = vmatprep.subr.mxu0 0.0
        %2510 = vmatpush1.msra.mxu0 %v2375
        %2511 = vmatprep.subr.mxu0 0.0
        %2512 = vmatpush1.msra.mxu0 %v2374
        %2513 = vmatprep.subr.mxu0 0.0
        %2514 = vmatpush2.msra.mxu0 0.0
        %2515 = vmatprep.subr.mxu0 0.0
        %2516 = vmatpush2.msra.mxu0 0.0
        %2517 = vmatprep.subr.mxu0 0.0
        %2518 = vmatpush2.msra.mxu0 0.0
        %2519 = vmatprep.subr.mxu0 0.0
        %2520 = vmatpush2.msra.mxu0 0.0
        %2521 = vmatprep.subr.mxu0 0.0
        %2522 = vmatpush2.msra.mxu0 0.0
        %2523 = vmatprep.subr.mxu0 0.0
        %2524 = vmatpush2.msra.mxu0 0.0
        %2525 = vmatprep.subr.mxu0 0.0
        %2526 = vmatpush2.msra.mxu0 0.0
        %2527 = vmatprep.subr.mxu0 0.0
        %2528 = vmatpush2.msra.mxu0 0.0
        %2529 = vmatprep.subr.mxu0 0.0
        %2530 = vmatpush2.msra.mxu0 0.0
        %2531 = vmatprep.subr.mxu0 0.0
        %2532 = vmatpush2.msra.mxu0 0.0
        %2533 = vmatprep.subr.mxu0 0.0
        %2534 = vmatpush2.msra.mxu0 0.0
        %2535 = vmatprep.subr.mxu0 0.0
        %2536 = vmatpush2.msra.mxu0 0.0
        %2537 = vmatprep.subr.mxu0 0.0
        %2538 = vmatpush2.msra.mxu0 0.0
        %2539 = vmatprep.subr.mxu0 0.0
        %2540 = vmatpush2.msra.mxu0 0.0
        %2541 = vmatprep.subr.mxu0 0.0
        %2542 = vmatpush2.msra.mxu0 0.0
        %2543 = vmatprep.subr.mxu0 0.0
        %2544 = vmatpush2.msra.mxu0 0.0
        %2545 = vmatprep.mubr.f32.mxu0 0.0
        %2546 = vmatmul.mubr.f32.gmra.mxu0 %v2479
        %v2547 = vpop.f32.mrf.mxu0
        %v2548 = vadd.f32 0.0, %v2547
        %v2549 = vpop.f32.mrf.mxu0
        %2550 = vdwg.mxu0
        %v2552 = vrot.slane %v2548, 7
        %v2554 = vadd.f32 %v2371, %v2552
        %v2555 = vxor.u32 %v2554, 2147483648
        %v2556 = vmul.f32 %v2555, 1.442695
        %v2557 = vpow.pop %v2556
        %v2558 = vadd.f32 %v2557, 1.0
        %v2559 = vrcp.pop %v2558
        %v2560 = vmul.f32 1.0, %v2559
        %v2561 = vtanh.pop %v2554
        %v2563 = vrot.slane %v2469, 7
        %v2565 = vmul.f32 %v2560, %v2563
        %2567 = vrot.lane.b32.xlu0 %v2561, 64
        %v2568 = vpop.permute.xlu0 %2567
        %v2570 = vmul.f32 %v2560, %v2568
        %2572 = vrot.lane.b32.xlu0 %v2570, 32
        %v2573 = vpop.permute.xlu0 %2572
        %v2575 = vadd.f32 %v2565, %v2573
        %v2576 = vtanh.pop %v2575
        %2578 = vrot.lane.b32.xlu0 %v2576, 64
        %v2579 = vpop.permute.xlu0 %2578
        %v2581 = vmul.f32 %v2560, %v2579
        %v2583 = vrot.slane %v2581, 1
        %2584 = vrot.lane.b32.xlu0 %v2583, 32
        %v2585 = vpop.permute.xlu0 %2584
        %v2586 = vsel %vm756, %v2585, 0
        %2588 = vmatprep.subr.mxu0 0.0
        %2589 = vmatpush1.msra.mxu0 0.0
        %2590 = vmatprep.subr.mxu0 0.0
        %2591 = vmatpush1.msra.mxu0 0.0
        %2592 = vmatprep.subr.mxu0 0.0
        %2593 = vmatpush1.msra.mxu0 0.0
        %2594 = vmatprep.subr.mxu0 0.0
        %2595 = vmatpush1.msra.mxu0 0.0
        %2596 = vmatprep.subr.mxu0 0.0
        %2597 = vmatpush1.msra.mxu0 0.0
        %2598 = vmatprep.subr.mxu0 0.0
        %2599 = vmatpush1.msra.mxu0 0.0
        %2600 = vmatprep.subr.mxu0 0.0
        %2601 = vmatpush1.msra.mxu0 0.0
        %2602 = vmatprep.subr.mxu0 0.0
        %2603 = vmatpush1.msra.mxu0 0.0
        %2604 = vmatprep.subr.mxu0 0.0
        %2605 = vmatpush1.msra.mxu0 0.0
        %2606 = vmatprep.subr.mxu0 0.0
        %2607 = vmatpush1.msra.mxu0 0.0
        %2608 = vmatprep.subr.mxu0 0.0
        %2609 = vmatpush1.msra.mxu0 0.0
        %2610 = vmatprep.subr.mxu0 0.0
        %2611 = vmatpush1.msra.mxu0 0.0
        %2612 = vmatprep.subr.mxu0 0.0
        %2613 = vmatpush1.msra.mxu0 %v2377
        %2614 = vmatprep.subr.mxu0 0.0
        %2615 = vmatpush1.msra.mxu0 %v2376
        %2616 = vmatprep.subr.mxu0 0.0
        %2617 = vmatpush1.msra.mxu0 %v2375
        %2618 = vmatprep.subr.mxu0 0.0
        %2619 = vmatpush1.msra.mxu0 %v2374
        %2620 = vmatprep.subr.mxu0 0.0
        %2621 = vmatpush2.msra.mxu0 0.0
        %2622 = vmatprep.subr.mxu0 0.0
        %2623 = vmatpush2.msra.mxu0 0.0
        %2624 = vmatprep.subr.mxu0 0.0
        %2625 = vmatpush2.msra.mxu0 0.0
        %2626 = vmatprep.subr.mxu0 0.0
        %2627 = vmatpush2.msra.mxu0 0.0
        %2628 = vmatprep.subr.mxu0 0.0
        %2629 = vmatpush2.msra.mxu0 0.0
        %2630 = vmatprep.subr.mxu0 0.0
        %2631 = vmatpush2.msra.mxu0 0.0
        %2632 = vmatprep.subr.mxu0 0.0
        %2633 = vmatpush2.msra.mxu0 0.0
        %2634 = vmatprep.subr.mxu0 0.0
        %2635 = vmatpush2.msra.mxu0 0.0
        %2636 = vmatprep.subr.mxu0 0.0
        %2637 = vmatpush2.msra.mxu0 0.0
        %2638 = vmatprep.subr.mxu0 0.0
        %2639 = vmatpush2.msra.mxu0 0.0
        %2640 = vmatprep.subr.mxu0 0.0
        %2641 = vmatpush2.msra.mxu0 0.0
        %2642 = vmatprep.subr.mxu0 0.0
        %2643 = vmatpush2.msra.mxu0 0.0
        %2644 = vmatprep.subr.mxu0 0.0
        %2645 = vmatpush2.msra.mxu0 0.0
        %2646 = vmatprep.subr.mxu0 0.0
        %2647 = vmatpush2.msra.mxu0 0.0
        %2648 = vmatprep.subr.mxu0 0.0
        %2649 = vmatpush2.msra.mxu0 0.0
        %2650 = vmatprep.subr.mxu0 0.0
        %2651 = vmatpush2.msra.mxu0 0.0
        %2652 = vmatprep.mubr.f32.mxu0 0.0
        %2653 = vmatmul.mubr.f32.gmra.mxu0 %v2586
        %v2654 = vpop.f32.mrf.mxu0
        %v2655 = vadd.f32 0.0, %v2654
        %v2656 = vpop.f32.mrf.mxu0
        %2657 = vdwg.mxu0
        %v2659 = vrot.slane %v2655, 6
        %v2661 = vadd.f32 %v2371, %v2659
        %v2662 = vxor.u32 %v2661, 2147483648
        %v2663 = vmul.f32 %v2662, 1.442695
        %v2664 = vpow.pop %v2663
        %v2665 = vadd.f32 %v2664, 1.0
        %v2666 = vrcp.pop %v2665
        %v2667 = vmul.f32 1.0, %v2666
        %v2668 = vtanh.pop %v2661
        %v2670 = vrot.slane %v2575, 7
        %v2672 = vmul.f32 %v2667, %v2670
        %2674 = vrot.lane.b32.xlu0 %v2668, 64
        %v2675 = vpop.permute.xlu0 %2674
        %v2677 = vmul.f32 %v2667, %v2675
        %2679 = vrot.lane.b32.xlu0 %v2677, 32
        %v2680 = vpop.permute.xlu0 %2679
        %v2682 = vadd.f32 %v2672, %v2680
        %v2683 = vtanh.pop %v2682
        %2685 = vrot.lane.b32.xlu0 %v2683, 64
        %v2686 = vpop.permute.xlu0 %2685
        %v2688 = vmul.f32 %v2667, %v2686
        %v2690 = vrot.slane %v2688, 2
        %2691 = vrot.lane.b32.xlu0 %v2690, 32
        %v2692 = vpop.permute.xlu0 %2691
        %v2693 = vsel %vm756, %v2692, 0
        %2695 = vmatprep.subr.mxu0 0.0
        %2696 = vmatpush1.msra.mxu0 0.0
        %2697 = vmatprep.subr.mxu0 0.0
        %2698 = vmatpush1.msra.mxu0 0.0
        %2699 = vmatprep.subr.mxu0 0.0
        %2700 = vmatpush1.msra.mxu0 0.0
        %2701 = vmatprep.subr.mxu0 0.0
        %2702 = vmatpush1.msra.mxu0 0.0
        %2703 = vmatprep.subr.mxu0 0.0
        %2704 = vmatpush1.msra.mxu0 0.0
        %2705 = vmatprep.subr.mxu0 0.0
        %2706 = vmatpush1.msra.mxu0 0.0
        %2707 = vmatprep.subr.mxu0 0.0
        %2708 = vmatpush1.msra.mxu0 0.0
        %2709 = vmatprep.subr.mxu0 0.0
        %2710 = vmatpush1.msra.mxu0 0.0
        %2711 = vmatprep.subr.mxu0 0.0
        %2712 = vmatpush1.msra.mxu0 0.0
        %2713 = vmatprep.subr.mxu0 0.0
        %2714 = vmatpush1.msra.mxu0 0.0
        %2715 = vmatprep.subr.mxu0 0.0
        %2716 = vmatpush1.msra.mxu0 0.0
        %2717 = vmatprep.subr.mxu0 0.0
        %2718 = vmatpush1.msra.mxu0 0.0
        %2719 = vmatprep.subr.mxu0 0.0
        %2720 = vmatpush1.msra.mxu0 %v2377
        %2721 = vmatprep.subr.mxu0 0.0
        %2722 = vmatpush1.msra.mxu0 %v2376
        %2723 = vmatprep.subr.mxu0 0.0
        %2724 = vmatpush1.msra.mxu0 %v2375
        %2725 = vmatprep.subr.mxu0 0.0
        %2726 = vmatpush1.msra.mxu0 %v2374
        %2727 = vmatprep.subr.mxu0 0.0
        %2728 = vmatpush2.msra.mxu0 0.0
        %2729 = vmatprep.subr.mxu0 0.0
        %2730 = vmatpush2.msra.mxu0 0.0
        %2731 = vmatprep.subr.mxu0 0.0
        %2732 = vmatpush2.msra.mxu0 0.0
        %2733 = vmatprep.subr.mxu0 0.0
        %2734 = vmatpush2.msra.mxu0 0.0
        %2735 = vmatprep.subr.mxu0 0.0
        %2736 = vmatpush2.msra.mxu0 0.0
        %2737 = vmatprep.subr.mxu0 0.0
        %2738 = vmatpush2.msra.mxu0 0.0
        %2739 = vmatprep.subr.mxu0 0.0
        %2740 = vmatpush2.msra.mxu0 0.0
        %2741 = vmatprep.subr.mxu0 0.0
        %2742 = vmatpush2.msra.mxu0 0.0
        %2743 = vmatprep.subr.mxu0 0.0
        %2744 = vmatpush2.msra.mxu0 0.0
        %2745 = vmatprep.subr.mxu0 0.0
        %2746 = vmatpush2.msra.mxu0 0.0
        %2747 = vmatprep.subr.mxu0 0.0
        %2748 = vmatpush2.msra.mxu0 0.0
        %2749 = vmatprep.subr.mxu0 0.0
        %2750 = vmatpush2.msra.mxu0 0.0
        %2751 = vmatprep.subr.mxu0 0.0
        %2752 = vmatpush2.msra.mxu0 0.0
        %2753 = vmatprep.subr.mxu0 0.0
        %2754 = vmatpush2.msra.mxu0 0.0
        %2755 = vmatprep.subr.mxu0 0.0
        %2756 = vmatpush2.msra.mxu0 0.0
        %2757 = vmatprep.subr.mxu0 0.0
        %2758 = vmatpush2.msra.mxu0 0.0
        %2759 = vmatprep.mubr.f32.mxu0 0.0
        %2760 = vmatmul.mubr.f32.gmra.mxu0 %v2693
        %v2761 = vpop.f32.mrf.mxu0
        %v2762 = vadd.f32 0.0, %v2761
        %v2763 = vpop.f32.mrf.mxu0
        %2764 = vdwg.mxu0
        %v2766 = vrot.slane %v2762, 5
        %v2768 = vadd.f32 %v2371, %v2766
        %v2769 = vxor.u32 %v2768, 2147483648
        %v2770 = vmul.f32 %v2769, 1.442695
        %v2771 = vpow.pop %v2770
        %v2772 = vadd.f32 %v2771, 1.0
        %v2773 = vrcp.pop %v2772
        %v2774 = vmul.f32 1.0, %v2773
        %v2775 = vtanh.pop %v2768
        %v2777 = vrot.slane %v2682, 7
        %v2779 = vmul.f32 %v2774, %v2777
        %2781 = vrot.lane.b32.xlu0 %v2775, 64
        %v2782 = vpop.permute.xlu0 %2781
        %v2784 = vmul.f32 %v2774, %v2782
        %2786 = vrot.lane.b32.xlu0 %v2784, 32
        %v2787 = vpop.permute.xlu0 %2786
        %v2789 = vadd.f32 %v2779, %v2787
        %v2790 = vtanh.pop %v2789
        %2792 = vrot.lane.b32.xlu0 %v2790, 64
        %v2793 = vpop.permute.xlu0 %2792
        %v2795 = vmul.f32 %v2774, %v2793
        %v2797 = vrot.slane %v2795, 3
        %2798 = vrot.lane.b32.xlu0 %v2797, 32
        %v2799 = vpop.permute.xlu0 %2798
        %v2800 = vsel %vm756, %v2799, 0
        %2802 = vmatprep.subr.mxu0 0.0
        %2803 = vmatpush1.msra.mxu0 0.0
        %2804 = vmatprep.subr.mxu0 0.0
        %2805 = vmatpush1.msra.mxu0 0.0
        %2806 = vmatprep.subr.mxu0 0.0
        %2807 = vmatpush1.msra.mxu0 0.0
        %2808 = vmatprep.subr.mxu0 0.0
        %2809 = vmatpush1.msra.mxu0 0.0
        %2810 = vmatprep.subr.mxu0 0.0
        %2811 = vmatpush1.msra.mxu0 0.0
        %2812 = vmatprep.subr.mxu0 0.0
        %2813 = vmatpush1.msra.mxu0 0.0
        %2814 = vmatprep.subr.mxu0 0.0
        %2815 = vmatpush1.msra.mxu0 0.0
        %2816 = vmatprep.subr.mxu0 0.0
        %2817 = vmatpush1.msra.mxu0 0.0
        %2818 = vmatprep.subr.mxu0 0.0
        %2819 = vmatpush1.msra.mxu0 0.0
        %2820 = vmatprep.subr.mxu0 0.0
        %2821 = vmatpush1.msra.mxu0 0.0
        %2822 = vmatprep.subr.mxu0 0.0
        %2823 = vmatpush1.msra.mxu0 0.0
        %2824 = vmatprep.subr.mxu0 0.0
        %2825 = vmatpush1.msra.mxu0 0.0
        %2826 = vmatprep.subr.mxu0 0.0
        %2827 = vmatpush1.msra.mxu0 %v2377
        %2828 = vmatprep.subr.mxu0 0.0
        %2829 = vmatpush1.msra.mxu0 %v2376
        %2830 = vmatprep.subr.mxu0 0.0
        %2831 = vmatpush1.msra.mxu0 %v2375
        %2832 = vmatprep.subr.mxu0 0.0
        %2833 = vmatpush1.msra.mxu0 %v2374
        %2834 = vmatprep.subr.mxu0 0.0
        %2835 = vmatpush2.msra.mxu0 0.0
        %2836 = vmatprep.subr.mxu0 0.0
        %2837 = vmatpush2.msra.mxu0 0.0
        %2838 = vmatprep.subr.mxu0 0.0
        %2839 = vmatpush2.msra.mxu0 0.0
        %2840 = vmatprep.subr.mxu0 0.0
        %2841 = vmatpush2.msra.mxu0 0.0
        %2842 = vmatprep.subr.mxu0 0.0
        %2843 = vmatpush2.msra.mxu0 0.0
        %2844 = vmatprep.subr.mxu0 0.0
        %2845 = vmatpush2.msra.mxu0 0.0
        %2846 = vmatprep.subr.mxu0 0.0
        %2847 = vmatpush2.msra.mxu0 0.0
        %2848 = vmatprep.subr.mxu0 0.0
        %2849 = vmatpush2.msra.mxu0 0.0
        %2850 = vmatprep.subr.mxu0 0.0
        %2851 = vmatpush2.msra.mxu0 0.0
        %2852 = vmatprep.subr.mxu0 0.0
        %2853 = vmatpush2.msra.mxu0 0.0
        %2854 = vmatprep.subr.mxu0 0.0
        %2855 = vmatpush2.msra.mxu0 0.0
        %2856 = vmatprep.subr.mxu0 0.0
        %2857 = vmatpush2.msra.mxu0 0.0
        %2858 = vmatprep.subr.mxu0 0.0
        %2859 = vmatpush2.msra.mxu0 0.0
        %2860 = vmatprep.subr.mxu0 0.0
        %2861 = vmatpush2.msra.mxu0 0.0
        %2862 = vmatprep.subr.mxu0 0.0
        %2863 = vmatpush2.msra.mxu0 0.0
        %2864 = vmatprep.subr.mxu0 0.0
        %2865 = vmatpush2.msra.mxu0 0.0
        %2866 = vmatprep.mubr.f32.mxu0 0.0
        %2867 = vmatmul.mubr.f32.gmra.mxu0 %v2800
        %v2868 = vpop.f32.mrf.mxu0
        %v2869 = vadd.f32 0.0, %v2868
        %v2870 = vpop.f32.mrf.mxu0
        %2871 = vdwg.mxu0
        %v2873 = vrot.slane %v2869, 4
        %v2875 = vadd.f32 %v2371, %v2873
        %v2876 = vxor.u32 %v2875, 2147483648
        %v2877 = vmul.f32 %v2876, 1.442695
        %v2878 = vpow.pop %v2877
        %v2879 = vadd.f32 %v2878, 1.0
        %v2880 = vrcp.pop %v2879
        %v2881 = vmul.f32 1.0, %v2880
        %v2882 = vtanh.pop %v2875
        %v2884 = vrot.slane %v2789, 7
        %v2886 = vmul.f32 %v2881, %v2884
        %2888 = vrot.lane.b32.xlu0 %v2882, 64
        %v2889 = vpop.permute.xlu0 %2888
        %v2891 = vmul.f32 %v2881, %v2889
        %2893 = vrot.lane.b32.xlu0 %v2891, 32
        %v2894 = vpop.permute.xlu0 %2893
        %v2896 = vadd.f32 %v2886, %v2894
        %v2897 = vtanh.pop %v2896
        %2899 = vrot.lane.b32.xlu0 %v2897, 64
        %v2900 = vpop.permute.xlu0 %2899
        %v2902 = vmul.f32 %v2881, %v2900
        %v2904 = vrot.slane %v2902, 4
        %2905 = vrot.lane.b32.xlu0 %v2904, 32
        %v2906 = vpop.permute.xlu0 %2905
        %v2907 = vsel %vm756, %v2906, 0
        %2909 = vmatprep.subr.mxu0 0.0
        %2910 = vmatpush1.msra.mxu0 0.0
        %2911 = vmatprep.subr.mxu0 0.0
        %2912 = vmatpush1.msra.mxu0 0.0
        %2913 = vmatprep.subr.mxu0 0.0
        %2914 = vmatpush1.msra.mxu0 0.0
        %2915 = vmatprep.subr.mxu0 0.0
        %2916 = vmatpush1.msra.mxu0 0.0
        %2917 = vmatprep.subr.mxu0 0.0
        %2918 = vmatpush1.msra.mxu0 0.0
        %2919 = vmatprep.subr.mxu0 0.0
        %2920 = vmatpush1.msra.mxu0 0.0
        %2921 = vmatprep.subr.mxu0 0.0
        %2922 = vmatpush1.msra.mxu0 0.0
        %2923 = vmatprep.subr.mxu0 0.0
        %2924 = vmatpush1.msra.mxu0 0.0
        %2925 = vmatprep.subr.mxu0 0.0
        %2926 = vmatpush1.msra.mxu0 0.0
        %2927 = vmatprep.subr.mxu0 0.0
        %2928 = vmatpush1.msra.mxu0 0.0
        %2929 = vmatprep.subr.mxu0 0.0
        %2930 = vmatpush1.msra.mxu0 0.0
        %2931 = vmatprep.subr.mxu0 0.0
        %2932 = vmatpush1.msra.mxu0 0.0
        %2933 = vmatprep.subr.mxu0 0.0
        %2934 = vmatpush1.msra.mxu0 %v2377
        %2935 = vmatprep.subr.mxu0 0.0
        %2936 = vmatpush1.msra.mxu0 %v2376
        %2937 = vmatprep.subr.mxu0 0.0
        %2938 = vmatpush1.msra.mxu0 %v2375
        %2939 = vmatprep.subr.mxu0 0.0
        %2940 = vmatpush1.msra.mxu0 %v2374
        %2941 = vmatprep.subr.mxu0 0.0
        %2942 = vmatpush2.msra.mxu0 0.0
        %2943 = vmatprep.subr.mxu0 0.0
        %2944 = vmatpush2.msra.mxu0 0.0
        %2945 = vmatprep.subr.mxu0 0.0
        %2946 = vmatpush2.msra.mxu0 0.0
        %2947 = vmatprep.subr.mxu0 0.0
        %2948 = vmatpush2.msra.mxu0 0.0
        %2949 = vmatprep.subr.mxu0 0.0
        %2950 = vmatpush2.msra.mxu0 0.0
        %2951 = vmatprep.subr.mxu0 0.0
        %2952 = vmatpush2.msra.mxu0 0.0
        %2953 = vmatprep.subr.mxu0 0.0
        %2954 = vmatpush2.msra.mxu0 0.0
        %2955 = vmatprep.subr.mxu0 0.0
        %2956 = vmatpush2.msra.mxu0 0.0
        %2957 = vmatprep.subr.mxu0 0.0
        %2958 = vmatpush2.msra.mxu0 0.0
        %2959 = vmatprep.subr.mxu0 0.0
        %2960 = vmatpush2.msra.mxu0 0.0
        %2961 = vmatprep.subr.mxu0 0.0
        %2962 = vmatpush2.msra.mxu0 0.0
        %2963 = vmatprep.subr.mxu0 0.0
        %2964 = vmatpush2.msra.mxu0 0.0
        %2965 = vmatprep.subr.mxu0 0.0
        %2966 = vmatpush2.msra.mxu0 0.0
        %2967 = vmatprep.subr.mxu0 0.0
        %2968 = vmatpush2.msra.mxu0 0.0
        %2969 = vmatprep.subr.mxu0 0.0
        %2970 = vmatpush2.msra.mxu0 0.0
        %2971 = vmatprep.subr.mxu0 0.0
        %2972 = vmatpush2.msra.mxu0 0.0
        %2973 = vmatprep.mubr.f32.mxu0 0.0
        %2974 = vmatmul.mubr.f32.gmra.mxu0 %v2907
        %v2975 = vpop.f32.mrf.mxu0
        %v2976 = vadd.f32 0.0, %v2975
        %v2977 = vpop.f32.mrf.mxu0
        %2978 = vdwg.mxu0
        %v2980 = vrot.slane %v2976, 3
        %v2982 = vadd.f32 %v2371, %v2980
        %v2983 = vxor.u32 %v2982, 2147483648
        %v2984 = vmul.f32 %v2983, 1.442695
        %v2985 = vpow.pop %v2984
        %v2986 = vadd.f32 %v2985, 1.0
        %v2987 = vrcp.pop %v2986
        %v2988 = vmul.f32 1.0, %v2987
        %v2989 = vtanh.pop %v2982
        %v2991 = vrot.slane %v2896, 7
        %v2993 = vmul.f32 %v2988, %v2991
        %2995 = vrot.lane.b32.xlu0 %v2989, 64
        %v2996 = vpop.permute.xlu0 %2995
        %v2998 = vmul.f32 %v2988, %v2996
        %3000 = vrot.lane.b32.xlu0 %v2998, 32
        %v3001 = vpop.permute.xlu0 %3000
        %v3003 = vadd.f32 %v2993, %v3001
        %v3004 = vtanh.pop %v3003
        %3006 = vrot.lane.b32.xlu0 %v3004, 64
        %v3007 = vpop.permute.xlu0 %3006
        %v3009 = vmul.f32 %v2988, %v3007
        %v3011 = vrot.slane %v3009, 5
        %3012 = vrot.lane.b32.xlu0 %v3011, 32
        %v3013 = vpop.permute.xlu0 %3012
        %v3014 = vsel %vm756, %v3013, 0
        %3016 = vmatprep.subr.mxu0 0.0
        %3017 = vmatpush1.msra.mxu0 0.0
        %3018 = vmatprep.subr.mxu0 0.0
        %3019 = vmatpush1.msra.mxu0 0.0
        %3020 = vmatprep.subr.mxu0 0.0
        %3021 = vmatpush1.msra.mxu0 0.0
        %3022 = vmatprep.subr.mxu0 0.0
        %3023 = vmatpush1.msra.mxu0 0.0
        %3024 = vmatprep.subr.mxu0 0.0
        %3025 = vmatpush1.msra.mxu0 0.0
        %3026 = vmatprep.subr.mxu0 0.0
        %3027 = vmatpush1.msra.mxu0 0.0
        %3028 = vmatprep.subr.mxu0 0.0
        %3029 = vmatpush1.msra.mxu0 0.0
        %3030 = vmatprep.subr.mxu0 0.0
        %3031 = vmatpush1.msra.mxu0 0.0
        %3032 = vmatprep.subr.mxu0 0.0
        %3033 = vmatpush1.msra.mxu0 0.0
        %3034 = vmatprep.subr.mxu0 0.0
        %3035 = vmatpush1.msra.mxu0 0.0
        %3036 = vmatprep.subr.mxu0 0.0
        %3037 = vmatpush1.msra.mxu0 0.0
        %3038 = vmatprep.subr.mxu0 0.0
        %3039 = vmatpush1.msra.mxu0 0.0
        %3040 = vmatprep.subr.mxu0 0.0
        %3041 = vmatpush1.msra.mxu0 %v2377
        %3042 = vmatprep.subr.mxu0 0.0
        %3043 = vmatpush1.msra.mxu0 %v2376
        %3044 = vmatprep.subr.mxu0 0.0
        %3045 = vmatpush1.msra.mxu0 %v2375
        %3046 = vmatprep.subr.mxu0 0.0
        %3047 = vmatpush1.msra.mxu0 %v2374
        %3048 = vmatprep.subr.mxu0 0.0
        %3049 = vmatpush2.msra.mxu0 0.0
        %3050 = vmatprep.subr.mxu0 0.0
        %3051 = vmatpush2.msra.mxu0 0.0
        %3052 = vmatprep.subr.mxu0 0.0
        %3053 = vmatpush2.msra.mxu0 0.0
        %3054 = vmatprep.subr.mxu0 0.0
        %3055 = vmatpush2.msra.mxu0 0.0
        %3056 = vmatprep.subr.mxu0 0.0
        %3057 = vmatpush2.msra.mxu0 0.0
        %3058 = vmatprep.subr.mxu0 0.0
        %3059 = vmatpush2.msra.mxu0 0.0
        %3060 = vmatprep.subr.mxu0 0.0
        %3061 = vmatpush2.msra.mxu0 0.0
        %3062 = vmatprep.subr.mxu0 0.0
        %3063 = vmatpush2.msra.mxu0 0.0
        %3064 = vmatprep.subr.mxu0 0.0
        %3065 = vmatpush2.msra.mxu0 0.0
        %3066 = vmatprep.subr.mxu0 0.0
        %3067 = vmatpush2.msra.mxu0 0.0
        %3068 = vmatprep.subr.mxu0 0.0
        %3069 = vmatpush2.msra.mxu0 0.0
        %3070 = vmatprep.subr.mxu0 0.0
        %3071 = vmatpush2.msra.mxu0 0.0
        %3072 = vmatprep.subr.mxu0 0.0
        %3073 = vmatpush2.msra.mxu0 0.0
        %3074 = vmatprep.subr.mxu0 0.0
        %3075 = vmatpush2.msra.mxu0 0.0
        %3076 = vmatprep.subr.mxu0 0.0
        %3077 = vmatpush2.msra.mxu0 0.0
        %3078 = vmatprep.subr.mxu0 0.0
        %3079 = vmatpush2.msra.mxu0 0.0
        %3080 = vmatprep.mubr.f32.mxu0 0.0
        %3081 = vmatmul.mubr.f32.gmra.mxu0 %v3014
        %v3082 = vpop.f32.mrf.mxu0
        %v3083 = vadd.f32 0.0, %v3082
        %v3084 = vpop.f32.mrf.mxu0
        %3085 = vdwg.mxu0
        %v3087 = vrot.slane %v3083, 2
        %v3089 = vadd.f32 %v2371, %v3087
        %v3090 = vxor.u32 %v3089, 2147483648
        %v3091 = vmul.f32 %v3090, 1.442695
        %v3092 = vpow.pop %v3091
        %v3093 = vadd.f32 %v3092, 1.0
        %v3094 = vrcp.pop %v3093
        %v3095 = vmul.f32 1.0, %v3094
        %v3096 = vtanh.pop %v3089
        %v3098 = vrot.slane %v3003, 7
        %v3100 = vmul.f32 %v3095, %v3098
        %3102 = vrot.lane.b32.xlu0 %v3096, 64
        %v3103 = vpop.permute.xlu0 %3102
        %v3105 = vmul.f32 %v3095, %v3103
        %3107 = vrot.lane.b32.xlu0 %v3105, 32
        %v3108 = vpop.permute.xlu0 %3107
        %v3110 = vadd.f32 %v3100, %v3108
        %v3111 = vtanh.pop %v3110
        %3113 = vrot.lane.b32.xlu0 %v3111, 64
        %v3114 = vpop.permute.xlu0 %3113
        %v3116 = vmul.f32 %v3095, %v3114
        %v3118 = vrot.slane %v3116, 6
        %3119 = vrot.lane.b32.xlu0 %v3118, 32
        %v3120 = vpop.permute.xlu0 %3119
        %v3121 = vsel %vm756, %v3120, 0
        %3123 = vmatprep.subr.mxu0 0.0
        %3124 = vmatpush1.msra.mxu0 0.0
        %3125 = vmatprep.subr.mxu0 0.0
        %3126 = vmatpush1.msra.mxu0 0.0
        %3127 = vmatprep.subr.mxu0 0.0
        %3128 = vmatpush1.msra.mxu0 0.0
        %3129 = vmatprep.subr.mxu0 0.0
        %3130 = vmatpush1.msra.mxu0 0.0
        %3131 = vmatprep.subr.mxu0 0.0
        %3132 = vmatpush1.msra.mxu0 0.0
        %3133 = vmatprep.subr.mxu0 0.0
        %3134 = vmatpush1.msra.mxu0 0.0
        %3135 = vmatprep.subr.mxu0 0.0
        %3136 = vmatpush1.msra.mxu0 0.0
        %3137 = vmatprep.subr.mxu0 0.0
        %3138 = vmatpush1.msra.mxu0 0.0
        %3139 = vmatprep.subr.mxu0 0.0
        %3140 = vmatpush1.msra.mxu0 0.0
        %3141 = vmatprep.subr.mxu0 0.0
        %3142 = vmatpush1.msra.mxu0 0.0
        %3143 = vmatprep.subr.mxu0 0.0
        %3144 = vmatpush1.msra.mxu0 0.0
        %3145 = vmatprep.subr.mxu0 0.0
        %3146 = vmatpush1.msra.mxu0 0.0
        %3147 = vmatprep.subr.mxu0 0.0
        %3148 = vmatpush1.msra.mxu0 %v2377
        %3149 = vmatprep.subr.mxu0 0.0
        %3150 = vmatpush1.msra.mxu0 %v2376
        %3151 = vmatprep.subr.mxu0 0.0
        %3152 = vmatpush1.msra.mxu0 %v2375
        %3153 = vmatprep.subr.mxu0 0.0
        %3154 = vmatpush1.msra.mxu0 %v2374
        %3155 = vmatprep.subr.mxu0 0.0
        %3156 = vmatpush2.msra.mxu0 0.0
        %3157 = vmatprep.subr.mxu0 0.0
        %3158 = vmatpush2.msra.mxu0 0.0
        %3159 = vmatprep.subr.mxu0 0.0
        %3160 = vmatpush2.msra.mxu0 0.0
        %3161 = vmatprep.subr.mxu0 0.0
        %3162 = vmatpush2.msra.mxu0 0.0
        %3163 = vmatprep.subr.mxu0 0.0
        %3164 = vmatpush2.msra.mxu0 0.0
        %3165 = vmatprep.subr.mxu0 0.0
        %3166 = vmatpush2.msra.mxu0 0.0
        %3167 = vmatprep.subr.mxu0 0.0
        %3168 = vmatpush2.msra.mxu0 0.0
        %3169 = vmatprep.subr.mxu0 0.0
        %3170 = vmatpush2.msra.mxu0 0.0
        %3171 = vmatprep.subr.mxu0 0.0
        %3172 = vmatpush2.msra.mxu0 0.0
        %3173 = vmatprep.subr.mxu0 0.0
        %3174 = vmatpush2.msra.mxu0 0.0
        %3175 = vmatprep.subr.mxu0 0.0
        %3176 = vmatpush2.msra.mxu0 0.0
        %3177 = vmatprep.subr.mxu0 0.0
        %3178 = vmatpush2.msra.mxu0 0.0
        %3179 = vmatprep.subr.mxu0 0.0
        %3180 = vmatpush2.msra.mxu0 0.0
        %3181 = vmatprep.subr.mxu0 0.0
        %3182 = vmatpush2.msra.mxu0 0.0
        %3183 = vmatprep.subr.mxu0 0.0
        %3184 = vmatpush2.msra.mxu0 0.0
        %3185 = vmatprep.subr.mxu0 0.0
        %3186 = vmatpush2.msra.mxu0 0.0
        %3187 = vmatprep.mubr.f32.mxu0 0.0
        %3188 = vmatmul.mubr.f32.gmra.mxu0 %v3121
        %v3189 = vpop.f32.mrf.mxu0
        %v3190 = vadd.f32 0.0, %v3189
        %v3191 = vpop.f32.mrf.mxu0
        %3192 = vdwg.mxu0
        %v3194 = vrot.slane %v3190, 1
        %v3196 = vadd.f32 %v2371, %v3194
        %v3197 = vxor.u32 %v3196, 2147483648
        %v3198 = vmul.f32 %v3197, 1.442695
        %v3199 = vpow.pop %v3198
        %v3200 = vadd.f32 %v3199, 1.0
        %v3201 = vrcp.pop %v3200
        %v3202 = vmul.f32 1.0, %v3201
        %v3203 = vtanh.pop %v3196
        %v3205 = vrot.slane %v3110, 7
        %v3207 = vmul.f32 %v3202, %v3205
        %3209 = vrot.lane.b32.xlu0 %v3203, 64
        %v3210 = vpop.permute.xlu0 %3209
        %v3212 = vmul.f32 %v3202, %v3210
        %3214 = vrot.lane.b32.xlu0 %v3212, 32
        %v3215 = vpop.permute.xlu0 %3214
        %v3217 = vadd.f32 %v3207, %v3215
        %v3218 = vtanh.pop %v3217
        %3220 = vrot.lane.b32.xlu0 %v3218, 64
        %v3221 = vpop.permute.xlu0 %3220
        %v3223 = vmul.f32 %v3202, %v3221
        %vm3224 = vcmask 1040384
        %v3225 = vsel %vm3224, %v2475, %v2581
        %vm3226 = vcmask 1041408
        %v3227 = vsel %vm3226, %v3225, %v2688
        %vm3228 = vcmask 1042432
        %v3229 = vsel %vm3228, %v3227, %v2795
        %vm3230 = vcmask 1043456
        %v3231 = vsel %vm3230, %v3229, %v2902
        %vm3232 = vcmask 1044480
        %v3233 = vsel %vm3232, %v3231, %v3009
        %vm3234 = vcmask 1045504
        %v3235 = vsel %vm3234, %v3233, %v3116
        %vm3236 = vcmask 1046528
        %v3237 = vsel %vm3236, %v3235, %v3223
        %3239 = vrot.lane.b32.xlu0 %v3237, 32
        %v3240 = vpop.permute.xlu0 %3239
        %3242 = vst.msk [vmem:[%s647] sm:$0xff] %vm756, %v3240
        %s3243 = sand.u32 %s489, 1
        %s3244 = scalar_lea.sflag [#allocation3], %s3243
        %s3245 = sand.u32 %s489, 1
        %s3246 = smul.addr %s3245, 8
        %s3247 = scalar_lea.vmem [#allocation2], %s3246
        // Predicated region
        $region105: #{bert_lstm_forward.1} parent=103 // pred_check
          %p3248 = pneg %p499
        $region106: #{bert_lstm_forward.1} parent=103 // pred_check_branch
          %3250 = sbr.rel (%p3248) target = $region108
        $region107: #{bert_lstm_forward.1} parent=103 // pred_region
          %s3252 = ssub.s32 128, 128
          %3253 = vsyncadd %s3244, %s3252
          %s3254 = smul.addr %s35, 128
          %s3255 = scalar_lea.hbm %s21, %s3254
          %s3257 = sshll.u32 %s3247, 4
          %s3258 = int_to_ptr.vmem [resolvable:$true] %s3257
          %3260 = dma.vmem_to_hbm [thread:$0]  %s3258, 128, %s3255, %s3244
        $region108: #{bert_lstm_forward.1} parent=103 // pred_fallthru
          _
      $region104: #{bert_lstm_forward.1} parent=5 // pred_fallthru
        _
      %p3261 = scmp.le.s32.totalorder 2, %s30
      // Predicated region
      $region109: #{bert_lstm_forward.1} parent=5 // pred_check
        %p3262 = pneg %p3261
      $region110: #{bert_lstm_forward.1} parent=5 // pred_check_branch
        %3264 = sbr.rel (%p3262) target = $region112
      $region111: #{bert_lstm_forward.1} parent=5 // pred_region
        %s3265 = ssub.s32 %s30, 2
        // Predicated region
        $region113: #{bert_lstm_forward.1} parent=111 // pred_check
          %p3266 = pneg %p505
        $region114: #{bert_lstm_forward.1} parent=111 // pred_check_branch
          %3268 = sbr.rel (%p3266) target = $region116
        $region115: #{bert_lstm_forward.1} parent=111 // pred_region
          %s3269 = sand.u32 %s490, 1
          %s3270 = scalar_lea.sflag [#allocation3], %s3269
          %s3271 = sand.u32 %s490, 1
          %s3272 = smul.addr %s3271, 8
          %s3273 = scalar_lea.vmem [#allocation2], %s3272
          %3274 = dma.done %s3270, 128
        $region116: #{bert_lstm_forward.1} parent=111 // pred_fallthru
          _
      $region112: #{bert_lstm_forward.1} parent=5 // pred_fallthru
        _
    $region6: #{bert_lstm_forward.1} parent=1 // loop_footer
      %s34 = sadd.s32 1, %s30
    $region7: #{bert_lstm_forward.1} parent=1 // loop_footer_branch
      %29 = sbr.rel target = $region3
    $region8: #{bert_lstm_forward.1} parent=1 // loop_exit
      _
    %3275 = vsyncpa [#allocation3], 1
    %s3276 = scalar_lea.sflag [#allocation3], 1
    %3277 = vsyncpa %s3276, 1

</llo_original>
